<compile_context>
chip_gen: v5e
topology: v5e:2x2
jax: 0.10.0
libtpu: 0.0.40
codegen_flags: <defaults>
</compile_context>

<pallas_src>
import functools

import jax
import jax.numpy as jnp
from jax import lax
from jax.experimental import pallas as pl
from jax.experimental.pallas import tpu as pltpu

LANE = 128
SUBLANE = 8
NEG_BIG = -1e30            # additive mask value; fill decision now uses the hasn predicate
DEF_TM = 128               # node-row tile (multiple of 128: lane dim of the adjT block)
DEF_TK = 256               # neighbour / reduction tile
DEF_CHUNK = 2              # sub-chunk of each 8-row neighbour group kept register-resident
RESIDENT_H_MAX = 4 << 20   # keep the full neighbour-feature slab VMEM-resident below this
VMEM_CAP = 64 << 20        # never request more than the smallest (v7x) physical VMEM


def _round_up(x, m):
    return (x + m - 1) // m * m


def _pad2(a, rows, cols):
    return jnp.pad(a, ((0, rows - a.shape[0]), (0, cols - a.shape[1])))


def _vmem_limit(block_bytes, scratch_bytes, headroom=4 << 20):
    """Derive vmem_limit_bytes from the actual double-buffered footprint (v7x-safe)."""
    need = 2 * sum(block_bytes) + scratch_bytes + headroom
    return int(min(_round_up(need, 1 << 20), VMEM_CAP))


def _masked_max_group(h8, add8, acc, chunk):
    """Fold one aligned 8-row neighbour group into the running (M, D) max.

    h8:   (8, D) neighbour features (f32)
    add8: (8, M) additive mask, 0 where edge exists else NEG_BIG (f32)
    acc:  (M, D) running max (f32)

    The neighbour axis stays LEADING in `chunk`-sized slabs, so the reduce is a cross-vreg
    VALU max, D stays lane-dense, and no (M, TK, D) VMEM temp is materialised.
    """
    for s in range(0, h8.shape[0], chunk):
        vals = h8[s:s + chunk, None, :] + add8[s:s + chunk, :, None]   # (chunk, M, D)
        acc = jnp.maximum(acc, jnp.max(vals, axis=0))
    return acc


# ----------------------------------------------------------------------------
# Kernel 1: fused SAGE layer
#   masked-max aggregation over in-neighbours (chunked, register-resident reduction)
#   -> [aggr | x] @ [Wl; Wr] + bl   (single stacked-K matmul)
#   -> @ fc_max_w + fc_max_b -> ReLU
# ----------------------------------------------------------------------------
def _sage_layer_kernel(adjT_ref, hnb_ref, hself_ref, hasn_ref, wstack_ref, bl_ref,
                       wfc_ref, bfc_ref, hout_ref, acc_ref,
                       *, neg_big, chunk, tk, resident_h):
    k = pl.program_id(1)

    @pl.when(k == 0)
    def _init():
        acc_ref[...] = jnp.full(acc_ref.shape, neg_big, acc_ref.dtype)

    # base row into the neighbour-feature slab (0 when the slab is already the k-th tile)
    base = k * tk if resident_h else 0

    def body(g, acc):
        goff = pl.multiple_of(g * SUBLANE, SUBLANE)                        # aligned 8-row group
        row0 = pl.multiple_of(base + g * SUBLANE, SUBLANE)
        adj8 = adjT_ref[pl.ds(goff, SUBLANE), :]                           # (8, TM) 0/1 bf16
        h8 = hnb_ref[pl.ds(row0, SUBLANE), :].astype(jnp.float32)          # (8, D)
        add8 = jnp.where(adj8 > 0, 0.0, neg_big).astype(jnp.float32)       # (8, TM)
        return _masked_max_group(h8, add8, acc, chunk)

    acc_ref[...] = lax.fori_loop(0, tk // SUBLANE, body, acc_ref[...])

    @pl.when(k == pl.num_programs(1) - 1)
    def _finalize():
        # rows with no in-neighbours -> PyG scatter-max fill value 0
        # (robust precomputed predicate, no sentinel-magnitude heuristic)
        aggr = jnp.where(hasn_ref[...] > 0, acc_ref[...], 0.0)
        cat = jnp.concatenate(
            [aggr, hself_ref[...].astype(jnp.float32)], axis=1)            # (TM, 2*D)
        z = jnp.dot(cat.astype(wstack_ref.dtype), wstack_ref[...],
                    preferred_element_type=jnp.float32) + bl_ref[...]
        h = jnp.dot(z.astype(wfc_ref.dtype), wfc_ref[...],
                    preferred_element_type=jnp.float32) + bfc_ref[...]
        hout_ref[...] = jnp.maximum(h, 0.0).astype(hout_ref.dtype)


def sage_fc_layer(h, adjT, hasn, wstack, bl, wfc, bfc, *,
                  tm=DEF_TM, tk=DEF_TK, chunk=DEF_CHUNK):
    n_p, din_p = h.shape
    e_p = wstack.shape[1]
    assert adjT.shape == (n_p, n_p)
    assert hasn.shape == (n_p, 1)
    assert wstack.shape[0] == 2 * din_p
    assert n_p % tm == 0 and n_p % tk == 0
    assert tm % LANE == 0                       # adjT block's lane dimension
    assert tk % SUBLANE == 0 and SUBLANE % chunk == 0

    itemsize = jnp.dtype(h.dtype).itemsize
    resident_h = n_p * din_p * itemsize <= RESIDENT_H_MAX
    if resident_h:
        hnb_spec = pl.BlockSpec((n_p, din_p), lambda m, k: (0, 0))         # fully resident
        hnb_bytes = n_p * din_p * itemsize
    else:
        hnb_spec = pl.BlockSpec((tk, din_p), lambda m, k: (k, 0))          # tiled fall-back
        hnb_bytes = tk * din_p * itemsize

    adj_bytes = jnp.dtype(adjT.dtype).itemsize
    block_bytes = [
        tk * tm * adj_bytes,                    # adjT tile
        hnb_bytes,                              # neighbour features
        tm * din_p * itemsize,                  # root features
        tm * 4,                                 # has-in-neighbour column
        2 * din_p * e_p * 4 + e_p * 4,          # stacked weight + bias
        e_p * e_p * 4 + e_p * 4,                # fc_max weight + bias
        tm * e_p * itemsize,                    # output tile
    ]
    vmem_limit = _vmem_limit(block_bytes, tm * din_p * 4)

    kernel = functools.partial(_sage_layer_kernel, neg_big=NEG_BIG, chunk=chunk,
                               tk=tk, resident_h=resident_h)
    return pl.pallas_call(
        kernel,
        out_shape=jax.ShapeDtypeStruct((n_p, e_p), h.dtype),
        grid_spec=pltpu.PrefetchScalarGridSpec(
            num_scalar_prefetch=0,
            grid=(n_p // tm, n_p // tk),
            in_specs=[
                pl.BlockSpec((tk, tm), lambda m, k: (k, m)),             # transposed adj tile
                hnb_spec,                                                # neighbour feats
                pl.BlockSpec((tm, din_p), lambda m, k: (m, 0)),          # root feats
                pl.BlockSpec((tm, 1), lambda m, k: (m, 0)),              # has-in-neighbour
                pl.BlockSpec((2 * din_p, e_p), lambda m, k: (0, 0)),     # [Wl; Wr]
                pl.BlockSpec((1, e_p), lambda m, k: (0, 0)),             # bl
                pl.BlockSpec((e_p, e_p), lambda m, k: (0, 0)),           # fc_max W
                pl.BlockSpec((1, e_p), lambda m, k: (0, 0)),             # fc_max b
            ],
            out_specs=pl.BlockSpec((tm, e_p), lambda m, k: (m, 0)),
            scratch_shapes=[pltpu.VMEM((tm, din_p), jnp.float32)],
        ),
        compiler_params=pltpu.CompilerParams(
            dimension_semantics=("parallel", "arbitrary"),
            vmem_limit_bytes=vmem_limit,
        ),
    )(adjT, h, h, hasn, wstack, bl, wfc, bfc)


# ----------------------------------------------------------------------------
# Kernel 2: fused tail
#   global_max_pool over the 4 layer outputs (accumulated into a (G, 4*E) scratch,
#   no HBM concat) -> fc1 + ReLU -> (dropout = identity) -> fc2 -> masked log_softmax
# ----------------------------------------------------------------------------
def _pool_head_kernel(*refs, num_layers, e_pad, neg_big, chunk, tk, n_valid_t):
    gmaskT_ref = refs[0]
    hasg_ref = refs[1]
    h_refs = refs[2:2 + num_layers]
    w1_ref, b1_ref, w2_ref, b2_ref = refs[2 + num_layers:6 + num_layers]
    lsm_ref, out_ref, last_ref, acc_ref = refs[6 + num_layers:]

    k = pl.program_id(0)

    @pl.when(k == 0)
    def _init():
        acc_ref[...] = jnp.full(acc_ref.shape, neg_big, acc_ref.dtype)

    def body(g, accs):
        goff = pl.multiple_of(g * SUBLANE, SUBLANE)
        gm8 = gmaskT_ref[pl.ds(goff, SUBLANE), :]                          # (8, G) bf16
        add8 = jnp.where(gm8 > 0, 0.0, neg_big).astype(jnp.float32)        # (8, G) reused 4x
        new = []
        for l in range(num_layers):
            h8 = h_refs[l][pl.ds(goff, SUBLANE), :].astype(jnp.float32)    # (8, E)
            new.append(_masked_max_group(h8, add8, accs[l], chunk))
        return tuple(new)

    init = tuple(acc_ref[:, l * e_pad:(l + 1) * e_pad] for l in range(num_layers))
    accs = lax.fori_loop(0, tk // SUBLANE, body, init)
    for l in range(num_layers):
        acc_ref[:, l * e_pad:(l + 1) * e_pad] = accs[l]

    @pl.when(k == pl.num_programs(0) - 1)
    def _finalize():
        pooled = jnp.where(hasg_ref[...] > 0, acc_ref[...], 0.0)
        last = jnp.dot(pooled.astype(w1_ref.dtype), w1_ref[...],
                       preferred_element_type=jnp.float32) + b1_ref[...]
        last = jnp.maximum(last, 0.0)
        # TODO(synk): nn.Dropout(p=0.3) is stochastic; treated as identity (inference).
        logits = jnp.dot(last.astype(w2_ref.dtype), w2_ref[...],
                         preferred_element_type=jnp.float32) + b2_ref[...]
        # mask padded logit columns so they cannot corrupt the softmax normaliser
        col = lax.broadcasted_iota(jnp.int32, logits.shape, 1)
        masked = jnp.where(col < n_valid_t, logits, neg_big)
        m = jnp.max(masked, axis=1, keepdims=True)
        zc = masked - m
        lse = jnp.log(jnp.sum(jnp.exp(zc), axis=1, keepdims=True))
        lsm_ref[...] = (zc - lse).astype(lsm_ref.dtype)
        out_ref[...] = logits.astype(out_ref.dtype)
        last_ref[...] = last.astype(last_ref.dtype)


def pool_head(gmaskT, hasg, hs, w1, b1, w2, b2, *,
              tk=DEF_TK, chunk=DEF_CHUNK, dim_target=1):
    n_p, g_p = gmaskT.shape
    e_p = hs[0].shape[1]
    num_layers = len(hs)
    c = num_layers * e_p
    t_p = w2.shape[1]
    assert n_p % tk == 0 and tk % SUBLANE == 0 and SUBLANE % chunk == 0
    assert hasg.shape == (g_p, 1)
    assert w1.shape == (c, e_p)

    block_bytes = [
        tk * g_p * jnp.dtype(gmaskT.dtype).itemsize,   # transposed graph-mask tile
        g_p * 4,                                       # has-node column
        num_layers * tk * e_p * 4,                     # 4 layer-output tiles
        c * e_p * 4 + e_p * 4,                         # fc1 weight + bias
        e_p * t_p * 4 + t_p * 4,                       # fc2 weight + bias
        2 * g_p * t_p * 4 + g_p * e_p * 4,             # outputs
    ]
    vmem_limit = _vmem_limit(block_bytes, g_p * c * 4)

    kernel = functools.partial(_pool_head_kernel, num_layers=num_layers, e_pad=e_p,
                               neg_big=NEG_BIG, chunk=chunk, tk=tk, n_valid_t=dim_target)
    in_specs = [
        pl.BlockSpec((tk, g_p), lambda k: (k, 0)),     # transposed graph mask
        pl.BlockSpec((g_p, 1), lambda k: (0, 0)),      # graph-has-nodes column
    ]
    in_specs += [pl.BlockSpec((tk, e_p), lambda k: (k, 0)) for _ in range(num_layers)]
    in_specs += [
        pl.BlockSpec((c, e_p), lambda k: (0, 0)),      # fc1 W
        pl.BlockSpec((1, e_p), lambda k: (0, 0)),      # fc1 b
        pl.BlockSpec((e_p, t_p), lambda k: (0, 0)),    # fc2 W
        pl.BlockSpec((1, t_p), lambda k: (0, 0)),      # fc2 b
    ]
    # NOTE: on v7x the tail could be split across the 2 TensorCores with a leading parallel
    # axis; skipped here since the tail is a small fraction of the 4 layer kernels.
    return pl.pallas_call(
        kernel,
        out_shape=(jax.ShapeDtypeStruct((g_p, t_p), jnp.float32),
                   jax.ShapeDtypeStruct((g_p, t_p), jnp.float32),
                   jax.ShapeDtypeStruct((g_p, e_p), jnp.float32)),
        grid_spec=pltpu.PrefetchScalarGridSpec(
            num_scalar_prefetch=0,
            grid=(n_p // tk,),
            in_specs=in_specs,
            out_specs=(pl.BlockSpec((g_p, t_p), lambda k: (0, 0)),
                       pl.BlockSpec((g_p, t_p), lambda k: (0, 0)),
                       pl.BlockSpec((g_p, e_p), lambda k: (0, 0))),
            scratch_shapes=[pltpu.VMEM((g_p, c), jnp.float32)],
        ),
        compiler_params=pltpu.CompilerParams(
            dimension_semantics=("arbitrary",),
            vmem_limit_bytes=vmem_limit,
        ),
    )(gmaskT, hasg, *hs, w1, b1, w2, b2)


# ----------------------------------------------------------------------------
# Parameters, padding, forward pass, pure-JAX reference
# ----------------------------------------------------------------------------
def init_params(key, dim_features, dim_embedding, dim_target, num_layers=4):
    def nxt():
        nonlocal key
        key, sub = jax.random.split(key)
        return sub

    def rand(shape):
        return jax.random.normal(nxt(), shape, jnp.float32) * 0.1

    params = {"layers": []}
    for i in range(num_layers):
        din = dim_features if i == 0 else dim_embedding
        params["layers"].append({
            "wl": rand((din, dim_embedding)),   # lin_l (aggregated neighbours), has bias
            "bl": rand((1, dim_embedding)),
            "wr": rand((din, dim_embedding)),   # lin_r (root), no bias in PyG
        })
    params["fc_max_w"] = rand((dim_embedding, dim_embedding))
    params["fc_max_b"] = rand((1, dim_embedding))
    params["fc1_w"] = rand((num_layers * dim_embedding, dim_embedding))
    params["fc1_b"] = rand((1, dim_embedding))
    params["fc2_w"] = rand((dim_embedding, dim_target))
    params["fc2_b"] = rand((1, dim_target))
    return params


def pad_params(params, dim_features, dim_embedding, dim_target, num_layers,
               dtype=jnp.float32):
    f_p = _round_up(dim_features, LANE)
    e_p = _round_up(dim_embedding, LANE)
    t_p = _round_up(dim_target, LANE)
    padded = {"layers": []}
    for i, lp in enumerate(params["layers"]):
        din_p = f_p if i == 0 else e_p
        wl_p = _pad2(lp["wl"], din_p, e_p)
        wr_p = _pad2(lp["wr"], din_p, e_p)
        padded["layers"].append({
            "wstack": jnp.concatenate([wl_p, wr_p], axis=0).astype(dtype),
            "bl": _pad2(lp["bl"], 1, e_p).astype(dtype),
        })
    padded["fc_max_w"] = _pad2(params["fc_max_w"], e_p, e_p).astype(dtype)
    padded["fc_max_b"] = _pad2(params["fc_max_b"], 1, e_p).astype(dtype)
    # fc1 rows must be scattered to (layer * e_p + channel) to match padded concat layout
    w1 = jnp.zeros((num_layers * e_p, e_p), dtype)
    for l in range(num_layers):
        w1 = w1.at[l * e_p:l * e_p + dim_embedding, :dim_embedding].set(
            params["fc1_w"][l * dim_embedding:(l + 1) * dim_embedding, :].astype(dtype))
    padded["fc1_w"] = w1
    padded["fc1_b"] = _pad2(params["fc1_b"], 1, e_p).astype(dtype)
    padded["fc2_w"] = _pad2(params["fc2_w"], e_p, t_p).astype(dtype)
    padded["fc2_b"] = _pad2(params["fc2_b"], 1, t_p).astype(dtype)
    return padded


def graphsage_forward(padded, x_p, adjT_p, hasn_p, gmaskT_p, hasg_p, *,
                      dim_target, tm=DEF_TM, tk=DEF_TK, chunk=DEF_CHUNK):
    h = x_p
    hs = []
    for lp in padded["layers"]:
        h = sage_fc_layer(h, adjT_p, hasn_p, lp["wstack"], lp["bl"],
                          padded["fc_max_w"], padded["fc_max_b"],
                          tm=tm, tk=tk, chunk=chunk)
        hs.append(h)
    return pool_head(gmaskT_p, hasg_p, hs, padded["fc1_w"], padded["fc1_b"],
                     padded["fc2_w"], padded["fc2_b"],
                     tk=tk, chunk=chunk, dim_target=dim_target)


def reference_forward(params, x, adj, graph_mask):
    def masked_max_ref(mask, feat):
        vals = jnp.where(mask[:, :, None] > 0, feat[None, :, :], -jnp.inf)
        mx = jnp.max(vals, axis=1)
        has = jnp.max(mask, axis=1, keepdims=True) > 0
        return jnp.where(has, mx, 0.0)

    h = x
    outs = []
    for lp in params["layers"]:
        aggr = masked_max_ref(adj, h)
        h = aggr @ lp["wl"] + lp["bl"] + h @ lp["wr"]
        h = jnp.maximum(h @ params["fc_max_w"] + params["fc_max_b"], 0.0)
        outs.append(h)
    hcat = jnp.concatenate(outs, axis=1)
    pooled = masked_max_ref(graph_mask, hcat)
    last = jnp.maximum(pooled @ params["fc1_w"] + params["fc1_b"], 0.0)
    out = last @ params["fc2_w"] + params["fc2_b"]
    return jax.nn.log_softmax(out, axis=1), out, last


if __name__ == "__main__":
    dim_features, dim_embedding, dim_target = 8, 32, 6
    num_layers = 4
    nodes_per_graph, num_graphs = 128, 2
    N = nodes_per_graph * num_graphs

    key = jax.random.PRNGKey(0)
    pkey, xkey = jax.random.split(key)
    params = init_params(pkey, dim_features, dim_embedding, dim_target, num_layers)
    x = jax.random.normal(xkey, (N, dim_features), jnp.float32)

    # bidirectional ring per graph (every node has in-neighbours)
    src, dst = [], []
    for g in range(num_graphs):
        base = g * nodes_per_graph
        for i in range(nodes_per_graph):
            a = base + i
            b = base + (i + 1) % nodes_per_graph
            src += [a, b]
            dst += [b, a]
    src = jnp.array(src, jnp.int32)
    dst = jnp.array(dst, jnp.int32)
    adj = jnp.zeros((N, N), jnp.float32).at[dst, src].set(1.0)   # adj[target, source]

    batch = jnp.repeat(jnp.arange(num_graphs, dtype=jnp.int32), nodes_per_graph)
    graph_mask = (jnp.arange(num_graphs)[:, None] == batch[None, :]).astype(jnp.float32)

    # pad to TPU-friendly shapes (node count to a multiple of both tiles; feature dims to 128)
    f_p = _round_up(dim_features, LANE)
    node_mult = max(DEF_TM, DEF_TK)
    assert node_mult % DEF_TM == 0 and node_mult % DEF_TK == 0
    n_p = _round_up(N, node_mult)
    g_p = _round_up(num_graphs, SUBLANE)
    x_p = _pad2(x, n_p, f_p)
    adj_p = _pad2(adj, n_p, n_p)
    gmask_p = _pad2(graph_mask, g_p, n_p)

    # One-time layout / dtype prep (outside the kernels):
    #   * transposed adjacency & graph mask so the reduction axis leads inside the kernel
    #   * bf16 storage for the 0/1 masks (exact; halves the N^2 HBM stream)
    #   * robust has-neighbour / has-node predicates (replace the sentinel heuristic)
    adjT_p = adj_p.T.astype(jnp.bfloat16)
    gmaskT_p = gmask_p.T.astype(jnp.bfloat16)
    hasn_p = (jnp.max(adj_p, axis=1, keepdims=True) > 0).astype(jnp.float32)
    hasg_p = (jnp.max(gmask_p, axis=1, keepdims=True) > 0).astype(jnp.float32)

    padded = pad_params(params, dim_features, dim_embedding, dim_target, num_layers)

    fwd = jax.jit(functools.partial(graphsage_forward, dim_target=dim_target,
                                    tm=DEF_TM, tk=DEF_TK, chunk=DEF_CHUNK))
    lsm_p, out_p, last_p = fwd(padded, x_p, adjT_p, hasn_p, gmaskT_p, hasg_p)
    jax.block_until_ready((lsm_p, out_p, last_p))

    log_probs = lsm_p[:num_graphs, :dim_target]
    out = out_p[:num_graphs, :dim_target]
    last_layer = last_p[:num_graphs, :dim_embedding]

    assert log_probs.shape == (num_graphs, dim_target)
    assert out.shape == (num_graphs, dim_target)
    assert last_layer.shape == (num_graphs, dim_embedding)

    # cross-check against a pure-JAX reference of the same forward pass
    ref_lsm, ref_out, ref_last = reference_forward(params, x, adj, graph_mask)
    assert jnp.allclose(log_probs, ref_lsm, atol=2e-3, rtol=2e-3)
    assert jnp.allclose(out, ref_out, atol=2e-3, rtol=2e-3)
    assert jnp.allclose(last_layer, ref_last, atol=2e-3, rtol=2e-3)

    print("KERNEL_OK")
</pallas_src>

<mosaic_0001>
module attributes {stable_mosaic.version = 11 : i64} {
  func.func @_sage_layer_kernel(%arg0: i32, %arg1: i32, %arg2: memref<256x128xbf16, #tpu.memory_space<vmem>>, %arg3: memref<256x128xf32, #tpu.memory_space<vmem>>, %arg4: memref<128x128xf32, #tpu.memory_space<vmem>>, %arg5: memref<128x1xf32, #tpu.memory_space<vmem>>, %arg6: memref<256x128xf32, #tpu.memory_space<vmem>>, %arg7: memref<1x128xf32, #tpu.memory_space<vmem>>, %arg8: memref<128x128xf32, #tpu.memory_space<vmem>>, %arg9: memref<1x128xf32, #tpu.memory_space<vmem>>, %arg10: memref<128x128xf32, #tpu.memory_space<vmem>>, %arg11: memref<128x128xf32, #tpu.memory_space<vmem>>) attributes {dimension_semantics = [#tpu.dimension_semantics<parallel>, #tpu.dimension_semantics<arbitrary>], iteration_bounds = array<i64: 2, 1>, scalar_prefetch = 0 : i64, scratch_operands = 1 : i64, tpu.core_type = #tpu.core_type<tc>, window_params = [{transform_indices = @transform_0, window_bounds = array<i64: 256, 128>}, {pipeline_mode = #tpu.pipeline_mode<synchronous>, transform_indices = @transform_1, window_bounds = array<i64: 256, 128>}, {transform_indices = @transform_2, window_bounds = array<i64: 128, 128>}, {transform_indices = @transform_3, window_bounds = array<i64: 128, 1>}, {pipeline_mode = #tpu.pipeline_mode<synchronous>, transform_indices = @transform_4, window_bounds = array<i64: 256, 128>}, {pipeline_mode = #tpu.pipeline_mode<synchronous>, transform_indices = @transform_5, window_bounds = array<i64: 1, 128>}, {pipeline_mode = #tpu.pipeline_mode<synchronous>, transform_indices = @transform_6, window_bounds = array<i64: 128, 128>}, {pipeline_mode = #tpu.pipeline_mode<synchronous>, transform_indices = @transform_7, window_bounds = array<i64: 1, 128>}, {transform_indices = @transform_8, window_bounds = array<i64: 128, 128>}]} {
    %c0_i32 = arith.constant 0 : i32
    %0 = arith.cmpi eq, %arg1, %c0_i32 : i32
    %1 = arith.extui %0 : i1 to i32
    %c0_i32_0 = arith.constant 0 : i32
    %2 = arith.cmpi ne, %1, %c0_i32_0 : i32
    scf.if %2 {
      %cst = arith.constant -1.000000e+30 : f32
      %11 = vector.broadcast %cst : f32 to vector<128x128xf32>
      %c0_8 = arith.constant 0 : index
      %c0_9 = arith.constant 0 : index
      %12 = vector.load %arg11[%c0_8, %c0_9] : memref<128x128xf32, #tpu.memory_space<vmem>>, vector<128x128xf32>
      tpu.vector_store %arg11[%c0_8, %c0_9], %11 {strides = array<i32>} : memref<128x128xf32, #tpu.memory_space<vmem>>, vector<128x128xf32>,
    } else {
    }
    %c256_i32 = arith.constant 256 : i32
    %3 = arith.muli %arg1, %c256_i32 : i32
    %c0 = arith.constant 0 : index
    %c0_1 = arith.constant 0 : index
    %4 = vector.load %arg11[%c0, %c0_1] : memref<128x128xf32, #tpu.memory_space<vmem>>, vector<128x128xf32>
    %c0_i32_2 = arith.constant 0 : i32
    %c32_i32 = arith.constant 32 : i32
    %5 = arith.addi %c0_i32_2, %c32_i32 : i32
    %c1_i32 = arith.constant 1 : i32
    %6 = scf.for %arg12 = %c0_i32_2 to %5 step %c1_i32 iter_args(%arg13 = %4) -> (vector<128x128xf32>)  : i32 {
      %c8_i32 = arith.constant 8 : i32
      %11 = arith.muli %arg12, %c8_i32 : i32
      %12 = tpu.assume_multiple %11, 8 : i32
      %c8_i32_8 = arith.constant 8 : i32
      %13 = arith.muli %arg12, %c8_i32_8 : i32
      %14 = arith.addi %3, %13 : i32
      %15 = tpu.assume_multiple %14, 8 : i32
      %16 = arith.index_cast %12 : i32 to index
      %c0_9 = arith.constant 0 : index
      %17 = vector.load %arg2[%16, %c0_9] : memref<256x128xbf16, #tpu.memory_space<vmem>>, vector<8x128xbf16>
      %18 = arith.index_cast %15 : i32 to index
      %c0_10 = arith.constant 0 : index
      %19 = vector.load %arg3[%18, %c0_10] : memref<256x128xf32, #tpu.memory_space<vmem>>, vector<8x128xf32>
      %cst = arith.constant 0.000000e+00 : bf16
      %20 = vector.broadcast %cst : bf16 to vector<8x128xbf16>
      %21 = arith.cmpf ogt, %17, %20 : vector<8x128xbf16>
      %cst_11 = arith.constant 0.000000e+00 : f32
      %cst_12 = arith.constant -1.000000e+30 : f32
      %22 = vector.broadcast %cst_11 : f32 to vector<8x128xf32>
      %23 = vector.broadcast %cst_12 : f32 to vector<8x128xf32>
      %24 = arith.select %21, %22, %23 : vector<8x128xi1>, vector<8x128xf32>
      %25 = vector.extract_strided_slice %19 {offsets = [0, 0], sizes = [2, 128], strides = [1, 1]} : vector<8x128xf32> to vector<2x128xf32>
      %26 = vector.shape_cast %25 : vector<2x128xf32> to vector<2x1x128xf32>
      %27 = vector.extract_strided_slice %24 {offsets = [0, 0], sizes = [2, 128], strides = [1, 1]} : vector<8x128xf32> to vector<2x128xf32>
      %28 = vector.shape_cast %27 : vector<2x128xf32> to vector<2x128x1xf32>
      %29 = vector.broadcast %26 : vector<2x1x128xf32> to vector<2x128x128xf32>
      %30 = vector.broadcast %28 : vector<2x128x1xf32> to vector<2x128x128xf32>
      %31 = arith.addf %29, %30 : vector<2x128x128xf32>
      %cst_13 = arith.constant dense<0xFF800000> : vector<128x128xf32>
      %32 = vector.multi_reduction <maximumf>, %31, %cst_13 [0] : vector<2x128x128xf32> to vector<128x128xf32>
      %33 = arith.maximumf %arg13, %32 : vector<128x128xf32>
      %34 = vector.extract_strided_slice %19 {offsets = [2, 0], sizes = [2, 128], strides = [1, 1]} : vector<8x128xf32> to vector<2x128xf32>
      %35 = vector.shape_cast %34 : vector<2x128xf32> to vector<2x1x128xf32>
      %36 = vector.extract_strided_slice %24 {offsets = [2, 0], sizes = [2, 128], strides = [1, 1]} : vector<8x128xf32> to vector<2x128xf32>
      %37 = vector.shape_cast %36 : vector<2x128xf32> to vector<2x128x1xf32>
      %38 = vector.broadcast %35 : vector<2x1x128xf32> to vector<2x128x128xf32>
      %39 = vector.broadcast %37 : vector<2x128x1xf32> to vector<2x128x128xf32>
      %40 = arith.addf %38, %39 : vector<2x128x128xf32>
      %cst_14 = arith.constant dense<0xFF800000> : vector<128x128xf32>
      %41 = vector.multi_reduction <maximumf>, %40, %cst_14 [0] : vector<2x128x128xf32> to vector<128x128xf32>
      %42 = arith.maximumf %33, %41 : vector<128x128xf32>
      %43 = vector.extract_strided_slice %19 {offsets = [4, 0], sizes = [2, 128], strides = [1, 1]} : vector<8x128xf32> to vector<2x128xf32>
      %44 = vector.shape_cast %43 : vector<2x128xf32> to vector<2x1x128xf32>
      %45 = vector.extract_strided_slice %24 {offsets = [4, 0], sizes = [2, 128], strides = [1, 1]} : vector<8x128xf32> to vector<2x128xf32>
      %46 = vector.shape_cast %45 : vector<2x128xf32> to vector<2x128x1xf32>
      %47 = vector.broadcast %44 : vector<2x1x128xf32> to vector<2x128x128xf32>
      %48 = vector.broadcast %46 : vector<2x128x1xf32> to vector<2x128x128xf32>
      %49 = arith.addf %47, %48 : vector<2x128x128xf32>
      %cst_15 = arith.constant dense<0xFF800000> : vector<128x128xf32>
      %50 = vector.multi_reduction <maximumf>, %49, %cst_15 [0] : vector<2x128x128xf32> to vector<128x128xf32>
      %51 = arith.maximumf %42, %50 : vector<128x128xf32>
      %52 = vector.extract_strided_slice %19 {offsets = [6, 0], sizes = [2, 128], strides = [1, 1]} : vector<8x128xf32> to vector<2x128xf32>
      %53 = vector.shape_cast %52 : vector<2x128xf32> to vector<2x1x128xf32>
      %54 = vector.extract_strided_slice %24 {offsets = [6, 0], sizes = [2, 128], strides = [1, 1]} : vector<8x128xf32> to vector<2x128xf32>
      %55 = vector.shape_cast %54 : vector<2x128xf32> to vector<2x128x1xf32>
      %56 = vector.broadcast %53 : vector<2x1x128xf32> to vector<2x128x128xf32>
      %57 = vector.broadcast %55 : vector<2x128x1xf32> to vector<2x128x128xf32>
      %58 = arith.addf %56, %57 : vector<2x128x128xf32>
      %cst_16 = arith.constant dense<0xFF800000> : vector<128x128xf32>
      %59 = vector.multi_reduction <maximumf>, %58, %cst_16 [0] : vector<2x128x128xf32> to vector<128x128xf32>
      %60 = arith.maximumf %51, %59 : vector<128x128xf32>
      scf.yield %60 : vector<128x128xf32>
    }
    %c32_i32_3 = arith.constant 32 : i32
    %c0_4 = arith.constant 0 : index
    %c0_5 = arith.constant 0 : index
    %7 = vector.load %arg11[%c0_4, %c0_5] : memref<128x128xf32, #tpu.memory_space<vmem>>, vector<128x128xf32>
    tpu.vector_store %arg11[%c0_4, %c0_5], %6 {strides = array<i32>} : memref<128x128xf32, #tpu.memory_space<vmem>>, vector<128x128xf32>,
    %c0_i32_6 = arith.constant 0 : i32
    %8 = arith.cmpi eq, %arg1, %c0_i32_6 : i32
    %9 = arith.extui %8 : i1 to i32
    %c0_i32_7 = arith.constant 0 : i32
    %10 = arith.cmpi ne, %9, %c0_i32_7 : i32
    scf.if %10 {
      %c0_8 = arith.constant 0 : index
      %c0_9 = arith.constant 0 : index
      %11 = vector.load %arg5[%c0_8, %c0_9] : memref<128x1xf32, #tpu.memory_space<vmem>>, vector<128x1xf32>
      %cst = arith.constant 0.000000e+00 : f32
      %12 = vector.broadcast %cst : f32 to vector<128x1xf32>
      %13 = arith.cmpf ogt, %11, %12 : vector<128x1xf32>
      %c0_10 = arith.constant 0 : index
      %c0_11 = arith.constant 0 : index
      %14 = vector.load %arg11[%c0_10, %c0_11] : memref<128x128xf32, #tpu.memory_space<vmem>>, vector<128x128xf32>
      %cst_12 = arith.constant 0.000000e+00 : f32
      %15 = vector.shape_cast %13 : vector<128x1xi1> to vector<128x1xi1>
      %16 = vector.broadcast %15 : vector<128x1xi1> to vector<128x128xi1>
      %17 = vector.broadcast %cst_12 : f32 to vector<128x128xf32>
      %18 = arith.select %16, %14, %17 : vector<128x128xi1>, vector<128x128xf32>
      %c0_13 = arith.constant 0 : index
      %c0_14 = arith.constant 0 : index
      %19 = vector.load %arg4[%c0_13, %c0_14] : memref<128x128xf32, #tpu.memory_space<vmem>>, vector<128x128xf32>
      %20 = tpu.concatenate %18, %19 in 1 : vector<128x128xf32>, vector<128x128xf32> -> vector<128x256xf32>
      %c0_15 = arith.constant 0 : index
      %c0_16 = arith.constant 0 : index
      %21 = vector.load %arg6[%c0_15, %c0_16] : memref<256x128xf32, #tpu.memory_space<vmem>>, vector<256x128xf32>
      %cst_17 = arith.constant dense<0.000000e+00> : vector<128x128xf32>
      %22 = tpu.matmul %20, %21, %cst_17 {dimension_numbers = #tpu.dot_dimension_numbers<[1], [0], [0], [1], [0, 0, 1, 1], [], []>} : vector<128x256xf32>, vector<256x128xf32>, vector<128x128xf32> -> vector<128x128xf32>
      %c0_18 = arith.constant 0 : index
      %c0_19 = arith.constant 0 : index
      %23 = vector.load %arg7[%c0_18, %c0_19] : memref<1x128xf32, #tpu.memory_space<vmem>>, vector<1x128xf32>
      %24 = vector.broadcast %23 : vector<1x128xf32> to vector<128x128xf32>
      %25 = arith.addf %22, %24 : vector<128x128xf32>
      %c0_20 = arith.constant 0 : index
      %c0_21 = arith.constant 0 : index
      %26 = vector.load %arg8[%c0_20, %c0_21] : memref<128x128xf32, #tpu.memory_space<vmem>>, vector<128x128xf32>
      %cst_22 = arith.constant dense<0.000000e+00> : vector<128x128xf32>
      %27 = tpu.matmul %25, %26, %cst_22 {dimension_numbers = #tpu.dot_dimension_numbers<[1], [0], [0], [1], [0, 0, 1, 1], [], []>} : vector<128x128xf32>, vector<128x128xf32>, vector<128x128xf32> -> vector<128x128xf32>
      %c0_23 = arith.constant 0 : index
      %c0_24 = arith.constant 0 : index
      %28 = vector.load %arg9[%c0_23, %c0_24] : memref<1x128xf32, #tpu.memory_space<vmem>>, vector<1x128xf32>
      %29 = vector.broadcast %28 : vector<1x128xf32> to vector<128x128xf32>
      %30 = arith.addf %27, %29 : vector<128x128xf32>
      %cst_25 = arith.constant 0.000000e+00 : f32
      %31 = vector.broadcast %cst_25 : f32 to vector<128x128xf32>
      %32 = arith.maximumf %30, %31 : vector<128x128xf32>
      %c0_26 = arith.constant 0 : index
      %c0_27 = arith.constant 0 : index
      %33 = vector.load %arg10[%c0_26, %c0_27] : memref<128x128xf32, #tpu.memory_space<vmem>>, vector<128x128xf32>
      tpu.vector_store %arg10[%c0_26, %c0_27], %32 {strides = array<i32>} : memref<128x128xf32, #tpu.memory_space<vmem>>, vector<128x128xf32>,
    } else {
    }
    return
  }
  func.func @transform_0(%arg0: i32, %arg1: i32) -> (i32, i32) {
    %c0_i32 = arith.constant 0 : i32
    return %arg1, %arg0 : i32, i32
  }
  func.func @transform_1(%arg0: i32, %arg1: i32) -> (i32, i32) {
    %c0_i32 = arith.constant 0 : i32
    %c0_i32_0 = arith.constant 0 : i32
    %c0_i32_1 = arith.constant 0 : i32
    return %c0_i32, %c0_i32_0 : i32, i32
  }
  func.func @transform_2(%arg0: i32, %arg1: i32) -> (i32, i32) {
    %c0_i32 = arith.constant 0 : i32
    %c0_i32_0 = arith.constant 0 : i32
    return %arg0, %c0_i32 : i32, i32
  }
  func.func @transform_3(%arg0: i32, %arg1: i32) -> (i32, i32) {
    %c0_i32 = arith.constant 0 : i32
    %c0_i32_0 = arith.constant 0 : i32
    return %arg0, %c0_i32 : i32, i32
  }
  func.func @transform_4(%arg0: i32, %arg1: i32) -> (i32, i32) {
    %c0_i32 = arith.constant 0 : i32
    %c0_i32_0 = arith.constant 0 : i32
    %c0_i32_1 = arith.constant 0 : i32
    return %c0_i32, %c0_i32_0 : i32, i32
  }
  func.func @transform_5(%arg0: i32, %arg1: i32) -> (i32, i32) {
    %c0_i32 = arith.constant 0 : i32
    %c0_i32_0 = arith.constant 0 : i32
    %c0_i32_1 = arith.constant 0 : i32
    return %c0_i32, %c0_i32_0 : i32, i32
  }
  func.func @transform_6(%arg0: i32, %arg1: i32) -> (i32, i32) {
    %c0_i32 = arith.constant 0 : i32
    %c0_i32_0 = arith.constant 0 : i32
    %c0_i32_1 = arith.constant 0 : i32
    return %c0_i32, %c0_i32_0 : i32, i32
  }
  func.func @transform_7(%arg0: i32, %arg1: i32) -> (i32, i32) {
    %c0_i32 = arith.constant 0 : i32
    %c0_i32_0 = arith.constant 0 : i32
    %c0_i32_1 = arith.constant 0 : i32
    return %c0_i32, %c0_i32_0 : i32, i32
  }
  func.func @transform_8(%arg0: i32, %arg1: i32) -> (i32, i32) {
    %c0_i32 = arith.constant 0 : i32
    %c0_i32_0 = arith.constant 0 : i32
    return %arg0, %c0_i32 : i32, i32
  }
}

module attributes {stable_mosaic.version = 11 : i64} {
  func.func @_sage_layer_kernel(%arg0: i32, %arg1: i32, %arg2: memref<256x128xbf16, #tpu.memory_space<vmem>>, %arg3: memref<256x128xf32, #tpu.memory_space<vmem>>, %arg4: memref<128x128xf32, #tpu.memory_space<vmem>>, %arg5: memref<128x1xf32, #tpu.memory_space<vmem>>, %arg6: memref<256x128xf32, #tpu.memory_space<vmem>>, %arg7: memref<1x128xf32, #tpu.memory_space<vmem>>, %arg8: memref<128x128xf32, #tpu.memory_space<vmem>>, %arg9: memref<1x128xf32, #tpu.memory_space<vmem>>, %arg10: memref<128x128xf32, #tpu.memory_space<vmem>>, %arg11: memref<128x128xf32, #tpu.memory_space<vmem>>) attributes {dimension_semantics = [#tpu.dimension_semantics<parallel>, #tpu.dimension_semantics<arbitrary>], iteration_bounds = array<i64: 2, 1>, scalar_prefetch = 0 : i64, scratch_operands = 1 : i64, tpu.core_type = #tpu.core_type<tc>, window_params = [{transform_indices = @transform_0, window_bounds = array<i64: 256, 128>}, {pipeline_mode = #tpu.pipeline_mode<synchronous>, transform_indices = @transform_1, window_bounds = array<i64: 256, 128>}, {transform_indices = @transform_2, window_bounds = array<i64: 128, 128>}, {transform_indices = @transform_3, window_bounds = array<i64: 128, 1>}, {pipeline_mode = #tpu.pipeline_mode<synchronous>, transform_indices = @transform_4, window_bounds = array<i64: 256, 128>}, {pipeline_mode = #tpu.pipeline_mode<synchronous>, transform_indices = @transform_5, window_bounds = array<i64: 1, 128>}, {pipeline_mode = #tpu.pipeline_mode<synchronous>, transform_indices = @transform_6, window_bounds = array<i64: 128, 128>}, {pipeline_mode = #tpu.pipeline_mode<synchronous>, transform_indices = @transform_7, window_bounds = array<i64: 1, 128>}, {transform_indices = @transform_8, window_bounds = array<i64: 128, 128>}]} {
    %c0_i32 = arith.constant 0 : i32
    %0 = arith.cmpi eq, %arg1, %c0_i32 : i32
    %1 = arith.extui %0 : i1 to i32
    %c0_i32_0 = arith.constant 0 : i32
    %2 = arith.cmpi ne, %1, %c0_i32_0 : i32
    scf.if %2 {
      %cst = arith.constant -1.000000e+30 : f32
      %11 = vector.broadcast %cst : f32 to vector<128x128xf32>
      %c0_8 = arith.constant 0 : index
      %c0_9 = arith.constant 0 : index
      %12 = vector.load %arg11[%c0_8, %c0_9] : memref<128x128xf32, #tpu.memory_space<vmem>>, vector<128x128xf32>
      tpu.vector_store %arg11[%c0_8, %c0_9], %11 {strides = array<i32>} : memref<128x128xf32, #tpu.memory_space<vmem>>, vector<128x128xf32>,
    } else {
    }
    %c256_i32 = arith.constant 256 : i32
    %3 = arith.muli %arg1, %c256_i32 : i32
    %c0 = arith.constant 0 : index
    %c0_1 = arith.constant 0 : index
    %4 = vector.load %arg11[%c0, %c0_1] : memref<128x128xf32, #tpu.memory_space<vmem>>, vector<128x128xf32>
    %c0_i32_2 = arith.constant 0 : i32
    %c32_i32 = arith.constant 32 : i32
    %5 = arith.addi %c0_i32_2, %c32_i32 : i32
    %c1_i32 = arith.constant 1 : i32
    %6 = scf.for %arg12 = %c0_i32_2 to %5 step %c1_i32 iter_args(%arg13 = %4) -> (vector<128x128xf32>)  : i32 {
      %c8_i32 = arith.constant 8 : i32
      %11 = arith.muli %arg12, %c8_i32 : i32
      %12 = tpu.assume_multiple %11, 8 : i32
      %c8_i32_8 = arith.constant 8 : i32
      %13 = arith.muli %arg12, %c8_i32_8 : i32
      %14 = arith.addi %3, %13 : i32
      %15 = tpu.assume_multiple %14, 8 : i32
      %16 = arith.index_cast %12 : i32 to index
      %c0_9 = arith.constant 0 : index
      %17 = vector.load %arg2[%16, %c0_9] : memref<256x128xbf16, #tpu.memory_space<vmem>>, vector<8x128xbf16>
      %18 = arith.index_cast %15 : i32 to index
      %c0_10 = arith.constant 0 : index
      %19 = vector.load %arg3[%18, %c0_10] : memref<256x128xf32, #tpu.memory_space<vmem>>, vector<8x128xf32>
      %cst = arith.constant 0.000000e+00 : bf16
      %20 = vector.broadcast %cst : bf16 to vector<8x128xbf16>
      %21 = arith.cmpf ogt, %17, %20 : vector<8x128xbf16>
      %cst_11 = arith.constant 0.000000e+00 : f32
      %cst_12 = arith.constant -1.000000e+30 : f32
      %22 = vector.broadcast %cst_11 : f32 to vector<8x128xf32>
      %23 = vector.broadcast %cst_12 : f32 to vector<8x128xf32>
      %24 = arith.select %21, %22, %23 : vector<8x128xi1>, vector<8x128xf32>
      %25 = vector.extract_strided_slice %19 {offsets = [0, 0], sizes = [2, 128], strides = [1, 1]} : vector<8x128xf32> to vector<2x128xf32>
      %26 = vector.shape_cast %25 : vector<2x128xf32> to vector<2x1x128xf32>
      %27 = vector.extract_strided_slice %24 {offsets = [0, 0], sizes = [2, 128], strides = [1, 1]} : vector<8x128xf32> to vector<2x128xf32>
      %28 = vector.shape_cast %27 : vector<2x128xf32> to vector<2x128x1xf32>
      %29 = vector.broadcast %26 : vector<2x1x128xf32> to vector<2x128x128xf32>
      %30 = vector.broadcast %28 : vector<2x128x1xf32> to vector<2x128x128xf32>
      %31 = arith.addf %29, %30 : vector<2x128x128xf32>
      %cst_13 = arith.constant dense<0xFF800000> : vector<128x128xf32>
      %32 = vector.multi_reduction <maximumf>, %31, %cst_13 [0] : vector<2x128x128xf32> to vector<128x128xf32>
      %33 = arith.maximumf %arg13, %32 : vector<128x128xf32>
      %34 = vector.extract_strided_slice %19 {offsets = [2, 0], sizes = [2, 128], strides = [1, 1]} : vector<8x128xf32> to vector<2x128xf32>
      %35 = vector.shape_cast %34 : vector<2x128xf32> to vector<2x1x128xf32>
      %36 = vector.extract_strided_slice %24 {offsets = [2, 0], sizes = [2, 128], strides = [1, 1]} : vector<8x128xf32> to vector<2x128xf32>
      %37 = vector.shape_cast %36 : vector<2x128xf32> to vector<2x128x1xf32>
      %38 = vector.broadcast %35 : vector<2x1x128xf32> to vector<2x128x128xf32>
      %39 = vector.broadcast %37 : vector<2x128x1xf32> to vector<2x128x128xf32>
      %40 = arith.addf %38, %39 : vector<2x128x128xf32>
      %cst_14 = arith.constant dense<0xFF800000> : vector<128x128xf32>
      %41 = vector.multi_reduction <maximumf>, %40, %cst_14 [0] : vector<2x128x128xf32> to vector<128x128xf32>
      %42 = arith.maximumf %33, %41 : vector<128x128xf32>
      %43 = vector.extract_strided_slice %19 {offsets = [4, 0], sizes = [2, 128], strides = [1, 1]} : vector<8x128xf32> to vector<2x128xf32>
      %44 = vector.shape_cast %43 : vector<2x128xf32> to vector<2x1x128xf32>
      %45 = vector.extract_strided_slice %24 {offsets = [4, 0], sizes = [2, 128], strides = [1, 1]} : vector<8x128xf32> to vector<2x128xf32>
      %46 = vector.shape_cast %45 : vector<2x128xf32> to vector<2x128x1xf32>
      %47 = vector.broadcast %44 : vector<2x1x128xf32> to vector<2x128x128xf32>
      %48 = vector.broadcast %46 : vector<2x128x1xf32> to vector<2x128x128xf32>
      %49 = arith.addf %47, %48 : vector<2x128x128xf32>
      %cst_15 = arith.constant dense<0xFF800000> : vector<128x128xf32>
      %50 = vector.multi_reduction <maximumf>, %49, %cst_15 [0] : vector<2x128x128xf32> to vector<128x128xf32>
      %51 = arith.maximumf %42, %50 : vector<128x128xf32>
      %52 = vector.extract_strided_slice %19 {offsets = [6, 0], sizes = [2, 128], strides = [1, 1]} : vector<8x128xf32> to vector<2x128xf32>
      %53 = vector.shape_cast %52 : vector<2x128xf32> to vector<2x1x128xf32>
      %54 = vector.extract_strided_slice %24 {offsets = [6, 0], sizes = [2, 128], strides = [1, 1]} : vector<8x128xf32> to vector<2x128xf32>
      %55 = vector.shape_cast %54 : vector<2x128xf32> to vector<2x128x1xf32>
      %56 = vector.broadcast %53 : vector<2x1x128xf32> to vector<2x128x128xf32>
      %57 = vector.broadcast %55 : vector<2x128x1xf32> to vector<2x128x128xf32>
      %58 = arith.addf %56, %57 : vector<2x128x128xf32>
      %cst_16 = arith.constant dense<0xFF800000> : vector<128x128xf32>
      %59 = vector.multi_reduction <maximumf>, %58, %cst_16 [0] : vector<2x128x128xf32> to vector<128x128xf32>
      %60 = arith.maximumf %51, %59 : vector<128x128xf32>
      scf.yield %60 : vector<128x128xf32>
    }
    %c32_i32_3 = arith.constant 32 : i32
    %c0_4 = arith.constant 0 : index
    %c0_5 = arith.constant 0 : index
    %7 = vector.load %arg11[%c0_4, %c0_5] : memref<128x128xf32, #tpu.memory_space<vmem>>, vector<128x128xf32>
    tpu.vector_store %arg11[%c0_4, %c0_5], %6 {strides = array<i32>} : memref<128x128xf32, #tpu.memory_space<vmem>>, vector<128x128xf32>,
    %c0_i32_6 = arith.constant 0 : i32
    %8 = arith.cmpi eq, %arg1, %c0_i32_6 : i32
    %9 = arith.extui %8 : i1 to i32
    %c0_i32_7 = arith.constant 0 : i32
    %10 = arith.cmpi ne, %9, %c0_i32_7 : i32
    scf.if %10 {
      %c0_8 = arith.constant 0 : index
      %c0_9 = arith.constant 0 : index
      %11 = vector.load %arg5[%c0_8, %c0_9] : memref<128x1xf32, #tpu.memory_space<vmem>>, vector<128x1xf32>
      %cst = arith.constant 0.000000e+00 : f32
      %12 = vector.broadcast %cst : f32 to vector<128x1xf32>
      %13 = arith.cmpf ogt, %11, %12 : vector<128x1xf32>
      %c0_10 = arith.constant 0 : index
      %c0_11 = arith.constant 0 : index
      %14 = vector.load %arg11[%c0_10, %c0_11] : memref<128x128xf32, #tpu.memory_space<vmem>>, vector<128x128xf32>
      %cst_12 = arith.constant 0.000000e+00 : f32
      %15 = vector.shape_cast %13 : vector<128x1xi1> to vector<128x1xi1>
      %16 = vector.broadcast %15 : vector<128x1xi1> to vector<128x128xi1>
      %17 = vector.broadcast %cst_12 : f32 to vector<128x128xf32>
      %18 = arith.select %16, %14, %17 : vector<128x128xi1>, vector<128x128xf32>
      %c0_13 = arith.constant 0 : index
      %c0_14 = arith.constant 0 : index
      %19 = vector.load %arg4[%c0_13, %c0_14] : memref<128x128xf32, #tpu.memory_space<vmem>>, vector<128x128xf32>
      %20 = tpu.concatenate %18, %19 in 1 : vector<128x128xf32>, vector<128x128xf32> -> vector<128x256xf32>
      %c0_15 = arith.constant 0 : index
      %c0_16 = arith.constant 0 : index
      %21 = vector.load %arg6[%c0_15, %c0_16] : memref<256x128xf32, #tpu.memory_space<vmem>>, vector<256x128xf32>
      %cst_17 = arith.constant dense<0.000000e+00> : vector<128x128xf32>
      %22 = tpu.matmul %20, %21, %cst_17 {dimension_numbers = #tpu.dot_dimension_numbers<[1], [0], [0], [1], [0, 0, 1, 1], [], []>} : vector<128x256xf32>, vector<256x128xf32>, vector<128x128xf32> -> vector<128x128xf32>
      %c0_18 = arith.constant 0 : index
      %c0_19 = arith.constant 0 : index
      %23 = vector.load %arg7[%c0_18, %c0_19] : memref<1x128xf32, #tpu.memory_space<vmem>>, vector<1x128xf32>
      %24 = vector.broadcast %23 : vector<1x128xf32> to vector<128x128xf32>
      %25 = arith.addf %22, %24 : vector<128x128xf32>
      %c0_20 = arith.constant 0 : index
      %c0_21 = arith.constant 0 : index
      %26 = vector.load %arg8[%c0_20, %c0_21] : memref<128x128xf32, #tpu.memory_space<vmem>>, vector<128x128xf32>
      %cst_22 = arith.constant dense<0.000000e+00> : vector<128x128xf32>
      %27 = tpu.matmul %25, %26, %cst_22 {dimension_numbers = #tpu.dot_dimension_numbers<[1], [0], [0], [1], [0, 0, 1, 1], [], []>} : vector<128x128xf32>, vector<128x128xf32>, vector<128x128xf32> -> vector<128x128xf32>
      %c0_23 = arith.constant 0 : index
      %c0_24 = arith.constant 0 : index
      %28 = vector.load %arg9[%c0_23, %c0_24] : memref<1x128xf32, #tpu.memory_space<vmem>>, vector<1x128xf32>
      %29 = vector.broadcast %28 : vector<1x128xf32> to vector<128x128xf32>
      %30 = arith.addf %27, %29 : vector<128x128xf32>
      %cst_25 = arith.constant 0.000000e+00 : f32
      %31 = vector.broadcast %cst_25 : f32 to vector<128x128xf32>
      %32 = arith.maximumf %30, %31 : vector<128x128xf32>
      %c0_26 = arith.constant 0 : index
      %c0_27 = arith.constant 0 : index
      %33 = vector.load %arg10[%c0_26, %c0_27] : memref<128x128xf32, #tpu.memory_space<vmem>>, vector<128x128xf32>
      tpu.vector_store %arg10[%c0_26, %c0_27], %32 {strides = array<i32>} : memref<128x128xf32, #tpu.memory_space<vmem>>, vector<128x128xf32>,
    } else {
    }
    return
  }
  func.func @transform_0(%arg0: i32, %arg1: i32) -> (i32, i32) {
    %c0_i32 = arith.constant 0 : i32
    return %arg1, %arg0 : i32, i32
  }
  func.func @transform_1(%arg0: i32, %arg1: i32) -> (i32, i32) {
    %c0_i32 = arith.constant 0 : i32
    %c0_i32_0 = arith.constant 0 : i32
    %c0_i32_1 = arith.constant 0 : i32
    return %c0_i32, %c0_i32_0 : i32, i32
  }
  func.func @transform_2(%arg0: i32, %arg1: i32) -> (i32, i32) {
    %c0_i32 = arith.constant 0 : i32
    %c0_i32_0 = arith.constant 0 : i32
    return %arg0, %c0_i32 : i32, i32
  }
  func.func @transform_3(%arg0: i32, %arg1: i32) -> (i32, i32) {
    %c0_i32 = arith.constant 0 : i32
    %c0_i32_0 = arith.constant 0 : i32
    return %arg0, %c0_i32 : i32, i32
  }
  func.func @transform_4(%arg0: i32, %arg1: i32) -> (i32, i32) {
    %c0_i32 = arith.constant 0 : i32
    %c0_i32_0 = arith.constant 0 : i32
    %c0_i32_1 = arith.constant 0 : i32
    return %c0_i32, %c0_i32_0 : i32, i32
  }
  func.func @transform_5(%arg0: i32, %arg1: i32) -> (i32, i32) {
    %c0_i32 = arith.constant 0 : i32
    %c0_i32_0 = arith.constant 0 : i32
    %c0_i32_1 = arith.constant 0 : i32
    return %c0_i32, %c0_i32_0 : i32, i32
  }
  func.func @transform_6(%arg0: i32, %arg1: i32) -> (i32, i32) {
    %c0_i32 = arith.constant 0 : i32
    %c0_i32_0 = arith.constant 0 : i32
    %c0_i32_1 = arith.constant 0 : i32
    return %c0_i32, %c0_i32_0 : i32, i32
  }
  func.func @transform_7(%arg0: i32, %arg1: i32) -> (i32, i32) {
    %c0_i32 = arith.constant 0 : i32
    %c0_i32_0 = arith.constant 0 : i32
    %c0_i32_1 = arith.constant 0 : i32
    return %c0_i32, %c0_i32_0 : i32, i32
  }
  func.func @transform_8(%arg0: i32, %arg1: i32) -> (i32, i32) {
    %c0_i32 = arith.constant 0 : i32
    %c0_i32_0 = arith.constant 0 : i32
    return %arg0, %c0_i32 : i32, i32
  }
}

module attributes {stable_mosaic.version = 11 : i64} {
  func.func @_pool_head_kernel(%arg0: i32, %arg1: memref<256x8xbf16, #tpu.memory_space<vmem>>, %arg2: memref<8x1xf32, #tpu.memory_space<vmem>>, %arg3: memref<256x128xf32, #tpu.memory_space<vmem>>, %arg4: memref<256x128xf32, #tpu.memory_space<vmem>>, %arg5: memref<256x128xf32, #tpu.memory_space<vmem>>, %arg6: memref<256x128xf32, #tpu.memory_space<vmem>>, %arg7: memref<512x128xf32, #tpu.memory_space<vmem>>, %arg8: memref<1x128xf32, #tpu.memory_space<vmem>>, %arg9: memref<128x128xf32, #tpu.memory_space<vmem>>, %arg10: memref<1x128xf32, #tpu.memory_space<vmem>>, %arg11: memref<8x128xf32, #tpu.memory_space<vmem>>, %arg12: memref<8x128xf32, #tpu.memory_space<vmem>>, %arg13: memref<8x128xf32, #tpu.memory_space<vmem>>, %arg14: memref<8x512xf32, #tpu.memory_space<vmem>>) attributes {dimension_semantics = [#tpu.dimension_semantics<arbitrary>], iteration_bounds = array<i64: 1>, scalar_prefetch = 0 : i64, scratch_operands = 1 : i64, tpu.core_type = #tpu.core_type<tc>, window_params = [{transform_indices = @transform_0, window_bounds = array<i64: 256, 8>}, {pipeline_mode = #tpu.pipeline_mode<synchronous>, transform_indices = @transform_1, window_bounds = array<i64: 8, 1>}, {transform_indices = @transform_2, window_bounds = array<i64: 256, 128>}, {transform_indices = @transform_3, window_bounds = array<i64: 256, 128>}, {transform_indices = @transform_4, window_bounds = array<i64: 256, 128>}, {transform_indices = @transform_5, window_bounds = array<i64: 256, 128>}, {pipeline_mode = #tpu.pipeline_mode<synchronous>, transform_indices = @transform_6, window_bounds = array<i64: 512, 128>}, {pipeline_mode = #tpu.pipeline_mode<synchronous>, transform_indices = @transform_7, window_bounds = array<i64: 1, 128>}, {pipeline_mode = #tpu.pipeline_mode<synchronous>, transform_indices = @transform_8, window_bounds = array<i64: 128, 128>}, {pipeline_mode = #tpu.pipeline_mode<synchronous>, transform_indices = @transform_9, window_bounds = array<i64: 1, 128>}, {pipeline_mode = #tpu.pipeline_mode<synchronous>, transform_indices = @transform_10, window_bounds = array<i64: 8, 128>}, {pipeline_mode = #tpu.pipeline_mode<synchronous>, transform_indices = @transform_11, window_bounds = array<i64: 8, 128>}, {pipeline_mode = #tpu.pipeline_mode<synchronous>, transform_indices = @transform_12, window_bounds = array<i64: 8, 128>}]} {
    %c0_i32 = arith.constant 0 : i32
    %0 = arith.cmpi eq, %arg0, %c0_i32 : i32
    %1 = arith.extui %0 : i1 to i32
    %c0_i32_0 = arith.constant 0 : i32
    %2 = arith.cmpi ne, %1, %c0_i32_0 : i32
    scf.if %2 {
      %cst = arith.constant -1.000000e+30 : f32
      %16 = vector.broadcast %cst : f32 to vector<8x512xf32>
      %c0_17 = arith.constant 0 : index
      %c0_18 = arith.constant 0 : index
      %17 = vector.load %arg14[%c0_17, %c0_18] : memref<8x512xf32, #tpu.memory_space<vmem>>, vector<8x512xf32>
      tpu.vector_store %arg14[%c0_17, %c0_18], %16 {strides = array<i32>} : memref<8x512xf32, #tpu.memory_space<vmem>>, vector<8x512xf32>,
    } else {
    }
    %c0 = arith.constant 0 : index
    %c0_1 = arith.constant 0 : index
    %3 = vector.load %arg14[%c0, %c0_1] : memref<8x512xf32, #tpu.memory_space<vmem>>, vector<8x128xf32>
    %c0_2 = arith.constant 0 : index
    %c128 = arith.constant 128 : index
    %4 = vector.load %arg14[%c0_2, %c128] : memref<8x512xf32, #tpu.memory_space<vmem>>, vector<8x128xf32>
    %c0_3 = arith.constant 0 : index
    %c256 = arith.constant 256 : index
    %5 = vector.load %arg14[%c0_3, %c256] : memref<8x512xf32, #tpu.memory_space<vmem>>, vector<8x128xf32>
    %c0_4 = arith.constant 0 : index
    %c384 = arith.constant 384 : index
    %6 = vector.load %arg14[%c0_4, %c384] : memref<8x512xf32, #tpu.memory_space<vmem>>, vector<8x128xf32>
    %c0_i32_5 = arith.constant 0 : i32
    %c32_i32 = arith.constant 32 : i32
    %7 = arith.addi %c0_i32_5, %c32_i32 : i32
    %c1_i32 = arith.constant 1 : i32
    %8:4 = scf.for %arg15 = %c0_i32_5 to %7 step %c1_i32 iter_args(%arg16 = %3, %arg17 = %4, %arg18 = %5, %arg19 = %6) -> (vector<8x128xf32>, vector<8x128xf32>, vector<8x128xf32>, vector<8x128xf32>)  : i32 {
      %c8_i32 = arith.constant 8 : i32
      %16 = arith.muli %arg15, %c8_i32 : i32
      %17 = tpu.assume_multiple %16, 8 : i32
      %18 = arith.index_cast %17 : i32 to index
      %c0_17 = arith.constant 0 : index
      %19 = vector.load %arg1[%18, %c0_17] : memref<256x8xbf16, #tpu.memory_space<vmem>>, vector<8x8xbf16>
      %cst = arith.constant 0.000000e+00 : bf16
      %20 = vector.broadcast %cst : bf16 to vector<8x8xbf16>
      %21 = arith.cmpf ogt, %19, %20 : vector<8x8xbf16>
      %cst_18 = arith.constant 0.000000e+00 : f32
      %cst_19 = arith.constant -1.000000e+30 : f32
      %22 = vector.broadcast %cst_18 : f32 to vector<8x8xf32>
      %23 = vector.broadcast %cst_19 : f32 to vector<8x8xf32>
      %24 = arith.select %21, %22, %23 : vector<8x8xi1>, vector<8x8xf32>
      %25 = arith.index_cast %17 : i32 to index
      %c0_20 = arith.constant 0 : index
      %26 = vector.load %arg3[%25, %c0_20] : memref<256x128xf32, #tpu.memory_space<vmem>>, vector<8x128xf32>
      %27 = vector.extract_strided_slice %26 {offsets = [0, 0], sizes = [2, 128], strides = [1, 1]} : vector<8x128xf32> to vector<2x128xf32>
      %28 = vector.shape_cast %27 : vector<2x128xf32> to vector<2x1x128xf32>
      %29 = vector.extract_strided_slice %24 {offsets = [0, 0], sizes = [2, 8], strides = [1, 1]} : vector<8x8xf32> to vector<2x8xf32>
      %30 = vector.shape_cast %29 : vector<2x8xf32> to vector<2x8x1xf32>
      %31 = vector.broadcast %28 : vector<2x1x128xf32> to vector<2x8x128xf32>
      %32 = vector.broadcast %30 : vector<2x8x1xf32> to vector<2x8x128xf32>
      %33 = arith.addf %31, %32 : vector<2x8x128xf32>
      %cst_21 = arith.constant dense<0xFF800000> : vector<8x128xf32>
      %34 = vector.multi_reduction <maximumf>, %33, %cst_21 [0] : vector<2x8x128xf32> to vector<8x128xf32>
      %35 = arith.maximumf %arg16, %34 : vector<8x128xf32>
      %36 = vector.extract_strided_slice %26 {offsets = [2, 0], sizes = [2, 128], strides = [1, 1]} : vector<8x128xf32> to vector<2x128xf32>
      %37 = vector.shape_cast %36 : vector<2x128xf32> to vector<2x1x128xf32>
      %38 = vector.extract_strided_slice %24 {offsets = [2, 0], sizes = [2, 8], strides = [1, 1]} : vector<8x8xf32> to vector<2x8xf32>
      %39 = vector.shape_cast %38 : vector<2x8xf32> to vector<2x8x1xf32>
      %40 = vector.broadcast %37 : vector<2x1x128xf32> to vector<2x8x128xf32>
      %41 = vector.broadcast %39 : vector<2x8x1xf32> to vector<2x8x128xf32>
      %42 = arith.addf %40, %41 : vector<2x8x128xf32>
      %cst_22 = arith.constant dense<0xFF800000> : vector<8x128xf32>
      %43 = vector.multi_reduction <maximumf>, %42, %cst_22 [0] : vector<2x8x128xf32> to vector<8x128xf32>
      %44 = arith.maximumf %35, %43 : vector<8x128xf32>
      %45 = vector.extract_strided_slice %26 {offsets = [4, 0], sizes = [2, 128], strides = [1, 1]} : vector<8x128xf32> to vector<2x128xf32>
      %46 = vector.shape_cast %45 : vector<2x128xf32> to vector<2x1x128xf32>
      %47 = vector.extract_strided_slice %24 {offsets = [4, 0], sizes = [2, 8], strides = [1, 1]} : vector<8x8xf32> to vector<2x8xf32>
      %48 = vector.shape_cast %47 : vector<2x8xf32> to vector<2x8x1xf32>
      %49 = vector.broadcast %46 : vector<2x1x128xf32> to vector<2x8x128xf32>
      %50 = vector.broadcast %48 : vector<2x8x1xf32> to vector<2x8x128xf32>
      %51 = arith.addf %49, %50 : vector<2x8x128xf32>
      %cst_23 = arith.constant dense<0xFF800000> : vector<8x128xf32>
      %52 = vector.multi_reduction <maximumf>, %51, %cst_23 [0] : vector<2x8x128xf32> to vector<8x128xf32>
      %53 = arith.maximumf %44, %52 : vector<8x128xf32>
      %54 = vector.extract_strided_slice %26 {offsets = [6, 0], sizes = [2, 128], strides = [1, 1]} : vector<8x128xf32> to vector<2x128xf32>
      %55 = vector.shape_cast %54 : vector<2x128xf32> to vector<2x1x128xf32>
      %56 = vector.extract_strided_slice %24 {offsets = [6, 0], sizes = [2, 8], strides = [1, 1]} : vector<8x8xf32> to vector<2x8xf32>
      %57 = vector.shape_cast %56 : vector<2x8xf32> to vector<2x8x1xf32>
      %58 = vector.broadcast %55 : vector<2x1x128xf32> to vector<2x8x128xf32>
      %59 = vector.broadcast %57 : vector<2x8x1xf32> to vector<2x8x128xf32>
      %60 = arith.addf %58, %59 : vector<2x8x128xf32>
      %cst_24 = arith.constant dense<0xFF800000> : vector<8x128xf32>
      %61 = vector.multi_reduction <maximumf>, %60, %cst_24 [0] : vector<2x8x128xf32> to vector<8x128xf32>
      %62 = arith.maximumf %53, %61 : vector<8x128xf32>
      %63 = arith.index_cast %17 : i32 to index
      %c0_25 = arith.constant 0 : index
      %64 = vector.load %arg4[%63, %c0_25] : memref<256x128xf32, #tpu.memory_space<vmem>>, vector<8x128xf32>
      %65 = vector.extract_strided_slice %64 {offsets = [0, 0], sizes = [2, 128], strides = [1, 1]} : vector<8x128xf32> to vector<2x128xf32>
      %66 = vector.shape_cast %65 : vector<2x128xf32> to vector<2x1x128xf32>
      %67 = vector.extract_strided_slice %24 {offsets = [0, 0], sizes = [2, 8], strides = [1, 1]} : vector<8x8xf32> to vector<2x8xf32>
      %68 = vector.shape_cast %67 : vector<2x8xf32> to vector<2x8x1xf32>
      %69 = vector.broadcast %66 : vector<2x1x128xf32> to vector<2x8x128xf32>
      %70 = vector.broadcast %68 : vector<2x8x1xf32> to vector<2x8x128xf32>
      %71 = arith.addf %69, %70 : vector<2x8x128xf32>
      %cst_26 = arith.constant dense<0xFF800000> : vector<8x128xf32>
      %72 = vector.multi_reduction <maximumf>, %71, %cst_26 [0] : vector<2x8x128xf32> to vector<8x128xf32>
      %73 = arith.maximumf %arg17, %72 : vector<8x128xf32>
      %74 = vector.extract_strided_slice %64 {offsets = [2, 0], sizes = [2, 128], strides = [1, 1]} : vector<8x128xf32> to vector<2x128xf32>
      %75 = vector.shape_cast %74 : vector<2x128xf32> to vector<2x1x128xf32>
      %76 = vector.extract_strided_slice %24 {offsets = [2, 0], sizes = [2, 8], strides = [1, 1]} : vector<8x8xf32> to vector<2x8xf32>
      %77 = vector.shape_cast %76 : vector<2x8xf32> to vector<2x8x1xf32>
      %78 = vector.broadcast %75 : vector<2x1x128xf32> to vector<2x8x128xf32>
      %79 = vector.broadcast %77 : vector<2x8x1xf32> to vector<2x8x128xf32>
      %80 = arith.addf %78, %79 : vector<2x8x128xf32>
      %cst_27 = arith.constant dense<0xFF800000> : vector<8x128xf32>
      %81 = vector.multi_reduction <maximumf>, %80, %cst_27 [0] : vector<2x8x128xf32> to vector<8x128xf32>
      %82 = arith.maximumf %73, %81 : vector<8x128xf32>
      %83 = vector.extract_strided_slice %64 {offsets = [4, 0], sizes = [2, 128], strides = [1, 1]} : vector<8x128xf32> to vector<2x128xf32>
      %84 = vector.shape_cast %83 : vector<2x128xf32> to vector<2x1x128xf32>
      %85 = vector.extract_strided_slice %24 {offsets = [4, 0], sizes = [2, 8], strides = [1, 1]} : vector<8x8xf32> to vector<2x8xf32>
      %86 = vector.shape_cast %85 : vector<2x8xf32> to vector<2x8x1xf32>
      %87 = vector.broadcast %84 : vector<2x1x128xf32> to vector<2x8x128xf32>
      %88 = vector.broadcast %86 : vector<2x8x1xf32> to vector<2x8x128xf32>
      %89 = arith.addf %87, %88 : vector<2x8x128xf32>
      %cst_28 = arith.constant dense<0xFF800000> : vector<8x128xf32>
      %90 = vector.multi_reduction <maximumf>, %89, %cst_28 [0] : vector<2x8x128xf32> to vector<8x128xf32>
      %91 = arith.maximumf %82, %90 : vector<8x128xf32>
      %92 = vector.extract_strided_slice %64 {offsets = [6, 0], sizes = [2, 128], strides = [1, 1]} : vector<8x128xf32> to vector<2x128xf32>
      %93 = vector.shape_cast %92 : vector<2x128xf32> to vector<2x1x128xf32>
      %94 = vector.extract_strided_slice %24 {offsets = [6, 0], sizes = [2, 8], strides = [1, 1]} : vector<8x8xf32> to vector<2x8xf32>
      %95 = vector.shape_cast %94 : vector<2x8xf32> to vector<2x8x1xf32>
      %96 = vector.broadcast %93 : vector<2x1x128xf32> to vector<2x8x128xf32>
      %97 = vector.broadcast %95 : vector<2x8x1xf32> to vector<2x8x128xf32>
      %98 = arith.addf %96, %97 : vector<2x8x128xf32>
      %cst_29 = arith.constant dense<0xFF800000> : vector<8x128xf32>
      %99 = vector.multi_reduction <maximumf>, %98, %cst_29 [0] : vector<2x8x128xf32> to vector<8x128xf32>
      %100 = arith.maximumf %91, %99 : vector<8x128xf32>
      %101 = arith.index_cast %17 : i32 to index
      %c0_30 = arith.constant 0 : index
      %102 = vector.load %arg5[%101, %c0_30] : memref<256x128xf32, #tpu.memory_space<vmem>>, vector<8x128xf32>
      %103 = vector.extract_strided_slice %102 {offsets = [0, 0], sizes = [2, 128], strides = [1, 1]} : vector<8x128xf32> to vector<2x128xf32>
      %104 = vector.shape_cast %103 : vector<2x128xf32> to vector<2x1x128xf32>
      %105 = vector.extract_strided_slice %24 {offsets = [0, 0], sizes = [2, 8], strides = [1, 1]} : vector<8x8xf32> to vector<2x8xf32>
      %106 = vector.shape_cast %105 : vector<2x8xf32> to vector<2x8x1xf32>
      %107 = vector.broadcast %104 : vector<2x1x128xf32> to vector<2x8x128xf32>
      %108 = vector.broadcast %106 : vector<2x8x1xf32> to vector<2x8x128xf32>
      %109 = arith.addf %107, %108 : vector<2x8x128xf32>
      %cst_31 = arith.constant dense<0xFF800000> : vector<8x128xf32>
      %110 = vector.multi_reduction <maximumf>, %109, %cst_31 [0] : vector<2x8x128xf32> to vector<8x128xf32>
      %111 = arith.maximumf %arg18, %110 : vector<8x128xf32>
      %112 = vector.extract_strided_slice %102 {offsets = [2, 0], sizes = [2, 128], strides = [1, 1]} : vector<8x128xf32> to vector<2x128xf32>
      %113 = vector.shape_cast %112 : vector<2x128xf32> to vector<2x1x128xf32>
      %114 = vector.extract_strided_slice %24 {offsets = [2, 0], sizes = [2, 8], strides = [1, 1]} : vector<8x8xf32> to vector<2x8xf32>
      %115 = vector.shape_cast %114 : vector<2x8xf32> to vector<2x8x1xf32>
      %116 = vector.broadcast %113 : vector<2x1x128xf32> to vector<2x8x128xf32>
      %117 = vector.broadcast %115 : vector<2x8x1xf32> to vector<2x8x128xf32>
      %118 = arith.addf %116, %117 : vector<2x8x128xf32>
      %cst_32 = arith.constant dense<0xFF800000> : vector<8x128xf32>
      %119 = vector.multi_reduction <maximumf>, %118, %cst_32 [0] : vector<2x8x128xf32> to vector<8x128xf32>
      %120 = arith.maximumf %111, %119 : vector<8x128xf32>
      %121 = vector.extract_strided_slice %102 {offsets = [4, 0], sizes = [2, 128], strides = [1, 1]} : vector<8x128xf32> to vector<2x128xf32>
      %122 = vector.shape_cast %121 : vector<2x128xf32> to vector<2x1x128xf32>
      %123 = vector.extract_strided_slice %24 {offsets = [4, 0], sizes = [2, 8], strides = [1, 1]} : vector<8x8xf32> to vector<2x8xf32>
      %124 = vector.shape_cast %123 : vector<2x8xf32> to vector<2x8x1xf32>
      %125 = vector.broadcast %122 : vector<2x1x128xf32> to vector<2x8x128xf32>
      %126 = vector.broadcast %124 : vector<2x8x1xf32> to vector<2x8x128xf32>
      %127 = arith.addf %125, %126 : vector<2x8x128xf32>
      %cst_33 = arith.constant dense<0xFF800000> : vector<8x128xf32>
      %128 = vector.multi_reduction <maximumf>, %127, %cst_33 [0] : vector<2x8x128xf32> to vector<8x128xf32>
      %129 = arith.maximumf %120, %128 : vector<8x128xf32>
      %130 = vector.extract_strided_slice %102 {offsets = [6, 0], sizes = [2, 128], strides = [1, 1]} : vector<8x128xf32> to vector<2x128xf32>
      %131 = vector.shape_cast %130 : vector<2x128xf32> to vector<2x1x128xf32>
      %132 = vector.extract_strided_slice %24 {offsets = [6, 0], sizes = [2, 8], strides = [1, 1]} : vector<8x8xf32> to vector<2x8xf32>
      %133 = vector.shape_cast %132 : vector<2x8xf32> to vector<2x8x1xf32>
      %134 = vector.broadcast %131 : vector<2x1x128xf32> to vector<2x8x128xf32>
      %135 = vector.broadcast %133 : vector<2x8x1xf32> to vector<2x8x128xf32>
      %136 = arith.addf %134, %135 : vector<2x8x128xf32>
      %cst_34 = arith.constant dense<0xFF800000> : vector<8x128xf32>
      %137 = vector.multi_reduction <maximumf>, %136, %cst_34 [0] : vector<2x8x128xf32> to vector<8x128xf32>
      %138 = arith.maximumf %129, %137 : vector<8x128xf32>
      %139 = arith.index_cast %17 : i32 to index
      %c0_35 = arith.constant 0 : index
      %140 = vector.load %arg6[%139, %c0_35] : memref<256x128xf32, #tpu.memory_space<vmem>>, vector<8x128xf32>
      %141 = vector.extract_strided_slice %140 {offsets = [0, 0], sizes = [2, 128], strides = [1, 1]} : vector<8x128xf32> to vector<2x128xf32>
      %142 = vector.shape_cast %141 : vector<2x128xf32> to vector<2x1x128xf32>
      %143 = vector.extract_strided_slice %24 {offsets = [0, 0], sizes = [2, 8], strides = [1, 1]} : vector<8x8xf32> to vector<2x8xf32>
      %144 = vector.shape_cast %143 : vector<2x8xf32> to vector<2x8x1xf32>
      %145 = vector.broadcast %142 : vector<2x1x128xf32> to vector<2x8x128xf32>
      %146 = vector.broadcast %144 : vector<2x8x1xf32> to vector<2x8x128xf32>
      %147 = arith.addf %145, %146 : vector<2x8x128xf32>
      %cst_36 = arith.constant dense<0xFF800000> : vector<8x128xf32>
      %148 = vector.multi_reduction <maximumf>, %147, %cst_36 [0] : vector<2x8x128xf32> to vector<8x128xf32>
      %149 = arith.maximumf %arg19, %148 : vector<8x128xf32>
      %150 = vector.extract_strided_slice %140 {offsets = [2, 0], sizes = [2, 128], strides = [1, 1]} : vector<8x128xf32> to vector<2x128xf32>
      %151 = vector.shape_cast %150 : vector<2x128xf32> to vector<2x1x128xf32>
      %152 = vector.extract_strided_slice %24 {offsets = [2, 0], sizes = [2, 8], strides = [1, 1]} : vector<8x8xf32> to vector<2x8xf32>
      %153 = vector.shape_cast %152 : vector<2x8xf32> to vector<2x8x1xf32>
      %154 = vector.broadcast %151 : vector<2x1x128xf32> to vector<2x8x128xf32>
      %155 = vector.broadcast %153 : vector<2x8x1xf32> to vector<2x8x128xf32>
      %156 = arith.addf %154, %155 : vector<2x8x128xf32>
      %cst_37 = arith.constant dense<0xFF800000> : vector<8x128xf32>
      %157 = vector.multi_reduction <maximumf>, %156, %cst_37 [0] : vector<2x8x128xf32> to vector<8x128xf32>
      %158 = arith.maximumf %149, %157 : vector<8x128xf32>
      %159 = vector.extract_strided_slice %140 {offsets = [4, 0], sizes = [2, 128], strides = [1, 1]} : vector<8x128xf32> to vector<2x128xf32>
      %160 = vector.shape_cast %159 : vector<2x128xf32> to vector<2x1x128xf32>
      %161 = vector.extract_strided_slice %24 {offsets = [4, 0], sizes = [2, 8], strides = [1, 1]} : vector<8x8xf32> to vector<2x8xf32>
      %162 = vector.shape_cast %161 : vector<2x8xf32> to vector<2x8x1xf32>
      %163 = vector.broadcast %160 : vector<2x1x128xf32> to vector<2x8x128xf32>
      %164 = vector.broadcast %162 : vector<2x8x1xf32> to vector<2x8x128xf32>
      %165 = arith.addf %163, %164 : vector<2x8x128xf32>
      %cst_38 = arith.constant dense<0xFF800000> : vector<8x128xf32>
      %166 = vector.multi_reduction <maximumf>, %165, %cst_38 [0] : vector<2x8x128xf32> to vector<8x128xf32>
      %167 = arith.maximumf %158, %166 : vector<8x128xf32>
      %168 = vector.extract_strided_slice %140 {offsets = [6, 0], sizes = [2, 128], strides = [1, 1]} : vector<8x128xf32> to vector<2x128xf32>
      %169 = vector.shape_cast %168 : vector<2x128xf32> to vector<2x1x128xf32>
      %170 = vector.extract_strided_slice %24 {offsets = [6, 0], sizes = [2, 8], strides = [1, 1]} : vector<8x8xf32> to vector<2x8xf32>
      %171 = vector.shape_cast %170 : vector<2x8xf32> to vector<2x8x1xf32>
      %172 = vector.broadcast %169 : vector<2x1x128xf32> to vector<2x8x128xf32>
      %173 = vector.broadcast %171 : vector<2x8x1xf32> to vector<2x8x128xf32>
      %174 = arith.addf %172, %173 : vector<2x8x128xf32>
      %cst_39 = arith.constant dense<0xFF800000> : vector<8x128xf32>
      %175 = vector.multi_reduction <maximumf>, %174, %cst_39 [0] : vector<2x8x128xf32> to vector<8x128xf32>
      %176 = arith.maximumf %167, %175 : vector<8x128xf32>
      scf.yield %62, %100, %138, %176 : vector<8x128xf32>, vector<8x128xf32>, vector<8x128xf32>, vector<8x128xf32>
    }
    %c32_i32_6 = arith.constant 32 : i32
    %c0_7 = arith.constant 0 : index
    %c0_8 = arith.constant 0 : index
    %9 = vector.load %arg14[%c0_7, %c0_8] : memref<8x512xf32, #tpu.memory_space<vmem>>, vector<8x128xf32>
    tpu.vector_store %arg14[%c0_7, %c0_8], %8#0 {strides = array<i32>} : memref<8x512xf32, #tpu.memory_space<vmem>>, vector<8x128xf32>,
    %c0_9 = arith.constant 0 : index
    %c128_10 = arith.constant 128 : index
    %10 = vector.load %arg14[%c0_9, %c128_10] : memref<8x512xf32, #tpu.memory_space<vmem>>, vector<8x128xf32>
    tpu.vector_store %arg14[%c0_9, %c128_10], %8#1 {strides = array<i32>} : memref<8x512xf32, #tpu.memory_space<vmem>>, vector<8x128xf32>,
    %c0_11 = arith.constant 0 : index
    %c256_12 = arith.constant 256 : index
    %11 = vector.load %arg14[%c0_11, %c256_12] : memref<8x512xf32, #tpu.memory_space<vmem>>, vector<8x128xf32>
    tpu.vector_store %arg14[%c0_11, %c256_12], %8#2 {strides = array<i32>} : memref<8x512xf32, #tpu.memory_space<vmem>>, vector<8x128xf32>,
    %c0_13 = arith.constant 0 : index
    %c384_14 = arith.constant 384 : index
    %12 = vector.load %arg14[%c0_13, %c384_14] : memref<8x512xf32, #tpu.memory_space<vmem>>, vector<8x128xf32>
    tpu.vector_store %arg14[%c0_13, %c384_14], %8#3 {strides = array<i32>} : memref<8x512xf32, #tpu.memory_space<vmem>>, vector<8x128xf32>,
    %c0_i32_15 = arith.constant 0 : i32
    %13 = arith.cmpi eq, %arg0, %c0_i32_15 : i32
    %14 = arith.extui %13 : i1 to i32
    %c0_i32_16 = arith.constant 0 : i32
    %15 = arith.cmpi ne, %14, %c0_i32_16 : i32
    scf.if %15 {
      %c0_17 = arith.constant 0 : index
      %c0_18 = arith.constant 0 : index
      %16 = vector.load %arg2[%c0_17, %c0_18] : memref<8x1xf32, #tpu.memory_space<vmem>>, vector<8x1xf32>
      %cst = arith.constant 0.000000e+00 : f32
      %17 = vector.broadcast %cst : f32 to vector<8x1xf32>
      %18 = arith.cmpf ogt, %16, %17 : vector<8x1xf32>
      %c0_19 = arith.constant 0 : index
      %c0_20 = arith.constant 0 : index
      %19 = vector.load %arg14[%c0_19, %c0_20] : memref<8x512xf32, #tpu.memory_space<vmem>>, vector<8x512xf32>
      %cst_21 = arith.constant 0.000000e+00 : f32
      %20 = vector.shape_cast %18 : vector<8x1xi1> to vector<8x1xi1>
      %21 = vector.broadcast %20 : vector<8x1xi1> to vector<8x512xi1>
      %22 = vector.broadcast %cst_21 : f32 to vector<8x512xf32>
      %23 = arith.select %21, %19, %22 : vector<8x512xi1>, vector<8x512xf32>
      %c0_22 = arith.constant 0 : index
      %c0_23 = arith.constant 0 : index
      %24 = vector.load %arg7[%c0_22, %c0_23] : memref<512x128xf32, #tpu.memory_space<vmem>>, vector<512x128xf32>
      %cst_24 = arith.constant dense<0.000000e+00> : vector<8x128xf32>
      %25 = tpu.matmul %23, %24, %cst_24 {dimension_numbers = #tpu.dot_dimension_numbers<[1], [0], [0], [1], [0, 0, 1, 1], [], []>} : vector<8x512xf32>, vector<512x128xf32>, vector<8x128xf32> -> vector<8x128xf32>
      %c0_25 = arith.constant 0 : index
      %c0_26 = arith.constant 0 : index
      %26 = vector.load %arg8[%c0_25, %c0_26] : memref<1x128xf32, #tpu.memory_space<vmem>>, vector<1x128xf32>
      %27 = vector.broadcast %26 : vector<1x128xf32> to vector<8x128xf32>
      %28 = arith.addf %25, %27 : vector<8x128xf32>
      %cst_27 = arith.constant 0.000000e+00 : f32
      %29 = vector.broadcast %cst_27 : f32 to vector<8x128xf32>
      %30 = arith.maximumf %28, %29 : vector<8x128xf32>
      %c0_28 = arith.constant 0 : index
      %c0_29 = arith.constant 0 : index
      %31 = vector.load %arg9[%c0_28, %c0_29] : memref<128x128xf32, #tpu.memory_space<vmem>>, vector<128x128xf32>
      %cst_30 = arith.constant dense<0.000000e+00> : vector<8x128xf32>
      %32 = tpu.matmul %30, %31, %cst_30 {dimension_numbers = #tpu.dot_dimension_numbers<[1], [0], [0], [1], [0, 0, 1, 1], [], []>} : vector<8x128xf32>, vector<128x128xf32>, vector<8x128xf32> -> vector<8x128xf32>
      %c0_31 = arith.constant 0 : index
      %c0_32 = arith.constant 0 : index
      %33 = vector.load %arg10[%c0_31, %c0_32] : memref<1x128xf32, #tpu.memory_space<vmem>>, vector<1x128xf32>
      %34 = vector.broadcast %33 : vector<1x128xf32> to vector<8x128xf32>
      %35 = arith.addf %32, %34 : vector<8x128xf32>
      %36 = tpu.iota {dimensions = array<i32: 1>} : vector<8x128xi32>
      %c6_i32 = arith.constant 6 : i32
      %37 = vector.broadcast %c6_i32 : i32 to vector<8x128xi32>
      %38 = arith.cmpi slt, %36, %37 : vector<8x128xi32>
      %cst_33 = arith.constant -1.000000e+30 : f32
      %39 = vector.broadcast %cst_33 : f32 to vector<8x128xf32>
      %40 = arith.select %38, %35, %39 : vector<8x128xi1>, vector<8x128xf32>
      %cst_34 = arith.constant dense<0xFF800000> : vector<8xf32>
      %41 = vector.multi_reduction <maximumf>, %40, %cst_34 [1] : vector<8x128xf32> to vector<8xf32>
      %42 = vector.shape_cast %41 : vector<8xf32> to vector<8x1xf32>
      %43 = vector.broadcast %42 : vector<8x1xf32> to vector<8x128xf32>
      %44 = arith.subf %40, %43 : vector<8x128xf32>
      %45 = math.exp %44 : vector<8x128xf32>
      %cst_35 = arith.constant dense<0.000000e+00> : vector<8xf32>
      %46 = vector.multi_reduction <add>, %45, %cst_35 [1] : vector<8x128xf32> to vector<8xf32>
      %47 = vector.shape_cast %46 : vector<8xf32> to vector<8x1xf32>
      %48 = math.log %47 : vector<8x1xf32>
      %49 = vector.broadcast %48 : vector<8x1xf32> to vector<8x128xf32>
      %50 = arith.subf %44, %49 : vector<8x128xf32>
      %c0_36 = arith.constant 0 : index
      %c0_37 = arith.constant 0 : index
      %51 = vector.load %arg11[%c0_36, %c0_37] : memref<8x128xf32, #tpu.memory_space<vmem>>, vector<8x128xf32>
      tpu.vector_store %arg11[%c0_36, %c0_37], %50 {strides = array<i32>} : memref<8x128xf32, #tpu.memory_space<vmem>>, vector<8x128xf32>,
      %c0_38 = arith.constant 0 : index
      %c0_39 = arith.constant 0 : index
      %52 = vector.load %arg12[%c0_38, %c0_39] : memref<8x128xf32, #tpu.memory_space<vmem>>, vector<8x128xf32>
      tpu.vector_store %arg12[%c0_38, %c0_39], %35 {strides = array<i32>} : memref<8x128xf32, #tpu.memory_space<vmem>>, vector<8x128xf32>,
      %c0_40 = arith.constant 0 : index
      %c0_41 = arith.constant 0 : index
      %53 = vector.load %arg13[%c0_40, %c0_41] : memref<8x128xf32, #tpu.memory_space<vmem>>, vector<8x128xf32>
      tpu.vector_store %arg13[%c0_40, %c0_41], %30 {strides = array<i32>} : memref<8x128xf32, #tpu.memory_space<vmem>>, vector<8x128xf32>,
    } else {
    }
    return
  }
  func.func @transform_0(%arg0: i32) -> (i32, i32) {
    %c0_i32 = arith.constant 0 : i32
    %c0_i32_0 = arith.constant 0 : i32
    return %arg0, %c0_i32 : i32, i32
  }
  func.func @transform_1(%arg0: i32) -> (i32, i32) {
    %c0_i32 = arith.constant 0 : i32
    %c0_i32_0 = arith.constant 0 : i32
    %c0_i32_1 = arith.constant 0 : i32
    return %c0_i32, %c0_i32_0 : i32, i32
  }
  func.func @transform_2(%arg0: i32) -> (i32, i32) {
    %c0_i32 = arith.constant 0 : i32
    %c0_i32_0 = arith.constant 0 : i32
    return %arg0, %c0_i32 : i32, i32
  }
  func.func @transform_3(%arg0: i32) -> (i32, i32) {
    %c0_i32 = arith.constant 0 : i32
    %c0_i32_0 = arith.constant 0 : i32
    return %arg0, %c0_i32 : i32, i32
  }
  func.func @transform_4(%arg0: i32) -> (i32, i32) {
    %c0_i32 = arith.constant 0 : i32
    %c0_i32_0 = arith.constant 0 : i32
    return %arg0, %c0_i32 : i32, i32
  }
  func.func @transform_5(%arg0: i32) -> (i32, i32) {
    %c0_i32 = arith.constant 0 : i32
    %c0_i32_0 = arith.constant 0 : i32
    return %arg0, %c0_i32 : i32, i32
  }
  func.func @transform_6(%arg0: i32) -> (i32, i32) {
    %c0_i32 = arith.constant 0 : i32
    %c0_i32_0 = arith.constant 0 : i32
    %c0_i32_1 = arith.constant 0 : i32
    return %c0_i32, %c0_i32_0 : i32, i32
  }
  func.func @transform_7(%arg0: i32) -> (i32, i32) {
    %c0_i32 = arith.constant 0 : i32
    %c0_i32_0 = arith.constant 0 : i32
    %c0_i32_1 = arith.constant 0 : i32
    return %c0_i32, %c0_i32_0 : i32, i32
  }
  func.func @transform_8(%arg0: i32) -> (i32, i32) {
    %c0_i32 = arith.constant 0 : i32
    %c0_i32_0 = arith.constant 0 : i32
    %c0_i32_1 = arith.constant 0 : i32
    return %c0_i32, %c0_i32_0 : i32, i32
  }
  func.func @transform_9(%arg0: i32) -> (i32, i32) {
    %c0_i32 = arith.constant 0 : i32
    %c0_i32_0 = arith.constant 0 : i32
    %c0_i32_1 = arith.constant 0 : i32
    return %c0_i32, %c0_i32_0 : i32, i32
  }
  func.func @transform_10(%arg0: i32) -> (i32, i32) {
    %c0_i32 = arith.constant 0 : i32
    %c0_i32_0 = arith.constant 0 : i32
    %c0_i32_1 = arith.constant 0 : i32
    return %c0_i32, %c0_i32_0 : i32, i32
  }
  func.func @transform_11(%arg0: i32) -> (i32, i32) {
    %c0_i32 = arith.constant 0 : i32
    %c0_i32_0 = arith.constant 0 : i32
    %c0_i32_1 = arith.constant 0 : i32
    return %c0_i32, %c0_i32_0 : i32, i32
  }
  func.func @transform_12(%arg0: i32) -> (i32, i32) {
    %c0_i32 = arith.constant 0 : i32
    %c0_i32_0 = arith.constant 0 : i32
    %c0_i32_1 = arith.constant 0 : i32
    return %c0_i32, %c0_i32_0 : i32, i32
  }
}

</mosaic_0001>

<llo_original>
// kernel: graphsage_forward.6
$region0: #{graphsage_forward.6}
  #allocation0 [shape = 'u32[]', space=smem, size = 0x4, offset = 0x4, fixed_abs, tag = 'smem constant byte address 0x4 - core index']
  #allocation1 [shape = 'u32[72,128]{1,0:T(1,128)}', space=vmem, size = 0x9000, scoped, tag = 'internal scratch']
  #allocation2 [shape = 'f32[128,128]{1,0:T(8,128)}', space=vmem, size = 0x10000, scoped, tag = 'scratch operand']
  %s0 = inlined_call_operand.hbm [shape: bf16[256,256], index: 0, kind: input, shape index: {}]
  %s1 = inlined_call_operand.vmem [shape: f32[256,128], index: 1, kind: input, shape index: {}, may-alias: {1,2}]
  %s2 = inlined_call_operand.vmem [shape: f32[256,128], index: 2, kind: input, shape index: {}, may-alias: {1,2}]
  %s3 = inlined_call_operand.vmem [shape: f32[256,1], index: 3, kind: input, shape index: {}]
  %s4 = inlined_call_operand.hbm [shape: f32[256,128], index: 4, kind: input, shape index: {}]
  %s5 = inlined_call_operand.vmem [shape: f32[1,128], index: 5, kind: input, shape index: {}]
  %s6 = inlined_call_operand.vmem [shape: f32[128,128], index: 6, kind: input, shape index: {}]
  %s7 = inlined_call_operand.vmem [shape: f32[1,128], index: 7, kind: input, shape index: {}]
  %s8 = inlined_call_operand.vmem [shape: f32[256,128], index: 8, kind: output, shape index: {}]
  %s9 = sld [smem:[#allocation0]]
  $region88: #{graphsage_forward.6} parent=0
    _
  %s11 = ssub.s32 1, %s9
  %s12 = scalar_select 0, %s11, %s9
  $region1: #{graphsage_forward.6} parent=0
    #allocation3 [shape = 'u8[131072]{0}', space=vmem, size = 0x20000, scoped, tag = 'input window, operand 0']
    #allocation4 [shape = 's32[2]{0}', space=sflag, size = 0x8, scoped, tag = 'scoped memory for graphsage_forward.6']
    #allocation5 [shape = 'u8[131072]{0}', space=vmem, size = 0x20000, scoped, tag = 'input window, operand 4, single buffered']
    #allocation6 [shape = 's32[1]{0}', space=sflag, size = 0x4, scoped, tag = 'scoped memory for graphsage_forward.6']
    %13 = vsyncpa [#allocation4], 0
    %s14 = scalar_lea.sflag [#allocation4], 1
    %15 = vsyncpa %s14, 0
    %16 = vsyncpa [#allocation6], 0
    loop: start=0, step=1, limit=4
    $region2: #{graphsage_forward.6} parent=1 // loop_pre_header
      _
    $region3: #{graphsage_forward.6} parent=1 // loop_header
      %s18 = sphi 0, %s22
      %p19 = scmp.ge.s32.totalorder %s18, 4
      %s25 = sphi 0, %s37
      %s26 = sphi 0, %s33
      %s27 = sphi 0, %s25
      %s28 = sphi 0, %s26
      %s29 = sphi 0, %s27
      %s30 = sphi 0, %s28
      %s42 = sphi 0, %s44
      %s45 = sphi 0, %s42
      %s46 = sphi 0, %s45
      %s62 = sphi 0, %s46
      %s66 = sphi 0, %s66
      %s68 = sphi 0, %s66
      %s69 = sphi 0, %s68
      %s83 = sphi 0, %s69
      %s89 = sphi 0, %s91
      %s92 = sphi 0, %s89
      %s93 = sphi 0, %s92
      %s109 = sphi 0, %s93
      %s115 = sphi 0, %s117
      %s118 = sphi 0, %s115
      %s119 = sphi 0, %s118
      %s135 = sphi 0, %s119
      %s139 = sphi 0, %s139
      %s141 = sphi 0, %s139
      %s142 = sphi 0, %s141
      %s156 = sphi 0, %s142
      %s160 = sphi 0, %s160
      %s162 = sphi 0, %s160
      %s163 = sphi 0, %s162
      %s177 = sphi 0, %s163
      %s181 = sphi 0, %s181
      %s183 = sphi 0, %s181
      %s184 = sphi 0, %s183
      %s198 = sphi 0, %s184
      %s202 = sphi 0, %s202
      %s204 = sphi 0, %s202
      %s205 = sphi 0, %s204
      %s219 = sphi 0, %s205
      %s225 = sphi 0, %s227
      %s228 = sphi 0, %s225
      %s229 = sphi 0, %s228
      %s245 = sphi 0, %s229
    $region4: #{graphsage_forward.6} parent=1 // loop_header_branch
      %21 = sbr.rel (%p19) target = $region8
    $region5: #{graphsage_forward.6} parent=1 // loop_body
      %s23 = ssub.s32 %s18, 1
      %s24 = ssub.s32 %s18, 2
      %s31 = sadd.s32 1, %s26
      %p32 = scmp.ge.s32.totalorder %s31, 1
      %s33 = scalar_select %p32, 0, %s31
      %s34 = sadd.s32 1, %s25
      %s35 = scalar_select %p32, %s34, %s25
      %p36 = scmp.ge.s32.totalorder %s35, 2
      %s37 = scalar_select %p36, 0, %s35
      %s38 = ssub.s32 %s26, %s33
      %s39 = ssub.s32 %s25, %s37
      %s40 = sor.u32 %s38, %s39
      %p41 = scmp.eq.s32.totalorder %s40, 0
      %s43 = sadd.s32 %s42, 1
      %s44 = scalar_select %p41, %s42, %s43
      %p47 = pneg %p41
      %p48 = scmp.eq.s32.totalorder %s18, 1
      %p49 = por %p47, %p48
      %p50 = scmp.ne.s32.totalorder %s42, %s45
      %p51 = scmp.eq.s32.totalorder %s18, 0
      %p52 = por %p50, %p51
      %p53 = scmp.ne.s32.totalorder %s42, %s45
      %p54 = scmp.eq.s32.totalorder %s23, 1
      %p55 = por %p53, %p54
      %p56 = scmp.ne.s32.totalorder %s45, %s46
      %p57 = scmp.eq.s32.totalorder %s23, 0
      %p58 = por %p56, %p57
      %p59 = scmp.ne.s32.totalorder %s45, %s46
      %p60 = scmp.eq.s32.totalorder %s24, 1
      %p61 = por %p59, %p60
      %p63 = scmp.ne.s32.totalorder %s46, %s62
      %p64 = scmp.eq.s32.totalorder %s24, 0
      %p65 = por %p63, %p64
      %s67 = sadd.s32 %s66, 1
      %p70 = scmp.eq.s32.totalorder %s18, 1
      %p71 = scmp.ne.s32.totalorder %s66, %s68
      %p72 = scmp.eq.s32.totalorder %s18, 0
      %p73 = por %p71, %p72
      %p74 = scmp.ne.s32.totalorder %s66, %s68
      %p75 = scmp.eq.s32.totalorder %s23, 1
      %p76 = por %p74, %p75
      %p77 = scmp.ne.s32.totalorder %s68, %s69
      %p78 = scmp.eq.s32.totalorder %s23, 0
      %p79 = por %p77, %p78
      %p80 = scmp.ne.s32.totalorder %s68, %s69
      %p81 = scmp.eq.s32.totalorder %s24, 1
      %p82 = por %p80, %p81
      %p84 = scmp.ne.s32.totalorder %s69, %s83
      %p85 = scmp.eq.s32.totalorder %s24, 0
      %p86 = por %p84, %p85
      %s87 = ssub.s32 %s25, %s37
      %p88 = scmp.eq.s32.totalorder %s87, 0
      %s90 = sadd.s32 %s89, 1
      %s91 = scalar_select %p88, %s89, %s90
      %p94 = pneg %p88
      %p95 = scmp.eq.s32.totalorder %s18, 1
      %p96 = por %p94, %p95
      %p97 = scmp.ne.s32.totalorder %s89, %s92
      %p98 = scmp.eq.s32.totalorder %s18, 0
      %p99 = por %p97, %p98
      %p100 = scmp.ne.s32.totalorder %s89, %s92
      %p101 = scmp.eq.s32.totalorder %s23, 1
      %p102 = por %p100, %p101
      %p103 = scmp.ne.s32.totalorder %s92, %s93
      %p104 = scmp.eq.s32.totalorder %s23, 0
      %p105 = por %p103, %p104
      %p106 = scmp.ne.s32.totalorder %s92, %s93
      %p107 = scmp.eq.s32.totalorder %s24, 1
      %p108 = por %p106, %p107
      %p110 = scmp.ne.s32.totalorder %s93, %s109
      %p111 = scmp.eq.s32.totalorder %s24, 0
      %p112 = por %p110, %p111
      %s113 = ssub.s32 %s25, %s37
      %p114 = scmp.eq.s32.totalorder %s113, 0
      %s116 = sadd.s32 %s115, 1
      %s117 = scalar_select %p114, %s115, %s116
      %p120 = pneg %p114
      %p121 = scmp.eq.s32.totalorder %s18, 1
      %p122 = por %p120, %p121
      %p123 = scmp.ne.s32.totalorder %s115, %s118
      %p124 = scmp.eq.s32.totalorder %s18, 0
      %p125 = por %p123, %p124
      %p126 = scmp.ne.s32.totalorder %s115, %s118
      %p127 = scmp.eq.s32.totalorder %s23, 1
      %p128 = por %p126, %p127
      %p129 = scmp.ne.s32.totalorder %s118, %s119
      %p130 = scmp.eq.s32.totalorder %s23, 0
      %p131 = por %p129, %p130
      %p132 = scmp.ne.s32.totalorder %s118, %s119
      %p133 = scmp.eq.s32.totalorder %s24, 1
      %p134 = por %p132, %p133
      %p136 = scmp.ne.s32.totalorder %s119, %s135
      %p137 = scmp.eq.s32.totalorder %s24, 0
      %p138 = por %p136, %p137
      %s140 = sadd.s32 %s139, 1
      %p143 = scmp.eq.s32.totalorder %s18, 1
      %p144 = scmp.ne.s32.totalorder %s139, %s141
      %p145 = scmp.eq.s32.totalorder %s18, 0
      %p146 = por %p144, %p145
      %p147 = scmp.ne.s32.totalorder %s139, %s141
      %p148 = scmp.eq.s32.totalorder %s23, 1
      %p149 = por %p147, %p148
      %p150 = scmp.ne.s32.totalorder %s141, %s142
      %p151 = scmp.eq.s32.totalorder %s23, 0
      %p152 = por %p150, %p151
      %p153 = scmp.ne.s32.totalorder %s141, %s142
      %p154 = scmp.eq.s32.totalorder %s24, 1
      %p155 = por %p153, %p154
      %p157 = scmp.ne.s32.totalorder %s142, %s156
      %p158 = scmp.eq.s32.totalorder %s24, 0
      %p159 = por %p157, %p158
      %s161 = sadd.s32 %s160, 1
      %p164 = scmp.eq.s32.totalorder %s18, 1
      %p165 = scmp.ne.s32.totalorder %s160, %s162
      %p166 = scmp.eq.s32.totalorder %s18, 0
      %p167 = por %p165, %p166
      %p168 = scmp.ne.s32.totalorder %s160, %s162
      %p169 = scmp.eq.s32.totalorder %s23, 1
      %p170 = por %p168, %p169
      %p171 = scmp.ne.s32.totalorder %s162, %s163
      %p172 = scmp.eq.s32.totalorder %s23, 0
      %p173 = por %p171, %p172
      %p174 = scmp.ne.s32.totalorder %s162, %s163
      %p175 = scmp.eq.s32.totalorder %s24, 1
      %p176 = por %p174, %p175
      %p178 = scmp.ne.s32.totalorder %s163, %s177
      %p179 = scmp.eq.s32.totalorder %s24, 0
      %p180 = por %p178, %p179
      %s182 = sadd.s32 %s181, 1
      %p185 = scmp.eq.s32.totalorder %s18, 1
      %p186 = scmp.ne.s32.totalorder %s181, %s183
      %p187 = scmp.eq.s32.totalorder %s18, 0
      %p188 = por %p186, %p187
      %p189 = scmp.ne.s32.totalorder %s181, %s183
      %p190 = scmp.eq.s32.totalorder %s23, 1
      %p191 = por %p189, %p190
      %p192 = scmp.ne.s32.totalorder %s183, %s184
      %p193 = scmp.eq.s32.totalorder %s23, 0
      %p194 = por %p192, %p193
      %p195 = scmp.ne.s32.totalorder %s183, %s184
      %p196 = scmp.eq.s32.totalorder %s24, 1
      %p197 = por %p195, %p196
      %p199 = scmp.ne.s32.totalorder %s184, %s198
      %p200 = scmp.eq.s32.totalorder %s24, 0
      %p201 = por %p199, %p200
      %s203 = sadd.s32 %s202, 1
      %p206 = scmp.eq.s32.totalorder %s18, 1
      %p207 = scmp.ne.s32.totalorder %s202, %s204
      %p208 = scmp.eq.s32.totalorder %s18, 0
      %p209 = por %p207, %p208
      %p210 = scmp.ne.s32.totalorder %s202, %s204
      %p211 = scmp.eq.s32.totalorder %s23, 1
      %p212 = por %p210, %p211
      %p213 = scmp.ne.s32.totalorder %s204, %s205
      %p214 = scmp.eq.s32.totalorder %s23, 0
      %p215 = por %p213, %p214
      %p216 = scmp.ne.s32.totalorder %s204, %s205
      %p217 = scmp.eq.s32.totalorder %s24, 1
      %p218 = por %p216, %p217
      %p220 = scmp.ne.s32.totalorder %s205, %s219
      %p221 = scmp.eq.s32.totalorder %s24, 0
      %p222 = por %p220, %p221
      %s223 = ssub.s32 %s25, %s37
      %p224 = scmp.eq.s32.totalorder %s223, 0
      %s226 = sadd.s32 %s225, 1
      %s227 = scalar_select %p224, %s225, %s226
      %p230 = pneg %p224
      %p231 = scmp.eq.s32.totalorder %s18, 1
      %p232 = por %p230, %p231
      %p233 = scmp.ne.s32.totalorder %s225, %s228
      %p234 = scmp.eq.s32.totalorder %s18, 0
      %p235 = por %p233, %p234
      %p236 = scmp.ne.s32.totalorder %s225, %s228
      %p237 = scmp.eq.s32.totalorder %s23, 1
      %p238 = por %p236, %p237
      %p239 = scmp.ne.s32.totalorder %s228, %s229
      %p240 = scmp.eq.s32.totalorder %s23, 0
      %p241 = por %p239, %p240
      %p242 = scmp.ne.s32.totalorder %s228, %s229
      %p243 = scmp.eq.s32.totalorder %s24, 1
      %p244 = por %p242, %p243
      %p246 = scmp.ne.s32.totalorder %s229, %s245
      %p247 = scmp.eq.s32.totalorder %s24, 0
      %p248 = por %p246, %p247
      %p249 = scmp.le.s32.totalorder 1, %s18
      %p250 = scmp.lt.s32.totalorder %s18, 3
      %p251 = pnand %p249, %p250
      %p252 = pneg %p251
      // Predicated region
      $region9: #{graphsage_forward.6} parent=5 // pred_check
        _
      $region10: #{graphsage_forward.6} parent=5 // pred_check_branch
        %254 = sbr.rel (%p251) target = $region12
      $region11: #{graphsage_forward.6} parent=5 // pred_region
        %s255 = ssub.s32 %s18, 1
        // Predicated region
        $region13: #{graphsage_forward.6} parent=11 // pred_check
          %p256 = pneg %p79
        $region14: #{graphsage_forward.6} parent=11 // pred_check_branch
          %258 = sbr.rel (%p256) target = $region16
        $region15: #{graphsage_forward.6} parent=11 // pred_region
          _
        $region16: #{graphsage_forward.6} parent=11 // pred_fallthru
          _
        // Predicated region
        $region17: #{graphsage_forward.6} parent=11 // pred_check
          %p259 = pneg %p152
        $region18: #{graphsage_forward.6} parent=11 // pred_check_branch
          %261 = sbr.rel (%p259) target = $region20
        $region19: #{graphsage_forward.6} parent=11 // pred_region
          %263 = vsyncadd [#allocation6], 0
          %s264 = sshll.u32 %s4, 4
          %s265 = int_to_ptr.hbm [resolvable:$true] %s264
          %s266 = sshll.u32 [#allocation5], 4
          %s267 = int_to_ptr.vmem [resolvable:$true] %s266
          %272 = dma.hbm_to_vmem [thread:$0]  %s265, 4096, %s267, [#allocation6], 128, 128, 8
        $region20: #{graphsage_forward.6} parent=11 // pred_fallthru
          _
        // Predicated region
        $region21: #{graphsage_forward.6} parent=11 // pred_check
          %p273 = pneg %p173
        $region22: #{graphsage_forward.6} parent=11 // pred_check_branch
          %275 = sbr.rel (%p273) target = $region24
        $region23: #{graphsage_forward.6} parent=11 // pred_region
          _
        $region24: #{graphsage_forward.6} parent=11 // pred_fallthru
          _
        // Predicated region
        $region25: #{graphsage_forward.6} parent=11 // pred_check
          %p276 = pneg %p194
        $region26: #{graphsage_forward.6} parent=11 // pred_check_branch
          %278 = sbr.rel (%p276) target = $region28
        $region27: #{graphsage_forward.6} parent=11 // pred_region
          _
        $region28: #{graphsage_forward.6} parent=11 // pred_fallthru
          _
        // Predicated region
        $region29: #{graphsage_forward.6} parent=11 // pred_check
          %p279 = pneg %p215
        $region30: #{graphsage_forward.6} parent=11 // pred_check_branch
          %281 = sbr.rel (%p279) target = $region32
        $region31: #{graphsage_forward.6} parent=11 // pred_region
          _
        $region32: #{graphsage_forward.6} parent=11 // pred_fallthru
          _
      $region12: #{graphsage_forward.6} parent=5 // pred_fallthru
        _
      %p282 = scmp.lt.s32.totalorder %s18, 2
      // Predicated region
      $region33: #{graphsage_forward.6} parent=5 // pred_check
        %p283 = pneg %p282
      $region34: #{graphsage_forward.6} parent=5 // pred_check_branch
        %285 = sbr.rel (%p283) target = $region36
      $region35: #{graphsage_forward.6} parent=5 // pred_region
        // Predicated region
        $region37: #{graphsage_forward.6} parent=35 // pred_check
          %p286 = pneg %p52
        $region38: #{graphsage_forward.6} parent=35 // pred_check_branch
          %288 = sbr.rel (%p286) target = $region40
        $region39: #{graphsage_forward.6} parent=35 // pred_region
          %s289 = sand.u32 %s42, 1
          %s290 = scalar_lea.sflag [#allocation4], %s289
          %s291 = sand.u32 %s42, 1
          %s292 = smul.addr %s291, 128
          %s293 = scalar_lea.vmem [#allocation3], %s292
          %s294 = smul.u32 32, %s26
          %296 = vsyncadd %s290, 0
          %s297 = smul.addr %s294, 2
          %s298 = sadd.s32 %s25, %s297
          %s299 = smul.addr %s298, 4
          %s300 = scalar_lea.hbm %s0, %s299
          %s301 = sshll.u32 %s300, 4
          %s302 = int_to_ptr.hbm [resolvable:$true] %s301
          %s303 = sshll.u32 %s293, 4
          %s304 = int_to_ptr.vmem [resolvable:$true] %s303
          %309 = dma.hbm_to_vmem [thread:$0]  %s302, 2048, %s304, %s290, 128, 64, 4
        $region40: #{graphsage_forward.6} parent=35 // pred_fallthru
          _
        // Predicated region
        $region41: #{graphsage_forward.6} parent=35 // pred_check
          %p310 = pneg %p99
        $region42: #{graphsage_forward.6} parent=35 // pred_check_branch
          %312 = sbr.rel (%p310) target = $region44
        $region43: #{graphsage_forward.6} parent=35 // pred_region
          %s313 = smul.u32 16, %s25
          %p314 = scmp.lt.s32.totalorder %s313, 31
          %s315 = scalar_select %p314, %s313, 31
          %s316 = smul.addr %s315, 8
          %s317 = scalar_lea.vmem %s2, %s316
          %s318 = smul.u32 16, %s25
        $region44: #{graphsage_forward.6} parent=35 // pred_fallthru
          _
        // Predicated region
        $region45: #{graphsage_forward.6} parent=35 // pred_check
          %p319 = pneg %p125
        $region46: #{graphsage_forward.6} parent=35 // pred_check_branch
          %321 = sbr.rel (%p319) target = $region48
        $region47: #{graphsage_forward.6} parent=35 // pred_region
          %s322 = smul.u32 16, %s25
          %p323 = scmp.lt.s32.totalorder %s322, 31
          %s324 = scalar_select %p323, %s322, 31
          %s325 = smul.addr %s324, 8
          %s326 = scalar_lea.vmem %s3, %s325
          %s327 = smul.u32 16, %s25
        $region48: #{graphsage_forward.6} parent=35 // pred_fallthru
          _
      $region36: #{graphsage_forward.6} parent=5 // pred_fallthru
        _
      %p328 = scmp.le.s32.totalorder 1, %s18
      %p329 = scmp.lt.s32.totalorder %s18, 3
      %p330 = pnand %p328, %p329
      %p331 = pneg %p330
      // Predicated region
      $region49: #{graphsage_forward.6} parent=5 // pred_check
        _
      $region50: #{graphsage_forward.6} parent=5 // pred_check_branch
        %333 = sbr.rel (%p330) target = $region52
      $region51: #{graphsage_forward.6} parent=5 // pred_region
        %s334 = ssub.s32 %s18, 1
        %s335 = sand.u32 %s45, 1
        %s336 = scalar_lea.sflag [#allocation4], %s335
        %s337 = sand.u32 %s45, 1
        %s338 = smul.addr %s337, 128
        %s339 = scalar_lea.vmem [#allocation3], %s338
        // Predicated region
        $region53: #{graphsage_forward.6} parent=51 // pred_check
          %p340 = pneg %p58
        $region54: #{graphsage_forward.6} parent=51 // pred_check_branch
          %342 = sbr.rel (%p340) target = $region56
        $region55: #{graphsage_forward.6} parent=51 // pred_region
          %344 = dma.done %s336, 2048
        $region56: #{graphsage_forward.6} parent=51 // pred_fallthru
          _
        // Predicated region
        $region57: #{graphsage_forward.6} parent=51 // pred_check
          %p345 = pneg %p152
        $region58: #{graphsage_forward.6} parent=51 // pred_check_branch
          %347 = sbr.rel (%p345) target = $region60
        $region59: #{graphsage_forward.6} parent=51 // pred_region
          %349 = dma.done [#allocation6], 4096
        $region60: #{graphsage_forward.6} parent=51 // pred_fallthru
          _
        %s350 = sand.u32 %s45, 1
        %s351 = scalar_lea.sflag [#allocation4], %s350
        %s352 = sand.u32 %s45, 1
        %s353 = smul.addr %s352, 128
        %s354 = scalar_lea.vmem [#allocation3], %s353
        %p355 = pneg %p58
        %p356 = pneg %p55
        %p357 = pneg %p79
        %p358 = pneg %p76
        %s359 = smul.u32 16, %s27
        %p360 = scmp.lt.s32.totalorder %s359, 31
        %s361 = scalar_select %p360, %s359, 31
        %s362 = smul.addr %s361, 8
        %s363 = scalar_lea.vmem %s2, %s362
        %p364 = pneg %p105
        %p365 = pneg %p102
        %s366 = smul.u32 16, %s27
        %p367 = scmp.lt.s32.totalorder %s366, 31
        %s368 = scalar_select %p367, %s366, 31
        %s369 = smul.addr %s368, 8
        %s370 = scalar_lea.vmem %s3, %s369
        %p371 = pneg %p131
        %p372 = pneg %p128
        %p373 = pneg %p152
        %p374 = pneg %p149
        %p375 = pneg %p173
        %p376 = pneg %p170
        %p377 = pneg %p194
        %p378 = pneg %p191
        %p379 = pneg %p215
        %p380 = pneg %p212
        %p381 = pneg %p241
        %p382 = pneg %p238
        %s383 = smul.u32 16, %s27
        %p384 = scmp.lt.s32.totalorder %s383, 31
        %s385 = scalar_select %p384, %s383, 31
        %s386 = smul.addr %s385, 8
        %s387 = scalar_lea.vmem %s8, %s386
        %s388 = smul.u32 32, %s28
        %s389 = smul.u32 16, %s27
        %p390 = scmp.lt.s32.totalorder %s389, 31
        %s391 = scalar_select %p390, %s389, 31
        %s392 = smul.addr %s391, 8
        %s393 = scalar_lea.vmem %s2, %s392
        %s394 = smul.u32 16, %s27
        %s395 = smul.u32 16, %s27
        %p396 = scmp.lt.s32.totalorder %s395, 31
        %s397 = scalar_select %p396, %s395, 31
        %s398 = smul.addr %s397, 8
        %s399 = scalar_lea.vmem %s3, %s398
        %s400 = smul.u32 16, %s27
        %s401 = smul.u32 16, %s27
        %p402 = scmp.lt.s32.totalorder %s401, 31
        %s403 = scalar_select %p402, %s401, 31
        %s404 = smul.addr %s403, 8
        %s405 = scalar_lea.vmem %s8, %s404
        %s406 = smul.u32 16, %s27
        %p407 = scmp.eq.s32.totalorder %s28, 0
        // Predicated region
        $region61: #{graphsage_forward.6} parent=51 // pred_check
          %p408 = pneg %p407
        $region62: #{graphsage_forward.6} parent=51 // pred_check_branch
          %410 = sbr.rel (%p408) target = $region64
        $region63: #{graphsage_forward.6} parent=51 // pred_region
          %411 = vst [vmem:[#allocation2] sm:$0xff] -1e+30
          %412 = vst [vmem:[#allocation2 + $0x8] sm:$0xff] -1e+30
          %413 = vst [vmem:[#allocation2 + $0x10] sm:$0xff] -1e+30
          %414 = vst [vmem:[#allocation2 + $0x18] sm:$0xff] -1e+30
          %415 = vst [vmem:[#allocation2 + $0x20] sm:$0xff] -1e+30
          %416 = vst [vmem:[#allocation2 + $0x28] sm:$0xff] -1e+30
          %417 = vst [vmem:[#allocation2 + $0x30] sm:$0xff] -1e+30
          %418 = vst [vmem:[#allocation2 + $0x38] sm:$0xff] -1e+30
          %419 = vst [vmem:[#allocation2 + $0x40] sm:$0xff] -1e+30
          %420 = vst [vmem:[#allocation2 + $0x48] sm:$0xff] -1e+30
          %421 = vst [vmem:[#allocation2 + $0x50] sm:$0xff] -1e+30
          %422 = vst [vmem:[#allocation2 + $0x58] sm:$0xff] -1e+30
          %423 = vst [vmem:[#allocation2 + $0x60] sm:$0xff] -1e+30
          %424 = vst [vmem:[#allocation2 + $0x68] sm:$0xff] -1e+30
          %425 = vst [vmem:[#allocation2 + $0x70] sm:$0xff] -1e+30
          %426 = vst [vmem:[#allocation2 + $0x78] sm:$0xff] -1e+30
        $region64: #{graphsage_forward.6} parent=51 // pred_fallthru
          _
        %s427 = smul.u32 %s28, 256
        %v428 = vld [vmem:[#allocation2] sm:$0xff]
        %v429 = vld [vmem:[#allocation2 + $0x8] sm:$0xff]
        %v430 = vld [vmem:[#allocation2 + $0x10] sm:$0xff]
        %v431 = vld [vmem:[#allocation2 + $0x18] sm:$0xff]
        %v432 = vld [vmem:[#allocation2 + $0x20] sm:$0xff]
        %v433 = vld [vmem:[#allocation2 + $0x28] sm:$0xff]
        %v434 = vld [vmem:[#allocation2 + $0x30] sm:$0xff]
        %v435 = vld [vmem:[#allocation2 + $0x38] sm:$0xff]
        %v436 = vld [vmem:[#allocation2 + $0x40] sm:$0xff]
        %v437 = vld [vmem:[#allocation2 + $0x48] sm:$0xff]
        %v438 = vld [vmem:[#allocation2 + $0x50] sm:$0xff]
        %v439 = vld [vmem:[#allocation2 + $0x58] sm:$0xff]
        %v440 = vld [vmem:[#allocation2 + $0x60] sm:$0xff]
        %v441 = vld [vmem:[#allocation2 + $0x68] sm:$0xff]
        %v442 = vld [vmem:[#allocation2 + $0x70] sm:$0xff]
        %v443 = vld [vmem:[#allocation2 + $0x78] sm:$0xff]
        loop: start=0, step=1, limit=32
        $region65: #{graphsage_forward.6} parent=51 // loop_pre_header
          _
        $region66: #{graphsage_forward.6} parent=51 // loop_header
          %s445 = sphi 0, %s449
          %p446 = scmp.ge.s32.totalorder %s445, 32
          %v450 = vphi %v428, %v1527
          %v451 = vphi %v429, %v1528
          %v452 = vphi %v430, %v1529
          %v453 = vphi %v431, %v1530
          %v454 = vphi %v432, %v1531
          %v455 = vphi %v433, %v1532
          %v456 = vphi %v434, %v1533
          %v457 = vphi %v435, %v1534
          %v458 = vphi %v436, %v1535
          %v459 = vphi %v437, %v1536
          %v460 = vphi %v438, %v1537
          %v461 = vphi %v439, %v1538
          %v462 = vphi %v440, %v1539
          %v463 = vphi %v441, %v1540
          %v464 = vphi %v442, %v1541
          %v465 = vphi %v443, %v1542
        $region67: #{graphsage_forward.6} parent=51 // loop_header_branch
          %448 = sbr.rel (%p446) target = $region71
        $region68: #{graphsage_forward.6} parent=51 // loop_body
          %s466 = smul.u32 %s445, 8
          %s467 = sadd.s32 %s427, %s466
          %s468 = sshra.s32 %s466, 3
          %s469 = sand.u32 %s466, 7
          %s470 = smul.addr %s468, 4
          %s471 = scalar_lea.vmem %s339, %s470 [#allocation3]
          %v472 = vld [vmem:[%s471] sm:$0xf]
          %s473 = scalar_lea.vmem %s1, %s467
          %v474 = vld [vmem:[%s473] sm:$0xff]
          %v475 = vunpack.c.l.bf16 %v472
          %vm476 = vcmp.gt.f32.partialorder %v475, 0.0
          %v477 = vsel %vm476, 0.0, -1e+30
          %v479 = vrot.slane %v474, 1
          %v480 = vperm.slane %v477, 0
          %v481 = vlaneseq
          %v482 = vshrl.u32 %v481, 7
          %484 = vset.pattern.permute.xlu0 %v482
          %485 = vperm.xlu0 %484, %v480
          %v486 = vpop.permute.xlu0 %485
          %v487 = vlaneseq
          %v488 = vshrl.u32 %v487, 7
          %v489 = vadd.s32 %v488, 8
          %490 = vset.pattern.permute.xlu0 %v489
          %491 = vperm.xlu0 %490, %v480
          %v492 = vpop.permute.xlu0 %491
          %v493 = vlaneseq
          %v494 = vshrl.u32 %v493, 7
          %v495 = vadd.s32 %v494, 16
          %496 = vset.pattern.permute.xlu0 %v495
          %497 = vperm.xlu0 %496, %v480
          %v498 = vpop.permute.xlu0 %497
          %v499 = vlaneseq
          %v500 = vshrl.u32 %v499, 7
          %v501 = vadd.s32 %v500, 24
          %502 = vset.pattern.permute.xlu0 %v501
          %503 = vperm.xlu0 %502, %v480
          %v504 = vpop.permute.xlu0 %503
          %v505 = vlaneseq
          %v506 = vshrl.u32 %v505, 7
          %v507 = vadd.s32 %v506, 32
          %508 = vset.pattern.permute.xlu0 %v507
          %509 = vperm.xlu0 %508, %v480
          %v510 = vpop.permute.xlu0 %509
          %v511 = vlaneseq
          %v512 = vshrl.u32 %v511, 7
          %v513 = vadd.s32 %v512, 40
          %514 = vset.pattern.permute.xlu0 %v513
          %515 = vperm.xlu0 %514, %v480
          %v516 = vpop.permute.xlu0 %515
          %v517 = vlaneseq
          %v518 = vshrl.u32 %v517, 7
          %v519 = vadd.s32 %v518, 48
          %520 = vset.pattern.permute.xlu0 %v519
          %521 = vperm.xlu0 %520, %v480
          %v522 = vpop.permute.xlu0 %521
          %v523 = vlaneseq
          %v524 = vshrl.u32 %v523, 7
          %v525 = vadd.s32 %v524, 56
          %526 = vset.pattern.permute.xlu0 %v525
          %527 = vperm.xlu0 %526, %v480
          %v528 = vpop.permute.xlu0 %527
          %v529 = vlaneseq
          %v530 = vshrl.u32 %v529, 7
          %v531 = vadd.s32 %v530, 64
          %532 = vset.pattern.permute.xlu0 %v531
          %533 = vperm.xlu0 %532, %v480
          %v534 = vpop.permute.xlu0 %533
          %v535 = vlaneseq
          %v536 = vshrl.u32 %v535, 7
          %v537 = vadd.s32 %v536, 72
          %538 = vset.pattern.permute.xlu0 %v537
          %539 = vperm.xlu0 %538, %v480
          %v540 = vpop.permute.xlu0 %539
          %v541 = vlaneseq
          %v542 = vshrl.u32 %v541, 7
          %v543 = vadd.s32 %v542, 80
          %544 = vset.pattern.permute.xlu0 %v543
          %545 = vperm.xlu0 %544, %v480
          %v546 = vpop.permute.xlu0 %545
          %v547 = vlaneseq
          %v548 = vshrl.u32 %v547, 7
          %v549 = vadd.s32 %v548, 88
          %550 = vset.pattern.permute.xlu0 %v549
          %551 = vperm.xlu0 %550, %v480
          %v552 = vpop.permute.xlu0 %551
          %v553 = vlaneseq
          %v554 = vshrl.u32 %v553, 7
          %v555 = vadd.s32 %v554, 96
          %556 = vset.pattern.permute.xlu0 %v555
          %557 = vperm.xlu0 %556, %v480
          %v558 = vpop.permute.xlu0 %557
          %v559 = vlaneseq
          %v560 = vshrl.u32 %v559, 7
          %v561 = vadd.s32 %v560, 104
          %562 = vset.pattern.permute.xlu0 %v561
          %563 = vperm.xlu0 %562, %v480
          %v564 = vpop.permute.xlu0 %563
          %v565 = vlaneseq
          %v566 = vshrl.u32 %v565, 7
          %v567 = vadd.s32 %v566, 112
          %568 = vset.pattern.permute.xlu0 %v567
          %569 = vperm.xlu0 %568, %v480
          %v570 = vpop.permute.xlu0 %569
          %v571 = vlaneseq
          %v572 = vshrl.u32 %v571, 7
          %v573 = vadd.s32 %v572, 120
          %574 = vset.pattern.permute.xlu0 %v573
          %575 = vperm.xlu0 %574, %v480
          %v576 = vpop.permute.xlu0 %575
          %v577 = vperm.slane %v477, 1
          %v578 = vlaneseq
          %v579 = vshrl.u32 %v578, 7
          %581 = vset.pattern.permute.xlu0 %v579
          %582 = vperm.xlu0 %581, %v577
          %v583 = vpop.permute.xlu0 %582
          %v584 = vlaneseq
          %v585 = vshrl.u32 %v584, 7
          %v586 = vadd.s32 %v585, 8
          %587 = vset.pattern.permute.xlu0 %v586
          %588 = vperm.xlu0 %587, %v577
          %v589 = vpop.permute.xlu0 %588
          %v590 = vlaneseq
          %v591 = vshrl.u32 %v590, 7
          %v592 = vadd.s32 %v591, 16
          %593 = vset.pattern.permute.xlu0 %v592
          %594 = vperm.xlu0 %593, %v577
          %v595 = vpop.permute.xlu0 %594
          %v596 = vlaneseq
          %v597 = vshrl.u32 %v596, 7
          %v598 = vadd.s32 %v597, 24
          %599 = vset.pattern.permute.xlu0 %v598
          %600 = vperm.xlu0 %599, %v577
          %v601 = vpop.permute.xlu0 %600
          %v602 = vlaneseq
          %v603 = vshrl.u32 %v602, 7
          %v604 = vadd.s32 %v603, 32
          %605 = vset.pattern.permute.xlu0 %v604
          %606 = vperm.xlu0 %605, %v577
          %v607 = vpop.permute.xlu0 %606
          %v608 = vlaneseq
          %v609 = vshrl.u32 %v608, 7
          %v610 = vadd.s32 %v609, 40
          %611 = vset.pattern.permute.xlu0 %v610
          %612 = vperm.xlu0 %611, %v577
          %v613 = vpop.permute.xlu0 %612
          %v614 = vlaneseq
          %v615 = vshrl.u32 %v614, 7
          %v616 = vadd.s32 %v615, 48
          %617 = vset.pattern.permute.xlu0 %v616
          %618 = vperm.xlu0 %617, %v577
          %v619 = vpop.permute.xlu0 %618
          %v620 = vlaneseq
          %v621 = vshrl.u32 %v620, 7
          %v622 = vadd.s32 %v621, 56
          %623 = vset.pattern.permute.xlu0 %v622
          %624 = vperm.xlu0 %623, %v577
          %v625 = vpop.permute.xlu0 %624
          %v626 = vlaneseq
          %v627 = vshrl.u32 %v626, 7
          %v628 = vadd.s32 %v627, 64
          %629 = vset.pattern.permute.xlu0 %v628
          %630 = vperm.xlu0 %629, %v577
          %v631 = vpop.permute.xlu0 %630
          %v632 = vlaneseq
          %v633 = vshrl.u32 %v632, 7
          %v634 = vadd.s32 %v633, 72
          %635 = vset.pattern.permute.xlu0 %v634
          %636 = vperm.xlu0 %635, %v577
          %v637 = vpop.permute.xlu0 %636
          %v638 = vlaneseq
          %v639 = vshrl.u32 %v638, 7
          %v640 = vadd.s32 %v639, 80
          %641 = vset.pattern.permute.xlu0 %v640
          %642 = vperm.xlu0 %641, %v577
          %v643 = vpop.permute.xlu0 %642
          %v644 = vlaneseq
          %v645 = vshrl.u32 %v644, 7
          %v646 = vadd.s32 %v645, 88
          %647 = vset.pattern.permute.xlu0 %v646
          %648 = vperm.xlu0 %647, %v577
          %v649 = vpop.permute.xlu0 %648
          %v650 = vlaneseq
          %v651 = vshrl.u32 %v650, 7
          %v652 = vadd.s32 %v651, 96
          %653 = vset.pattern.permute.xlu0 %v652
          %654 = vperm.xlu0 %653, %v577
          %v655 = vpop.permute.xlu0 %654
          %v656 = vlaneseq
          %v657 = vshrl.u32 %v656, 7
          %v658 = vadd.s32 %v657, 104
          %659 = vset.pattern.permute.xlu0 %v658
          %660 = vperm.xlu0 %659, %v577
          %v661 = vpop.permute.xlu0 %660
          %v662 = vlaneseq
          %v663 = vshrl.u32 %v662, 7
          %v664 = vadd.s32 %v663, 112
          %665 = vset.pattern.permute.xlu0 %v664
          %666 = vperm.xlu0 %665, %v577
          %v667 = vpop.permute.xlu0 %666
          %v668 = vlaneseq
          %v669 = vshrl.u32 %v668, 7
          %v670 = vadd.s32 %v669, 120
          %671 = vset.pattern.permute.xlu0 %v670
          %672 = vperm.xlu0 %671, %v577
          %v673 = vpop.permute.xlu0 %672
          %v674 = vperm.slane %v474, 0
          %v675 = vperm.slane %v479, 0
          %v678 = vadd.f32 %v674, %v486
          %v679 = vadd.f32 %v674, %v492
          %v680 = vadd.f32 %v674, %v498
          %v681 = vadd.f32 %v674, %v504
          %v682 = vadd.f32 %v674, %v510
          %v683 = vadd.f32 %v674, %v516
          %v684 = vadd.f32 %v674, %v522
          %v685 = vadd.f32 %v674, %v528
          %v686 = vadd.f32 %v674, %v534
          %v687 = vadd.f32 %v674, %v540
          %v688 = vadd.f32 %v674, %v546
          %v689 = vadd.f32 %v674, %v552
          %v690 = vadd.f32 %v674, %v558
          %v691 = vadd.f32 %v674, %v564
          %v692 = vadd.f32 %v674, %v570
          %v693 = vadd.f32 %v674, %v576
          %v694 = vadd.f32 %v675, %v583
          %v695 = vadd.f32 %v675, %v589
          %v696 = vadd.f32 %v675, %v595
          %v697 = vadd.f32 %v675, %v601
          %v698 = vadd.f32 %v675, %v607
          %v699 = vadd.f32 %v675, %v613
          %v700 = vadd.f32 %v675, %v619
          %v701 = vadd.f32 %v675, %v625
          %v702 = vadd.f32 %v675, %v631
          %v703 = vadd.f32 %v675, %v637
          %v704 = vadd.f32 %v675, %v643
          %v705 = vadd.f32 %v675, %v649
          %v706 = vadd.f32 %v675, %v655
          %v707 = vadd.f32 %v675, %v661
          %v708 = vadd.f32 %v675, %v667
          %v709 = vadd.f32 %v675, %v673
          %v710 = vmax.f32 %v678, %v694
          %v711 = vmax.f32 %v679, %v695
          %v712 = vmax.f32 %v680, %v696
          %v713 = vmax.f32 %v681, %v697
          %v714 = vmax.f32 %v682, %v698
          %v715 = vmax.f32 %v683, %v699
          %v716 = vmax.f32 %v684, %v700
          %v717 = vmax.f32 %v685, %v701
          %v718 = vmax.f32 %v686, %v702
          %v719 = vmax.f32 %v687, %v703
          %v720 = vmax.f32 %v688, %v704
          %v721 = vmax.f32 %v689, %v705
          %v722 = vmax.f32 %v690, %v706
          %v723 = vmax.f32 %v691, %v707
          %v724 = vmax.f32 %v692, %v708
          %v725 = vmax.f32 %v693, %v709
          %v726 = vmax.f32 %v450, %v710
          %v727 = vmax.f32 %v451, %v711
          %v728 = vmax.f32 %v452, %v712
          %v729 = vmax.f32 %v453, %v713
          %v730 = vmax.f32 %v454, %v714
          %v731 = vmax.f32 %v455, %v715
          %v732 = vmax.f32 %v456, %v716
          %v733 = vmax.f32 %v457, %v717
          %v734 = vmax.f32 %v458, %v718
          %v735 = vmax.f32 %v459, %v719
          %v736 = vmax.f32 %v460, %v720
          %v737 = vmax.f32 %v461, %v721
          %v738 = vmax.f32 %v462, %v722
          %v739 = vmax.f32 %v463, %v723
          %v740 = vmax.f32 %v464, %v724
          %v741 = vmax.f32 %v465, %v725
          %742 = vst [vmem:[#allocation1] sm:$0xff] %v474
          %s743 = scalar_lea.vmem [#allocation1], 2
          %v744 = vld [vmem:[%s743] ss:$9 sm:$0xff]
          %s745 = scalar_lea.vmem [#allocation1], 3
          %v746 = vld [vmem:[%s745] ss:$9 sm:$0xff]
          %v747 = vperm.slane %v477, 2
          %v748 = vlaneseq
          %v749 = vshrl.u32 %v748, 7
          %751 = vset.pattern.permute.xlu0 %v749
          %752 = vperm.xlu0 %751, %v747
          %v753 = vpop.permute.xlu0 %752
          %v754 = vlaneseq
          %v755 = vshrl.u32 %v754, 7
          %v756 = vadd.s32 %v755, 8
          %757 = vset.pattern.permute.xlu0 %v756
          %758 = vperm.xlu0 %757, %v747
          %v759 = vpop.permute.xlu0 %758
          %v760 = vlaneseq
          %v761 = vshrl.u32 %v760, 7
          %v762 = vadd.s32 %v761, 16
          %763 = vset.pattern.permute.xlu0 %v762
          %764 = vperm.xlu0 %763, %v747
          %v765 = vpop.permute.xlu0 %764
          %v766 = vlaneseq
          %v767 = vshrl.u32 %v766, 7
          %v768 = vadd.s32 %v767, 24
          %769 = vset.pattern.permute.xlu0 %v768
          %770 = vperm.xlu0 %769, %v747
          %v771 = vpop.permute.xlu0 %770
          %v772 = vlaneseq
          %v773 = vshrl.u32 %v772, 7
          %v774 = vadd.s32 %v773, 32
          %775 = vset.pattern.permute.xlu0 %v774
          %776 = vperm.xlu0 %775, %v747
          %v777 = vpop.permute.xlu0 %776
          %v778 = vlaneseq
          %v779 = vshrl.u32 %v778, 7
          %v780 = vadd.s32 %v779, 40
          %781 = vset.pattern.permute.xlu0 %v780
          %782 = vperm.xlu0 %781, %v747
          %v783 = vpop.permute.xlu0 %782
          %v784 = vlaneseq
          %v785 = vshrl.u32 %v784, 7
          %v786 = vadd.s32 %v785, 48
          %787 = vset.pattern.permute.xlu0 %v786
          %788 = vperm.xlu0 %787, %v747
          %v789 = vpop.permute.xlu0 %788
          %v790 = vlaneseq
          %v791 = vshrl.u32 %v790, 7
          %v792 = vadd.s32 %v791, 56
          %793 = vset.pattern.permute.xlu0 %v792
          %794 = vperm.xlu0 %793, %v747
          %v795 = vpop.permute.xlu0 %794
          %v796 = vlaneseq
          %v797 = vshrl.u32 %v796, 7
          %v798 = vadd.s32 %v797, 64
          %799 = vset.pattern.permute.xlu0 %v798
          %800 = vperm.xlu0 %799, %v747
          %v801 = vpop.permute.xlu0 %800
          %v802 = vlaneseq
          %v803 = vshrl.u32 %v802, 7
          %v804 = vadd.s32 %v803, 72
          %805 = vset.pattern.permute.xlu0 %v804
          %806 = vperm.xlu0 %805, %v747
          %v807 = vpop.permute.xlu0 %806
          %v808 = vlaneseq
          %v809 = vshrl.u32 %v808, 7
          %v810 = vadd.s32 %v809, 80
          %811 = vset.pattern.permute.xlu0 %v810
          %812 = vperm.xlu0 %811, %v747
          %v813 = vpop.permute.xlu0 %812
          %v814 = vlaneseq
          %v815 = vshrl.u32 %v814, 7
          %v816 = vadd.s32 %v815, 88
          %817 = vset.pattern.permute.xlu0 %v816
          %818 = vperm.xlu0 %817, %v747
          %v819 = vpop.permute.xlu0 %818
          %v820 = vlaneseq
          %v821 = vshrl.u32 %v820, 7
          %v822 = vadd.s32 %v821, 96
          %823 = vset.pattern.permute.xlu0 %v822
          %824 = vperm.xlu0 %823, %v747
          %v825 = vpop.permute.xlu0 %824
          %v826 = vlaneseq
          %v827 = vshrl.u32 %v826, 7
          %v828 = vadd.s32 %v827, 104
          %829 = vset.pattern.permute.xlu0 %v828
          %830 = vperm.xlu0 %829, %v747
          %v831 = vpop.permute.xlu0 %830
          %v832 = vlaneseq
          %v833 = vshrl.u32 %v832, 7
          %v834 = vadd.s32 %v833, 112
          %835 = vset.pattern.permute.xlu0 %v834
          %836 = vperm.xlu0 %835, %v747
          %v837 = vpop.permute.xlu0 %836
          %v838 = vlaneseq
          %v839 = vshrl.u32 %v838, 7
          %v840 = vadd.s32 %v839, 120
          %841 = vset.pattern.permute.xlu0 %v840
          %842 = vperm.xlu0 %841, %v747
          %v843 = vpop.permute.xlu0 %842
          %v844 = vperm.slane %v477, 3
          %v845 = vlaneseq
          %v846 = vshrl.u32 %v845, 7
          %848 = vset.pattern.permute.xlu0 %v846
          %849 = vperm.xlu0 %848, %v844
          %v850 = vpop.permute.xlu0 %849
          %v851 = vlaneseq
          %v852 = vshrl.u32 %v851, 7
          %v853 = vadd.s32 %v852, 8
          %854 = vset.pattern.permute.xlu0 %v853
          %855 = vperm.xlu0 %854, %v844
          %v856 = vpop.permute.xlu0 %855
          %v857 = vlaneseq
          %v858 = vshrl.u32 %v857, 7
          %v859 = vadd.s32 %v858, 16
          %860 = vset.pattern.permute.xlu0 %v859
          %861 = vperm.xlu0 %860, %v844
          %v862 = vpop.permute.xlu0 %861
          %v863 = vlaneseq
          %v864 = vshrl.u32 %v863, 7
          %v865 = vadd.s32 %v864, 24
          %866 = vset.pattern.permute.xlu0 %v865
          %867 = vperm.xlu0 %866, %v844
          %v868 = vpop.permute.xlu0 %867
          %v869 = vlaneseq
          %v870 = vshrl.u32 %v869, 7
          %v871 = vadd.s32 %v870, 32
          %872 = vset.pattern.permute.xlu0 %v871
          %873 = vperm.xlu0 %872, %v844
          %v874 = vpop.permute.xlu0 %873
          %v875 = vlaneseq
          %v876 = vshrl.u32 %v875, 7
          %v877 = vadd.s32 %v876, 40
          %878 = vset.pattern.permute.xlu0 %v877
          %879 = vperm.xlu0 %878, %v844
          %v880 = vpop.permute.xlu0 %879
          %v881 = vlaneseq
          %v882 = vshrl.u32 %v881, 7
          %v883 = vadd.s32 %v882, 48
          %884 = vset.pattern.permute.xlu0 %v883
          %885 = vperm.xlu0 %884, %v844
          %v886 = vpop.permute.xlu0 %885
          %v887 = vlaneseq
          %v888 = vshrl.u32 %v887, 7
          %v889 = vadd.s32 %v888, 56
          %890 = vset.pattern.permute.xlu0 %v889
          %891 = vperm.xlu0 %890, %v844
          %v892 = vpop.permute.xlu0 %891
          %v893 = vlaneseq
          %v894 = vshrl.u32 %v893, 7
          %v895 = vadd.s32 %v894, 64
          %896 = vset.pattern.permute.xlu0 %v895
          %897 = vperm.xlu0 %896, %v844
          %v898 = vpop.permute.xlu0 %897
          %v899 = vlaneseq
          %v900 = vshrl.u32 %v899, 7
          %v901 = vadd.s32 %v900, 72
          %902 = vset.pattern.permute.xlu0 %v901
          %903 = vperm.xlu0 %902, %v844
          %v904 = vpop.permute.xlu0 %903
          %v905 = vlaneseq
          %v906 = vshrl.u32 %v905, 7
          %v907 = vadd.s32 %v906, 80
          %908 = vset.pattern.permute.xlu0 %v907
          %909 = vperm.xlu0 %908, %v844
          %v910 = vpop.permute.xlu0 %909
          %v911 = vlaneseq
          %v912 = vshrl.u32 %v911, 7
          %v913 = vadd.s32 %v912, 88
          %914 = vset.pattern.permute.xlu0 %v913
          %915 = vperm.xlu0 %914, %v844
          %v916 = vpop.permute.xlu0 %915
          %v917 = vlaneseq
          %v918 = vshrl.u32 %v917, 7
          %v919 = vadd.s32 %v918, 96
          %920 = vset.pattern.permute.xlu0 %v919
          %921 = vperm.xlu0 %920, %v844
          %v922 = vpop.permute.xlu0 %921
          %v923 = vlaneseq
          %v924 = vshrl.u32 %v923, 7
          %v925 = vadd.s32 %v924, 104
          %926 = vset.pattern.permute.xlu0 %v925
          %927 = vperm.xlu0 %926, %v844
          %v928 = vpop.permute.xlu0 %927
          %v929 = vlaneseq
          %v930 = vshrl.u32 %v929, 7
          %v931 = vadd.s32 %v930, 112
          %932 = vset.pattern.permute.xlu0 %v931
          %933 = vperm.xlu0 %932, %v844
          %v934 = vpop.permute.xlu0 %933
          %v935 = vlaneseq
          %v936 = vshrl.u32 %v935, 7
          %v937 = vadd.s32 %v936, 120
          %938 = vset.pattern.permute.xlu0 %v937
          %939 = vperm.xlu0 %938, %v844
          %v940 = vpop.permute.xlu0 %939
          %v941 = vperm.slane %v744, 0
          %v942 = vperm.slane %v746, 0
          %v945 = vadd.f32 %v941, %v753
          %v946 = vadd.f32 %v941, %v759
          %v947 = vadd.f32 %v941, %v765
          %v948 = vadd.f32 %v941, %v771
          %v949 = vadd.f32 %v941, %v777
          %v950 = vadd.f32 %v941, %v783
          %v951 = vadd.f32 %v941, %v789
          %v952 = vadd.f32 %v941, %v795
          %v953 = vadd.f32 %v941, %v801
          %v954 = vadd.f32 %v941, %v807
          %v955 = vadd.f32 %v941, %v813
          %v956 = vadd.f32 %v941, %v819
          %v957 = vadd.f32 %v941, %v825
          %v958 = vadd.f32 %v941, %v831
          %v959 = vadd.f32 %v941, %v837
          %v960 = vadd.f32 %v941, %v843
          %v961 = vadd.f32 %v942, %v850
          %v962 = vadd.f32 %v942, %v856
          %v963 = vadd.f32 %v942, %v862
          %v964 = vadd.f32 %v942, %v868
          %v965 = vadd.f32 %v942, %v874
          %v966 = vadd.f32 %v942, %v880
          %v967 = vadd.f32 %v942, %v886
          %v968 = vadd.f32 %v942, %v892
          %v969 = vadd.f32 %v942, %v898
          %v970 = vadd.f32 %v942, %v904
          %v971 = vadd.f32 %v942, %v910
          %v972 = vadd.f32 %v942, %v916
          %v973 = vadd.f32 %v942, %v922
          %v974 = vadd.f32 %v942, %v928
          %v975 = vadd.f32 %v942, %v934
          %v976 = vadd.f32 %v942, %v940
          %v977 = vmax.f32 %v945, %v961
          %v978 = vmax.f32 %v946, %v962
          %v979 = vmax.f32 %v947, %v963
          %v980 = vmax.f32 %v948, %v964
          %v981 = vmax.f32 %v949, %v965
          %v982 = vmax.f32 %v950, %v966
          %v983 = vmax.f32 %v951, %v967
          %v984 = vmax.f32 %v952, %v968
          %v985 = vmax.f32 %v953, %v969
          %v986 = vmax.f32 %v954, %v970
          %v987 = vmax.f32 %v955, %v971
          %v988 = vmax.f32 %v956, %v972
          %v989 = vmax.f32 %v957, %v973
          %v990 = vmax.f32 %v958, %v974
          %v991 = vmax.f32 %v959, %v975
          %v992 = vmax.f32 %v960, %v976
          %v993 = vmax.f32 %v726, %v977
          %v994 = vmax.f32 %v727, %v978
          %v995 = vmax.f32 %v728, %v979
          %v996 = vmax.f32 %v729, %v980
          %v997 = vmax.f32 %v730, %v981
          %v998 = vmax.f32 %v731, %v982
          %v999 = vmax.f32 %v732, %v983
          %v1000 = vmax.f32 %v733, %v984
          %v1001 = vmax.f32 %v734, %v985
          %v1002 = vmax.f32 %v735, %v986
          %v1003 = vmax.f32 %v736, %v987
          %v1004 = vmax.f32 %v737, %v988
          %v1005 = vmax.f32 %v738, %v989
          %v1006 = vmax.f32 %v739, %v990
          %v1007 = vmax.f32 %v740, %v991
          %v1008 = vmax.f32 %v741, %v992
          %1009 = vst [vmem:[#allocation1] sm:$0xff] %v474
          %s1010 = scalar_lea.vmem [#allocation1], 4
          %v1011 = vld [vmem:[%s1010] ss:$9 sm:$0xff]
          %s1012 = scalar_lea.vmem [#allocation1], 5
          %v1013 = vld [vmem:[%s1012] ss:$9 sm:$0xff]
          %v1014 = vperm.slane %v477, 4
          %v1015 = vlaneseq
          %v1016 = vshrl.u32 %v1015, 7
          %1018 = vset.pattern.permute.xlu0 %v1016
          %1019 = vperm.xlu0 %1018, %v1014
          %v1020 = vpop.permute.xlu0 %1019
          %v1021 = vlaneseq
          %v1022 = vshrl.u32 %v1021, 7
          %v1023 = vadd.s32 %v1022, 8
          %1024 = vset.pattern.permute.xlu0 %v1023
          %1025 = vperm.xlu0 %1024, %v1014
          %v1026 = vpop.permute.xlu0 %1025
          %v1027 = vlaneseq
          %v1028 = vshrl.u32 %v1027, 7
          %v1029 = vadd.s32 %v1028, 16
          %1030 = vset.pattern.permute.xlu0 %v1029
          %1031 = vperm.xlu0 %1030, %v1014
          %v1032 = vpop.permute.xlu0 %1031
          %v1033 = vlaneseq
          %v1034 = vshrl.u32 %v1033, 7
          %v1035 = vadd.s32 %v1034, 24
          %1036 = vset.pattern.permute.xlu0 %v1035
          %1037 = vperm.xlu0 %1036, %v1014
          %v1038 = vpop.permute.xlu0 %1037
          %v1039 = vlaneseq
          %v1040 = vshrl.u32 %v1039, 7
          %v1041 = vadd.s32 %v1040, 32
          %1042 = vset.pattern.permute.xlu0 %v1041
          %1043 = vperm.xlu0 %1042, %v1014
          %v1044 = vpop.permute.xlu0 %1043
          %v1045 = vlaneseq
          %v1046 = vshrl.u32 %v1045, 7
          %v1047 = vadd.s32 %v1046, 40
          %1048 = vset.pattern.permute.xlu0 %v1047
          %1049 = vperm.xlu0 %1048, %v1014
          %v1050 = vpop.permute.xlu0 %1049
          %v1051 = vlaneseq
          %v1052 = vshrl.u32 %v1051, 7
          %v1053 = vadd.s32 %v1052, 48
          %1054 = vset.pattern.permute.xlu0 %v1053
          %1055 = vperm.xlu0 %1054, %v1014
          %v1056 = vpop.permute.xlu0 %1055
          %v1057 = vlaneseq
          %v1058 = vshrl.u32 %v1057, 7
          %v1059 = vadd.s32 %v1058, 56
          %1060 = vset.pattern.permute.xlu0 %v1059
          %1061 = vperm.xlu0 %1060, %v1014
          %v1062 = vpop.permute.xlu0 %1061
          %v1063 = vlaneseq
          %v1064 = vshrl.u32 %v1063, 7
          %v1065 = vadd.s32 %v1064, 64
          %1066 = vset.pattern.permute.xlu0 %v1065
          %1067 = vperm.xlu0 %1066, %v1014
          %v1068 = vpop.permute.xlu0 %1067
          %v1069 = vlaneseq
          %v1070 = vshrl.u32 %v1069, 7
          %v1071 = vadd.s32 %v1070, 72
          %1072 = vset.pattern.permute.xlu0 %v1071
          %1073 = vperm.xlu0 %1072, %v1014
          %v1074 = vpop.permute.xlu0 %1073
          %v1075 = vlaneseq
          %v1076 = vshrl.u32 %v1075, 7
          %v1077 = vadd.s32 %v1076, 80
          %1078 = vset.pattern.permute.xlu0 %v1077
          %1079 = vperm.xlu0 %1078, %v1014
          %v1080 = vpop.permute.xlu0 %1079
          %v1081 = vlaneseq
          %v1082 = vshrl.u32 %v1081, 7
          %v1083 = vadd.s32 %v1082, 88
          %1084 = vset.pattern.permute.xlu0 %v1083
          %1085 = vperm.xlu0 %1084, %v1014
          %v1086 = vpop.permute.xlu0 %1085
          %v1087 = vlaneseq
          %v1088 = vshrl.u32 %v1087, 7
          %v1089 = vadd.s32 %v1088, 96
          %1090 = vset.pattern.permute.xlu0 %v1089
          %1091 = vperm.xlu0 %1090, %v1014
          %v1092 = vpop.permute.xlu0 %1091
          %v1093 = vlaneseq
          %v1094 = vshrl.u32 %v1093, 7
          %v1095 = vadd.s32 %v1094, 104
          %1096 = vset.pattern.permute.xlu0 %v1095
          %1097 = vperm.xlu0 %1096, %v1014
          %v1098 = vpop.permute.xlu0 %1097
          %v1099 = vlaneseq
          %v1100 = vshrl.u32 %v1099, 7
          %v1101 = vadd.s32 %v1100, 112
          %1102 = vset.pattern.permute.xlu0 %v1101
          %1103 = vperm.xlu0 %1102, %v1014
          %v1104 = vpop.permute.xlu0 %1103
          %v1105 = vlaneseq
          %v1106 = vshrl.u32 %v1105, 7
          %v1107 = vadd.s32 %v1106, 120
          %1108 = vset.pattern.permute.xlu0 %v1107
          %1109 = vperm.xlu0 %1108, %v1014
          %v1110 = vpop.permute.xlu0 %1109
          %v1111 = vperm.slane %v477, 5
          %v1112 = vlaneseq
          %v1113 = vshrl.u32 %v1112, 7
          %1115 = vset.pattern.permute.xlu0 %v1113
          %1116 = vperm.xlu0 %1115, %v1111
          %v1117 = vpop.permute.xlu0 %1116
          %v1118 = vlaneseq
          %v1119 = vshrl.u32 %v1118, 7
          %v1120 = vadd.s32 %v1119, 8
          %1121 = vset.pattern.permute.xlu0 %v1120
          %1122 = vperm.xlu0 %1121, %v1111
          %v1123 = vpop.permute.xlu0 %1122
          %v1124 = vlaneseq
          %v1125 = vshrl.u32 %v1124, 7
          %v1126 = vadd.s32 %v1125, 16
          %1127 = vset.pattern.permute.xlu0 %v1126
          %1128 = vperm.xlu0 %1127, %v1111
          %v1129 = vpop.permute.xlu0 %1128
          %v1130 = vlaneseq
          %v1131 = vshrl.u32 %v1130, 7
          %v1132 = vadd.s32 %v1131, 24
          %1133 = vset.pattern.permute.xlu0 %v1132
          %1134 = vperm.xlu0 %1133, %v1111
          %v1135 = vpop.permute.xlu0 %1134
          %v1136 = vlaneseq
          %v1137 = vshrl.u32 %v1136, 7
          %v1138 = vadd.s32 %v1137, 32
          %1139 = vset.pattern.permute.xlu0 %v1138
          %1140 = vperm.xlu0 %1139, %v1111
          %v1141 = vpop.permute.xlu0 %1140
          %v1142 = vlaneseq
          %v1143 = vshrl.u32 %v1142, 7
          %v1144 = vadd.s32 %v1143, 40
          %1145 = vset.pattern.permute.xlu0 %v1144
          %1146 = vperm.xlu0 %1145, %v1111
          %v1147 = vpop.permute.xlu0 %1146
          %v1148 = vlaneseq
          %v1149 = vshrl.u32 %v1148, 7
          %v1150 = vadd.s32 %v1149, 48
          %1151 = vset.pattern.permute.xlu0 %v1150
          %1152 = vperm.xlu0 %1151, %v1111
          %v1153 = vpop.permute.xlu0 %1152
          %v1154 = vlaneseq
          %v1155 = vshrl.u32 %v1154, 7
          %v1156 = vadd.s32 %v1155, 56
          %1157 = vset.pattern.permute.xlu0 %v1156
          %1158 = vperm.xlu0 %1157, %v1111
          %v1159 = vpop.permute.xlu0 %1158
          %v1160 = vlaneseq
          %v1161 = vshrl.u32 %v1160, 7
          %v1162 = vadd.s32 %v1161, 64
          %1163 = vset.pattern.permute.xlu0 %v1162
          %1164 = vperm.xlu0 %1163, %v1111
          %v1165 = vpop.permute.xlu0 %1164
          %v1166 = vlaneseq
          %v1167 = vshrl.u32 %v1166, 7
          %v1168 = vadd.s32 %v1167, 72
          %1169 = vset.pattern.permute.xlu0 %v1168
          %1170 = vperm.xlu0 %1169, %v1111
          %v1171 = vpop.permute.xlu0 %1170
          %v1172 = vlaneseq
          %v1173 = vshrl.u32 %v1172, 7
          %v1174 = vadd.s32 %v1173, 80
          %1175 = vset.pattern.permute.xlu0 %v1174
          %1176 = vperm.xlu0 %1175, %v1111
          %v1177 = vpop.permute.xlu0 %1176
          %v1178 = vlaneseq
          %v1179 = vshrl.u32 %v1178, 7
          %v1180 = vadd.s32 %v1179, 88
          %1181 = vset.pattern.permute.xlu0 %v1180
          %1182 = vperm.xlu0 %1181, %v1111
          %v1183 = vpop.permute.xlu0 %1182
          %v1184 = vlaneseq
          %v1185 = vshrl.u32 %v1184, 7
          %v1186 = vadd.s32 %v1185, 96
          %1187 = vset.pattern.permute.xlu0 %v1186
          %1188 = vperm.xlu0 %1187, %v1111
          %v1189 = vpop.permute.xlu0 %1188
          %v1190 = vlaneseq
          %v1191 = vshrl.u32 %v1190, 7
          %v1192 = vadd.s32 %v1191, 104
          %1193 = vset.pattern.permute.xlu0 %v1192
          %1194 = vperm.xlu0 %1193, %v1111
          %v1195 = vpop.permute.xlu0 %1194
          %v1196 = vlaneseq
          %v1197 = vshrl.u32 %v1196, 7
          %v1198 = vadd.s32 %v1197, 112
          %1199 = vset.pattern.permute.xlu0 %v1198
          %1200 = vperm.xlu0 %1199, %v1111
          %v1201 = vpop.permute.xlu0 %1200
          %v1202 = vlaneseq
          %v1203 = vshrl.u32 %v1202, 7
          %v1204 = vadd.s32 %v1203, 120
          %1205 = vset.pattern.permute.xlu0 %v1204
          %1206 = vperm.xlu0 %1205, %v1111
          %v1207 = vpop.permute.xlu0 %1206
          %v1208 = vperm.slane %v1011, 0
          %v1209 = vperm.slane %v1013, 0
          %v1212 = vadd.f32 %v1208, %v1020
          %v1213 = vadd.f32 %v1208, %v1026
          %v1214 = vadd.f32 %v1208, %v1032
          %v1215 = vadd.f32 %v1208, %v1038
          %v1216 = vadd.f32 %v1208, %v1044
          %v1217 = vadd.f32 %v1208, %v1050
          %v1218 = vadd.f32 %v1208, %v1056
          %v1219 = vadd.f32 %v1208, %v1062
          %v1220 = vadd.f32 %v1208, %v1068
          %v1221 = vadd.f32 %v1208, %v1074
          %v1222 = vadd.f32 %v1208, %v1080
          %v1223 = vadd.f32 %v1208, %v1086
          %v1224 = vadd.f32 %v1208, %v1092
          %v1225 = vadd.f32 %v1208, %v1098
          %v1226 = vadd.f32 %v1208, %v1104
          %v1227 = vadd.f32 %v1208, %v1110
          %v1228 = vadd.f32 %v1209, %v1117
          %v1229 = vadd.f32 %v1209, %v1123
          %v1230 = vadd.f32 %v1209, %v1129
          %v1231 = vadd.f32 %v1209, %v1135
          %v1232 = vadd.f32 %v1209, %v1141
          %v1233 = vadd.f32 %v1209, %v1147
          %v1234 = vadd.f32 %v1209, %v1153
          %v1235 = vadd.f32 %v1209, %v1159
          %v1236 = vadd.f32 %v1209, %v1165
          %v1237 = vadd.f32 %v1209, %v1171
          %v1238 = vadd.f32 %v1209, %v1177
          %v1239 = vadd.f32 %v1209, %v1183
          %v1240 = vadd.f32 %v1209, %v1189
          %v1241 = vadd.f32 %v1209, %v1195
          %v1242 = vadd.f32 %v1209, %v1201
          %v1243 = vadd.f32 %v1209, %v1207
          %v1244 = vmax.f32 %v1212, %v1228
          %v1245 = vmax.f32 %v1213, %v1229
          %v1246 = vmax.f32 %v1214, %v1230
          %v1247 = vmax.f32 %v1215, %v1231
          %v1248 = vmax.f32 %v1216, %v1232
          %v1249 = vmax.f32 %v1217, %v1233
          %v1250 = vmax.f32 %v1218, %v1234
          %v1251 = vmax.f32 %v1219, %v1235
          %v1252 = vmax.f32 %v1220, %v1236
          %v1253 = vmax.f32 %v1221, %v1237
          %v1254 = vmax.f32 %v1222, %v1238
          %v1255 = vmax.f32 %v1223, %v1239
          %v1256 = vmax.f32 %v1224, %v1240
          %v1257 = vmax.f32 %v1225, %v1241
          %v1258 = vmax.f32 %v1226, %v1242
          %v1259 = vmax.f32 %v1227, %v1243
          %v1260 = vmax.f32 %v993, %v1244
          %v1261 = vmax.f32 %v994, %v1245
          %v1262 = vmax.f32 %v995, %v1246
          %v1263 = vmax.f32 %v996, %v1247
          %v1264 = vmax.f32 %v997, %v1248
          %v1265 = vmax.f32 %v998, %v1249
          %v1266 = vmax.f32 %v999, %v1250
          %v1267 = vmax.f32 %v1000, %v1251
          %v1268 = vmax.f32 %v1001, %v1252
          %v1269 = vmax.f32 %v1002, %v1253
          %v1270 = vmax.f32 %v1003, %v1254
          %v1271 = vmax.f32 %v1004, %v1255
          %v1272 = vmax.f32 %v1005, %v1256
          %v1273 = vmax.f32 %v1006, %v1257
          %v1274 = vmax.f32 %v1007, %v1258
          %v1275 = vmax.f32 %v1008, %v1259
          %1276 = vst [vmem:[#allocation1] sm:$0xff] %v474
          %s1277 = scalar_lea.vmem [#allocation1], 6
          %v1278 = vld [vmem:[%s1277] ss:$9 sm:$0xff]
          %s1279 = scalar_lea.vmem [#allocation1], 7
          %v1280 = vld [vmem:[%s1279] ss:$9 sm:$0xff]
          %v1281 = vperm.slane %v477, 6
          %v1282 = vlaneseq
          %v1283 = vshrl.u32 %v1282, 7
          %1285 = vset.pattern.permute.xlu0 %v1283
          %1286 = vperm.xlu0 %1285, %v1281
          %v1287 = vpop.permute.xlu0 %1286
          %v1288 = vlaneseq
          %v1289 = vshrl.u32 %v1288, 7
          %v1290 = vadd.s32 %v1289, 8
          %1291 = vset.pattern.permute.xlu0 %v1290
          %1292 = vperm.xlu0 %1291, %v1281
          %v1293 = vpop.permute.xlu0 %1292
          %v1294 = vlaneseq
          %v1295 = vshrl.u32 %v1294, 7
          %v1296 = vadd.s32 %v1295, 16
          %1297 = vset.pattern.permute.xlu0 %v1296
          %1298 = vperm.xlu0 %1297, %v1281
          %v1299 = vpop.permute.xlu0 %1298
          %v1300 = vlaneseq
          %v1301 = vshrl.u32 %v1300, 7
          %v1302 = vadd.s32 %v1301, 24
          %1303 = vset.pattern.permute.xlu0 %v1302
          %1304 = vperm.xlu0 %1303, %v1281
          %v1305 = vpop.permute.xlu0 %1304
          %v1306 = vlaneseq
          %v1307 = vshrl.u32 %v1306, 7
          %v1308 = vadd.s32 %v1307, 32
          %1309 = vset.pattern.permute.xlu0 %v1308
          %1310 = vperm.xlu0 %1309, %v1281
          %v1311 = vpop.permute.xlu0 %1310
          %v1312 = vlaneseq
          %v1313 = vshrl.u32 %v1312, 7
          %v1314 = vadd.s32 %v1313, 40
          %1315 = vset.pattern.permute.xlu0 %v1314
          %1316 = vperm.xlu0 %1315, %v1281
          %v1317 = vpop.permute.xlu0 %1316
          %v1318 = vlaneseq
          %v1319 = vshrl.u32 %v1318, 7
          %v1320 = vadd.s32 %v1319, 48
          %1321 = vset.pattern.permute.xlu0 %v1320
          %1322 = vperm.xlu0 %1321, %v1281
          %v1323 = vpop.permute.xlu0 %1322
          %v1324 = vlaneseq
          %v1325 = vshrl.u32 %v1324, 7
          %v1326 = vadd.s32 %v1325, 56
          %1327 = vset.pattern.permute.xlu0 %v1326
          %1328 = vperm.xlu0 %1327, %v1281
          %v1329 = vpop.permute.xlu0 %1328
          %v1330 = vlaneseq
          %v1331 = vshrl.u32 %v1330, 7
          %v1332 = vadd.s32 %v1331, 64
          %1333 = vset.pattern.permute.xlu0 %v1332
          %1334 = vperm.xlu0 %1333, %v1281
          %v1335 = vpop.permute.xlu0 %1334
          %v1336 = vlaneseq
          %v1337 = vshrl.u32 %v1336, 7
          %v1338 = vadd.s32 %v1337, 72
          %1339 = vset.pattern.permute.xlu0 %v1338
          %1340 = vperm.xlu0 %1339, %v1281
          %v1341 = vpop.permute.xlu0 %1340
          %v1342 = vlaneseq
          %v1343 = vshrl.u32 %v1342, 7
          %v1344 = vadd.s32 %v1343, 80
          %1345 = vset.pattern.permute.xlu0 %v1344
          %1346 = vperm.xlu0 %1345, %v1281
          %v1347 = vpop.permute.xlu0 %1346
          %v1348 = vlaneseq
          %v1349 = vshrl.u32 %v1348, 7
          %v1350 = vadd.s32 %v1349, 88
          %1351 = vset.pattern.permute.xlu0 %v1350
          %1352 = vperm.xlu0 %1351, %v1281
          %v1353 = vpop.permute.xlu0 %1352
          %v1354 = vlaneseq
          %v1355 = vshrl.u32 %v1354, 7
          %v1356 = vadd.s32 %v1355, 96
          %1357 = vset.pattern.permute.xlu0 %v1356
          %1358 = vperm.xlu0 %1357, %v1281
          %v1359 = vpop.permute.xlu0 %1358
          %v1360 = vlaneseq
          %v1361 = vshrl.u32 %v1360, 7
          %v1362 = vadd.s32 %v1361, 104
          %1363 = vset.pattern.permute.xlu0 %v1362
          %1364 = vperm.xlu0 %1363, %v1281
          %v1365 = vpop.permute.xlu0 %1364
          %v1366 = vlaneseq
          %v1367 = vshrl.u32 %v1366, 7
          %v1368 = vadd.s32 %v1367, 112
          %1369 = vset.pattern.permute.xlu0 %v1368
          %1370 = vperm.xlu0 %1369, %v1281
          %v1371 = vpop.permute.xlu0 %1370
          %v1372 = vlaneseq
          %v1373 = vshrl.u32 %v1372, 7
          %v1374 = vadd.s32 %v1373, 120
          %1375 = vset.pattern.permute.xlu0 %v1374
          %1376 = vperm.xlu0 %1375, %v1281
          %v1377 = vpop.permute.xlu0 %1376
          %v1378 = vperm.slane %v477, 7
          %v1379 = vlaneseq
          %v1380 = vshrl.u32 %v1379, 7
          %1382 = vset.pattern.permute.xlu0 %v1380
          %1383 = vperm.xlu0 %1382, %v1378
          %v1384 = vpop.permute.xlu0 %1383
          %v1385 = vlaneseq
          %v1386 = vshrl.u32 %v1385, 7
          %v1387 = vadd.s32 %v1386, 8
          %1388 = vset.pattern.permute.xlu0 %v1387
          %1389 = vperm.xlu0 %1388, %v1378
          %v1390 = vpop.permute.xlu0 %1389
          %v1391 = vlaneseq
          %v1392 = vshrl.u32 %v1391, 7
          %v1393 = vadd.s32 %v1392, 16
          %1394 = vset.pattern.permute.xlu0 %v1393
          %1395 = vperm.xlu0 %1394, %v1378
          %v1396 = vpop.permute.xlu0 %1395
          %v1397 = vlaneseq
          %v1398 = vshrl.u32 %v1397, 7
          %v1399 = vadd.s32 %v1398, 24
          %1400 = vset.pattern.permute.xlu0 %v1399
          %1401 = vperm.xlu0 %1400, %v1378
          %v1402 = vpop.permute.xlu0 %1401
          %v1403 = vlaneseq
          %v1404 = vshrl.u32 %v1403, 7
          %v1405 = vadd.s32 %v1404, 32
          %1406 = vset.pattern.permute.xlu0 %v1405
          %1407 = vperm.xlu0 %1406, %v1378
          %v1408 = vpop.permute.xlu0 %1407
          %v1409 = vlaneseq
          %v1410 = vshrl.u32 %v1409, 7
          %v1411 = vadd.s32 %v1410, 40
          %1412 = vset.pattern.permute.xlu0 %v1411
          %1413 = vperm.xlu0 %1412, %v1378
          %v1414 = vpop.permute.xlu0 %1413
          %v1415 = vlaneseq
          %v1416 = vshrl.u32 %v1415, 7
          %v1417 = vadd.s32 %v1416, 48
          %1418 = vset.pattern.permute.xlu0 %v1417
          %1419 = vperm.xlu0 %1418, %v1378
          %v1420 = vpop.permute.xlu0 %1419
          %v1421 = vlaneseq
          %v1422 = vshrl.u32 %v1421, 7
          %v1423 = vadd.s32 %v1422, 56
          %1424 = vset.pattern.permute.xlu0 %v1423
          %1425 = vperm.xlu0 %1424, %v1378
          %v1426 = vpop.permute.xlu0 %1425
          %v1427 = vlaneseq
          %v1428 = vshrl.u32 %v1427, 7
          %v1429 = vadd.s32 %v1428, 64
          %1430 = vset.pattern.permute.xlu0 %v1429
          %1431 = vperm.xlu0 %1430, %v1378
          %v1432 = vpop.permute.xlu0 %1431
          %v1433 = vlaneseq
          %v1434 = vshrl.u32 %v1433, 7
          %v1435 = vadd.s32 %v1434, 72
          %1436 = vset.pattern.permute.xlu0 %v1435
          %1437 = vperm.xlu0 %1436, %v1378
          %v1438 = vpop.permute.xlu0 %1437
          %v1439 = vlaneseq
          %v1440 = vshrl.u32 %v1439, 7
          %v1441 = vadd.s32 %v1440, 80
          %1442 = vset.pattern.permute.xlu0 %v1441
          %1443 = vperm.xlu0 %1442, %v1378
          %v1444 = vpop.permute.xlu0 %1443
          %v1445 = vlaneseq
          %v1446 = vshrl.u32 %v1445, 7
          %v1447 = vadd.s32 %v1446, 88
          %1448 = vset.pattern.permute.xlu0 %v1447
          %1449 = vperm.xlu0 %1448, %v1378
          %v1450 = vpop.permute.xlu0 %1449
          %v1451 = vlaneseq
          %v1452 = vshrl.u32 %v1451, 7
          %v1453 = vadd.s32 %v1452, 96
          %1454 = vset.pattern.permute.xlu0 %v1453
          %1455 = vperm.xlu0 %1454, %v1378
          %v1456 = vpop.permute.xlu0 %1455
          %v1457 = vlaneseq
          %v1458 = vshrl.u32 %v1457, 7
          %v1459 = vadd.s32 %v1458, 104
          %1460 = vset.pattern.permute.xlu0 %v1459
          %1461 = vperm.xlu0 %1460, %v1378
          %v1462 = vpop.permute.xlu0 %1461
          %v1463 = vlaneseq
          %v1464 = vshrl.u32 %v1463, 7
          %v1465 = vadd.s32 %v1464, 112
          %1466 = vset.pattern.permute.xlu0 %v1465
          %1467 = vperm.xlu0 %1466, %v1378
          %v1468 = vpop.permute.xlu0 %1467
          %v1469 = vlaneseq
          %v1470 = vshrl.u32 %v1469, 7
          %v1471 = vadd.s32 %v1470, 120
          %1472 = vset.pattern.permute.xlu0 %v1471
          %1473 = vperm.xlu0 %1472, %v1378
          %v1474 = vpop.permute.xlu0 %1473
          %v1475 = vperm.slane %v1278, 0
          %v1476 = vperm.slane %v1280, 0
          %v1479 = vadd.f32 %v1475, %v1287
          %v1480 = vadd.f32 %v1475, %v1293
          %v1481 = vadd.f32 %v1475, %v1299
          %v1482 = vadd.f32 %v1475, %v1305
          %v1483 = vadd.f32 %v1475, %v1311
          %v1484 = vadd.f32 %v1475, %v1317
          %v1485 = vadd.f32 %v1475, %v1323
          %v1486 = vadd.f32 %v1475, %v1329
          %v1487 = vadd.f32 %v1475, %v1335
          %v1488 = vadd.f32 %v1475, %v1341
          %v1489 = vadd.f32 %v1475, %v1347
          %v1490 = vadd.f32 %v1475, %v1353
          %v1491 = vadd.f32 %v1475, %v1359
          %v1492 = vadd.f32 %v1475, %v1365
          %v1493 = vadd.f32 %v1475, %v1371
          %v1494 = vadd.f32 %v1475, %v1377
          %v1495 = vadd.f32 %v1476, %v1384
          %v1496 = vadd.f32 %v1476, %v1390
          %v1497 = vadd.f32 %v1476, %v1396
          %v1498 = vadd.f32 %v1476, %v1402
          %v1499 = vadd.f32 %v1476, %v1408
          %v1500 = vadd.f32 %v1476, %v1414
          %v1501 = vadd.f32 %v1476, %v1420
          %v1502 = vadd.f32 %v1476, %v1426
          %v1503 = vadd.f32 %v1476, %v1432
          %v1504 = vadd.f32 %v1476, %v1438
          %v1505 = vadd.f32 %v1476, %v1444
          %v1506 = vadd.f32 %v1476, %v1450
          %v1507 = vadd.f32 %v1476, %v1456
          %v1508 = vadd.f32 %v1476, %v1462
          %v1509 = vadd.f32 %v1476, %v1468
          %v1510 = vadd.f32 %v1476, %v1474
          %v1511 = vmax.f32 %v1479, %v1495
          %v1512 = vmax.f32 %v1480, %v1496
          %v1513 = vmax.f32 %v1481, %v1497
          %v1514 = vmax.f32 %v1482, %v1498
          %v1515 = vmax.f32 %v1483, %v1499
          %v1516 = vmax.f32 %v1484, %v1500
          %v1517 = vmax.f32 %v1485, %v1501
          %v1518 = vmax.f32 %v1486, %v1502
          %v1519 = vmax.f32 %v1487, %v1503
          %v1520 = vmax.f32 %v1488, %v1504
          %v1521 = vmax.f32 %v1489, %v1505
          %v1522 = vmax.f32 %v1490, %v1506
          %v1523 = vmax.f32 %v1491, %v1507
          %v1524 = vmax.f32 %v1492, %v1508
          %v1525 = vmax.f32 %v1493, %v1509
          %v1526 = vmax.f32 %v1494, %v1510
          %v1527 = vmax.f32 %v1260, %v1511
          %v1528 = vmax.f32 %v1261, %v1512
          %v1529 = vmax.f32 %v1262, %v1513
          %v1530 = vmax.f32 %v1263, %v1514
          %v1531 = vmax.f32 %v1264, %v1515
          %v1532 = vmax.f32 %v1265, %v1516
          %v1533 = vmax.f32 %v1266, %v1517
          %v1534 = vmax.f32 %v1267, %v1518
          %v1535 = vmax.f32 %v1268, %v1519
          %v1536 = vmax.f32 %v1269, %v1520
          %v1537 = vmax.f32 %v1270, %v1521
          %v1538 = vmax.f32 %v1271, %v1522
          %v1539 = vmax.f32 %v1272, %v1523
          %v1540 = vmax.f32 %v1273, %v1524
          %v1541 = vmax.f32 %v1274, %v1525
          %v1542 = vmax.f32 %v1275, %v1526
        $region69: #{graphsage_forward.6} parent=51 // loop_footer
          %s449 = sadd.s32 1, %s445
        $region70: #{graphsage_forward.6} parent=51 // loop_footer_branch
          %444 = sbr.rel target = $region66
        $region71: #{graphsage_forward.6} parent=51 // loop_exit
          _
        %1543 = vst [vmem:[#allocation2] sm:$0xff] %v450
        %1544 = vst [vmem:[#allocation2 + $0x8] sm:$0xff] %v451
        %1545 = vst [vmem:[#allocation2 + $0x10] sm:$0xff] %v452
        %1546 = vst [vmem:[#allocation2 + $0x18] sm:$0xff] %v453
        %1547 = vst [vmem:[#allocation2 + $0x20] sm:$0xff] %v454
        %1548 = vst [vmem:[#allocation2 + $0x28] sm:$0xff] %v455
        %1549 = vst [vmem:[#allocation2 + $0x30] sm:$0xff] %v456
        %1550 = vst [vmem:[#allocation2 + $0x38] sm:$0xff] %v457
        %1551 = vst [vmem:[#allocation2 + $0x40] sm:$0xff] %v458
        %1552 = vst [vmem:[#allocation2 + $0x48] sm:$0xff] %v459
        %1553 = vst [vmem:[#allocation2 + $0x50] sm:$0xff] %v460
        %1554 = vst [vmem:[#allocation2 + $0x58] sm:$0xff] %v461
        %1555 = vst [vmem:[#allocation2 + $0x60] sm:$0xff] %v462
        %1556 = vst [vmem:[#allocation2 + $0x68] sm:$0xff] %v463
        %1557 = vst [vmem:[#allocation2 + $0x70] sm:$0xff] %v464
        %1558 = vst [vmem:[#allocation2 + $0x78] sm:$0xff] %v465
        // Predicated region
        $region72: #{graphsage_forward.6} parent=51 // pred_check
          %p1559 = pneg %p407
        $region73: #{graphsage_forward.6} parent=51 // pred_check_branch
          %1561 = sbr.rel (%p1559) target = $region75
        $region74: #{graphsage_forward.6} parent=51 // pred_region
          %v1562 = vld [vmem:[%s399] sm:$0xff]
          %v1563 = vld [vmem:[%s399 + $0x8] sm:$0xff]
          %v1564 = vld [vmem:[%s399 + $0x10] sm:$0xff]
          %v1565 = vld [vmem:[%s399 + $0x18] sm:$0xff]
          %v1566 = vld [vmem:[%s399 + $0x20] sm:$0xff]
          %v1567 = vld [vmem:[%s399 + $0x28] sm:$0xff]
          %v1568 = vld [vmem:[%s399 + $0x30] sm:$0xff]
          %v1569 = vld [vmem:[%s399 + $0x38] sm:$0xff]
          %v1570 = vld [vmem:[%s399 + $0x40] sm:$0xff]
          %v1571 = vld [vmem:[%s399 + $0x48] sm:$0xff]
          %v1572 = vld [vmem:[%s399 + $0x50] sm:$0xff]
          %v1573 = vld [vmem:[%s399 + $0x58] sm:$0xff]
          %v1574 = vld [vmem:[%s399 + $0x60] sm:$0xff]
          %v1575 = vld [vmem:[%s399 + $0x68] sm:$0xff]
          %v1576 = vld [vmem:[%s399 + $0x70] sm:$0xff]
          %v1577 = vld [vmem:[%s399 + $0x78] sm:$0xff]
          %vm1578 = vcmp.gt.f32.partialorder %v1562, 0.0
          %vm1579 = vcmp.gt.f32.partialorder %v1563, 0.0
          %vm1580 = vcmp.gt.f32.partialorder %v1564, 0.0
          %vm1581 = vcmp.gt.f32.partialorder %v1565, 0.0
          %vm1582 = vcmp.gt.f32.partialorder %v1566, 0.0
          %vm1583 = vcmp.gt.f32.partialorder %v1567, 0.0
          %vm1584 = vcmp.gt.f32.partialorder %v1568, 0.0
          %vm1585 = vcmp.gt.f32.partialorder %v1569, 0.0
          %vm1586 = vcmp.gt.f32.partialorder %v1570, 0.0
          %vm1587 = vcmp.gt.f32.partialorder %v1571, 0.0
          %vm1588 = vcmp.gt.f32.partialorder %v1572, 0.0
          %vm1589 = vcmp.gt.f32.partialorder %v1573, 0.0
          %vm1590 = vcmp.gt.f32.partialorder %v1574, 0.0
          %vm1591 = vcmp.gt.f32.partialorder %v1575, 0.0
          %vm1592 = vcmp.gt.f32.partialorder %v1576, 0.0
          %vm1593 = vcmp.gt.f32.partialorder %v1577, 0.0
          %v1594 = vld [vmem:[#allocation2] sm:$0xff]
          %v1595 = vld [vmem:[#allocation2 + $0x8] sm:$0xff]
          %v1596 = vld [vmem:[#allocation2 + $0x10] sm:$0xff]
          %v1597 = vld [vmem:[#allocation2 + $0x18] sm:$0xff]
          %v1598 = vld [vmem:[#allocation2 + $0x20] sm:$0xff]
          %v1599 = vld [vmem:[#allocation2 + $0x28] sm:$0xff]
          %v1600 = vld [vmem:[#allocation2 + $0x30] sm:$0xff]
          %v1601 = vld [vmem:[#allocation2 + $0x38] sm:$0xff]
          %v1602 = vld [vmem:[#allocation2 + $0x40] sm:$0xff]
          %v1603 = vld [vmem:[#allocation2 + $0x48] sm:$0xff]
          %v1604 = vld [vmem:[#allocation2 + $0x50] sm:$0xff]
          %v1605 = vld [vmem:[#allocation2 + $0x58] sm:$0xff]
          %v1606 = vld [vmem:[#allocation2 + $0x60] sm:$0xff]
          %v1607 = vld [vmem:[#allocation2 + $0x68] sm:$0xff]
          %v1608 = vld [vmem:[#allocation2 + $0x70] sm:$0xff]
          %v1609 = vld [vmem:[#allocation2 + $0x78] sm:$0xff]
          %v1610 = vsel %vm1578, 1, 0
          %v1611 = vsel %vm1579, 1, 0
          %v1612 = vsel %vm1580, 1, 0
          %v1613 = vsel %vm1581, 1, 0
          %v1614 = vsel %vm1582, 1, 0
          %v1615 = vsel %vm1583, 1, 0
          %v1616 = vsel %vm1584, 1, 0
          %v1617 = vsel %vm1585, 1, 0
          %v1618 = vsel %vm1586, 1, 0
          %v1619 = vsel %vm1587, 1, 0
          %v1620 = vsel %vm1588, 1, 0
          %v1621 = vsel %vm1589, 1, 0
          %v1622 = vsel %vm1590, 1, 0
          %v1623 = vsel %vm1591, 1, 0
          %v1624 = vsel %vm1592, 1, 0
          %v1625 = vsel %vm1593, 1, 0
          %1626 = vset.pattern.permute.xlu0 0
          %1627 = vperm.xlu0 %1626, %v1610
          %v1628 = vpop.permute.xlu0 %1627
          %1629 = vset.pattern.permute.xlu0 0
          %1630 = vperm.xlu0 %1629, %v1611
          %v1631 = vpop.permute.xlu0 %1630
          %1632 = vset.pattern.permute.xlu0 0
          %1633 = vperm.xlu0 %1632, %v1612
          %v1634 = vpop.permute.xlu0 %1633
          %1635 = vset.pattern.permute.xlu0 0
          %1636 = vperm.xlu0 %1635, %v1613
          %v1637 = vpop.permute.xlu0 %1636
          %1638 = vset.pattern.permute.xlu0 0
          %1639 = vperm.xlu0 %1638, %v1614
          %v1640 = vpop.permute.xlu0 %1639
          %1641 = vset.pattern.permute.xlu0 0
          %1642 = vperm.xlu0 %1641, %v1615
          %v1643 = vpop.permute.xlu0 %1642
          %1644 = vset.pattern.permute.xlu0 0
          %1645 = vperm.xlu0 %1644, %v1616
          %v1646 = vpop.permute.xlu0 %1645
          %1647 = vset.pattern.permute.xlu0 0
          %1648 = vperm.xlu0 %1647, %v1617
          %v1649 = vpop.permute.xlu0 %1648
          %1650 = vset.pattern.permute.xlu0 0
          %1651 = vperm.xlu0 %1650, %v1618
          %v1652 = vpop.permute.xlu0 %1651
          %1653 = vset.pattern.permute.xlu0 0
          %1654 = vperm.xlu0 %1653, %v1619
          %v1655 = vpop.permute.xlu0 %1654
          %1656 = vset.pattern.permute.xlu0 0
          %1657 = vperm.xlu0 %1656, %v1620
          %v1658 = vpop.permute.xlu0 %1657
          %1659 = vset.pattern.permute.xlu0 0
          %1660 = vperm.xlu0 %1659, %v1621
          %v1661 = vpop.permute.xlu0 %1660
          %1662 = vset.pattern.permute.xlu0 0
          %1663 = vperm.xlu0 %1662, %v1622
          %v1664 = vpop.permute.xlu0 %1663
          %1665 = vset.pattern.permute.xlu0 0
          %1666 = vperm.xlu0 %1665, %v1623
          %v1667 = vpop.permute.xlu0 %1666
          %1668 = vset.pattern.permute.xlu0 0
          %1669 = vperm.xlu0 %1668, %v1624
          %v1670 = vpop.permute.xlu0 %1669
          %1671 = vset.pattern.permute.xlu0 0
          %1672 = vperm.xlu0 %1671, %v1625
          %v1673 = vpop.permute.xlu0 %1672
          %vm1674 = vcmp.eq.s32.totalorder %v1628, 1
          %vm1675 = vcmp.eq.s32.totalorder %v1631, 1
          %vm1676 = vcmp.eq.s32.totalorder %v1634, 1
          %vm1677 = vcmp.eq.s32.totalorder %v1637, 1
          %vm1678 = vcmp.eq.s32.totalorder %v1640, 1
          %vm1679 = vcmp.eq.s32.totalorder %v1643, 1
          %vm1680 = vcmp.eq.s32.totalorder %v1646, 1
          %vm1681 = vcmp.eq.s32.totalorder %v1649, 1
          %vm1682 = vcmp.eq.s32.totalorder %v1652, 1
          %vm1683 = vcmp.eq.s32.totalorder %v1655, 1
          %vm1684 = vcmp.eq.s32.totalorder %v1658, 1
          %vm1685 = vcmp.eq.s32.totalorder %v1661, 1
          %vm1686 = vcmp.eq.s32.totalorder %v1664, 1
          %vm1687 = vcmp.eq.s32.totalorder %v1667, 1
          %vm1688 = vcmp.eq.s32.totalorder %v1670, 1
          %vm1689 = vcmp.eq.s32.totalorder %v1673, 1
          %v1690 = vsel %vm1674, %v1594, 0.0
          %v1691 = vsel %vm1675, %v1595, 0.0
          %v1692 = vsel %vm1676, %v1596, 0.0
          %v1693 = vsel %vm1677, %v1597, 0.0
          %v1694 = vsel %vm1678, %v1598, 0.0
          %v1695 = vsel %vm1679, %v1599, 0.0
          %v1696 = vsel %vm1680, %v1600, 0.0
          %v1697 = vsel %vm1681, %v1601, 0.0
          %v1698 = vsel %vm1682, %v1602, 0.0
          %v1699 = vsel %vm1683, %v1603, 0.0
          %v1700 = vsel %vm1684, %v1604, 0.0
          %v1701 = vsel %vm1685, %v1605, 0.0
          %v1702 = vsel %vm1686, %v1606, 0.0
          %v1703 = vsel %vm1687, %v1607, 0.0
          %v1704 = vsel %vm1688, %v1608, 0.0
          %v1705 = vsel %vm1689, %v1609, 0.0
          %v1706 = vld [vmem:[%s393] sm:$0xff]
          %v1707 = vld [vmem:[%s393 + $0x8] sm:$0xff]
          %v1708 = vld [vmem:[%s393 + $0x10] sm:$0xff]
          %v1709 = vld [vmem:[%s393 + $0x18] sm:$0xff]
          %v1710 = vld [vmem:[%s393 + $0x20] sm:$0xff]
          %v1711 = vld [vmem:[%s393 + $0x28] sm:$0xff]
          %v1712 = vld [vmem:[%s393 + $0x30] sm:$0xff]
          %v1713 = vld [vmem:[%s393 + $0x38] sm:$0xff]
          %v1714 = vld [vmem:[%s393 + $0x40] sm:$0xff]
          %v1715 = vld [vmem:[%s393 + $0x48] sm:$0xff]
          %v1716 = vld [vmem:[%s393 + $0x50] sm:$0xff]
          %v1717 = vld [vmem:[%s393 + $0x58] sm:$0xff]
          %v1718 = vld [vmem:[%s393 + $0x60] sm:$0xff]
          %v1719 = vld [vmem:[%s393 + $0x68] sm:$0xff]
          %v1720 = vld [vmem:[%s393 + $0x70] sm:$0xff]
          %v1721 = vld [vmem:[%s393 + $0x78] sm:$0xff]
          %v1722 = vld [vmem:[#allocation5] sm:$0xff]
          %v1723 = vld [vmem:[#allocation5 + $0x8] sm:$0xff]
          %v1724 = vld [vmem:[#allocation5 + $0x10] sm:$0xff]
          %v1725 = vld [vmem:[#allocation5 + $0x18] sm:$0xff]
          %v1726 = vld [vmem:[#allocation5 + $0x20] sm:$0xff]
          %v1727 = vld [vmem:[#allocation5 + $0x28] sm:$0xff]
          %v1728 = vld [vmem:[#allocation5 + $0x30] sm:$0xff]
          %v1729 = vld [vmem:[#allocation5 + $0x38] sm:$0xff]
          %v1730 = vld [vmem:[#allocation5 + $0x40] sm:$0xff]
          %v1731 = vld [vmem:[#allocation5 + $0x48] sm:$0xff]
          %v1732 = vld [vmem:[#allocation5 + $0x50] sm:$0xff]
          %v1733 = vld [vmem:[#allocation5 + $0x58] sm:$0xff]
          %v1734 = vld [vmem:[#allocation5 + $0x60] sm:$0xff]
          %v1735 = vld [vmem:[#allocation5 + $0x68] sm:$0xff]
          %v1736 = vld [vmem:[#allocation5 + $0x70] sm:$0xff]
          %v1737 = vld [vmem:[#allocation5 + $0x78] sm:$0xff]
          %v1738 = vld [vmem:[#allocation5 + $0x80] sm:$0xff]
          %v1739 = vld [vmem:[#allocation5 + $0x88] sm:$0xff]
          %v1740 = vld [vmem:[#allocation5 + $0x90] sm:$0xff]
          %v1741 = vld [vmem:[#allocation5 + $0x98] sm:$0xff]
          %v1742 = vld [vmem:[#allocation5 + $0xa0] sm:$0xff]
          %v1743 = vld [vmem:[#allocation5 + $0xa8] sm:$0xff]
          %v1744 = vld [vmem:[#allocation5 + $0xb0] sm:$0xff]
          %v1745 = vld [vmem:[#allocation5 + $0xb8] sm:$0xff]
          %v1746 = vld [vmem:[#allocation5 + $0xc0] sm:$0xff]
          %v1747 = vld [vmem:[#allocation5 + $0xc8] sm:$0xff]
          %v1748 = vld [vmem:[#allocation5 + $0xd0] sm:$0xff]
          %v1749 = vld [vmem:[#allocation5 + $0xd8] sm:$0xff]
          %v1750 = vld [vmem:[#allocation5 + $0xe0] sm:$0xff]
          %v1751 = vld [vmem:[#allocation5 + $0xe8] sm:$0xff]
          %v1752 = vld [vmem:[#allocation5 + $0xf0] sm:$0xff]
          %v1753 = vld [vmem:[#allocation5 + $0xf8] sm:$0xff]
          %v1754 = vld [vmem:[%s5] sm:$0x1]
          %v1756 = vperm.slane %v1754, 0
          %1758 = vmatpush.msra.mxu0 %v1737
          %1759 = vmatpush.msra.mxu0 %v1736
          %1760 = vmatpush.msra.mxu0 %v1735
          %1761 = vmatpush.msra.mxu0 %v1734
          %1762 = vmatpush.msra.mxu0 %v1733
          %1763 = vmatpush.msra.mxu0 %v1732
          %1764 = vmatpush.msra.mxu0 %v1731
          %1765 = vmatpush.msra.mxu0 %v1730
          %1766 = vmatpush.msra.mxu0 %v1729
          %1767 = vmatpush.msra.mxu0 %v1728
          %1768 = vmatpush.msra.mxu0 %v1727
          %1769 = vmatpush.msra.mxu0 %v1726
          %1770 = vmatpush.msra.mxu0 %v1725
          %1771 = vmatpush.msra.mxu0 %v1724
          %1772 = vmatpush.msra.mxu0 %v1723
          %1773 = vmatpush.msra.mxu0 %v1722
          %1774 = vmatmul.f32.gmra.mxu0 %v1690
          %v1775 = vpop.f32.mrf.mxu0
          %v1776 = vadd.f32 %v1756, %v1775
          %1777 = vmatmul.f32.gmra.mxu0 %v1691
          %v1778 = vpop.f32.mrf.mxu0
          %v1779 = vadd.f32 %v1756, %v1778
          %1780 = vmatmul.f32.gmra.mxu0 %v1692
          %v1781 = vpop.f32.mrf.mxu0
          %v1782 = vadd.f32 %v1756, %v1781
          %1783 = vmatmul.f32.gmra.mxu0 %v1693
          %v1784 = vpop.f32.mrf.mxu0
          %v1785 = vadd.f32 %v1756, %v1784
          %1786 = vmatmul.f32.gmra.mxu0 %v1694
          %v1787 = vpop.f32.mrf.mxu0
          %v1788 = vadd.f32 %v1756, %v1787
          %1789 = vmatmul.f32.gmra.mxu0 %v1695
          %v1790 = vpop.f32.mrf.mxu0
          %v1791 = vadd.f32 %v1756, %v1790
          %1792 = vmatmul.f32.gmra.mxu0 %v1696
          %v1793 = vpop.f32.mrf.mxu0
          %v1794 = vadd.f32 %v1756, %v1793
          %1795 = vmatmul.f32.gmra.mxu0 %v1697
          %v1796 = vpop.f32.mrf.mxu0
          %v1797 = vadd.f32 %v1756, %v1796
          %1798 = vmatmul.f32.gmra.mxu0 %v1698
          %v1799 = vpop.f32.mrf.mxu0
          %v1800 = vadd.f32 %v1756, %v1799
          %1801 = vmatmul.f32.gmra.mxu0 %v1699
          %v1802 = vpop.f32.mrf.mxu0
          %v1803 = vadd.f32 %v1756, %v1802
          %1804 = vmatmul.f32.gmra.mxu0 %v1700
          %v1805 = vpop.f32.mrf.mxu0
          %v1806 = vadd.f32 %v1756, %v1805
          %1807 = vmatmul.f32.gmra.mxu0 %v1701
          %v1808 = vpop.f32.mrf.mxu0
          %v1809 = vadd.f32 %v1756, %v1808
          %1810 = vmatmul.f32.gmra.mxu0 %v1702
          %v1811 = vpop.f32.mrf.mxu0
          %v1812 = vadd.f32 %v1756, %v1811
          %1813 = vmatmul.f32.gmra.mxu0 %v1703
          %v1814 = vpop.f32.mrf.mxu0
          %v1815 = vadd.f32 %v1756, %v1814
          %1816 = vmatmul.f32.gmra.mxu0 %v1704
          %v1817 = vpop.f32.mrf.mxu0
          %v1818 = vadd.f32 %v1756, %v1817
          %1819 = vmatmul.f32.gmra.mxu0 %v1705
          %v1820 = vpop.f32.mrf.mxu0
          %v1821 = vadd.f32 %v1756, %v1820
          %1822 = vdwg.mxu0
          %1823 = vmatpush.msra.mxu0 %v1753
          %1824 = vmatpush.msra.mxu0 %v1752
          %1825 = vmatpush.msra.mxu0 %v1751
          %1826 = vmatpush.msra.mxu0 %v1750
          %1827 = vmatpush.msra.mxu0 %v1749
          %1828 = vmatpush.msra.mxu0 %v1748
          %1829 = vmatpush.msra.mxu0 %v1747
          %1830 = vmatpush.msra.mxu0 %v1746
          %1831 = vmatpush.msra.mxu0 %v1745
          %1832 = vmatpush.msra.mxu0 %v1744
          %1833 = vmatpush.msra.mxu0 %v1743
          %1834 = vmatpush.msra.mxu0 %v1742
          %1835 = vmatpush.msra.mxu0 %v1741
          %1836 = vmatpush.msra.mxu0 %v1740
          %1837 = vmatpush.msra.mxu0 %v1739
          %1838 = vmatpush.msra.mxu0 %v1738
          %1839 = vmatmul.f32.gmra.mxu0 %v1706
          %v1840 = vpop.f32.mrf.mxu0
          %v1841 = vadd.f32 %v1776, %v1840
          %1842 = vmatmul.f32.gmra.mxu0 %v1707
          %v1843 = vpop.f32.mrf.mxu0
          %v1844 = vadd.f32 %v1779, %v1843
          %1845 = vmatmul.f32.gmra.mxu0 %v1708
          %v1846 = vpop.f32.mrf.mxu0
          %v1847 = vadd.f32 %v1782, %v1846
          %1848 = vmatmul.f32.gmra.mxu0 %v1709
          %v1849 = vpop.f32.mrf.mxu0
          %v1850 = vadd.f32 %v1785, %v1849
          %1851 = vmatmul.f32.gmra.mxu0 %v1710
          %v1852 = vpop.f32.mrf.mxu0
          %v1853 = vadd.f32 %v1788, %v1852
          %1854 = vmatmul.f32.gmra.mxu0 %v1711
          %v1855 = vpop.f32.mrf.mxu0
          %v1856 = vadd.f32 %v1791, %v1855
          %1857 = vmatmul.f32.gmra.mxu0 %v1712
          %v1858 = vpop.f32.mrf.mxu0
          %v1859 = vadd.f32 %v1794, %v1858
          %1860 = vmatmul.f32.gmra.mxu0 %v1713
          %v1861 = vpop.f32.mrf.mxu0
          %v1862 = vadd.f32 %v1797, %v1861
          %1863 = vmatmul.f32.gmra.mxu0 %v1714
          %v1864 = vpop.f32.mrf.mxu0
          %v1865 = vadd.f32 %v1800, %v1864
          %1866 = vmatmul.f32.gmra.mxu0 %v1715
          %v1867 = vpop.f32.mrf.mxu0
          %v1868 = vadd.f32 %v1803, %v1867
          %1869 = vmatmul.f32.gmra.mxu0 %v1716
          %v1870 = vpop.f32.mrf.mxu0
          %v1871 = vadd.f32 %v1806, %v1870
          %1872 = vmatmul.f32.gmra.mxu0 %v1717
          %v1873 = vpop.f32.mrf.mxu0
          %v1874 = vadd.f32 %v1809, %v1873
          %1875 = vmatmul.f32.gmra.mxu0 %v1718
          %v1876 = vpop.f32.mrf.mxu0
          %v1877 = vadd.f32 %v1812, %v1876
          %1878 = vmatmul.f32.gmra.mxu0 %v1719
          %v1879 = vpop.f32.mrf.mxu0
          %v1880 = vadd.f32 %v1815, %v1879
          %1881 = vmatmul.f32.gmra.mxu0 %v1720
          %v1882 = vpop.f32.mrf.mxu0
          %v1883 = vadd.f32 %v1818, %v1882
          %1884 = vmatmul.f32.gmra.mxu0 %v1721
          %v1885 = vpop.f32.mrf.mxu0
          %v1886 = vadd.f32 %v1821, %v1885
          %1887 = vdwg.mxu0
          %v1888 = vld [vmem:[%s6] sm:$0xff]
          %v1889 = vld [vmem:[%s6 + $0x8] sm:$0xff]
          %v1890 = vld [vmem:[%s6 + $0x10] sm:$0xff]
          %v1891 = vld [vmem:[%s6 + $0x18] sm:$0xff]
          %v1892 = vld [vmem:[%s6 + $0x20] sm:$0xff]
          %v1893 = vld [vmem:[%s6 + $0x28] sm:$0xff]
          %v1894 = vld [vmem:[%s6 + $0x30] sm:$0xff]
          %v1895 = vld [vmem:[%s6 + $0x38] sm:$0xff]
          %v1896 = vld [vmem:[%s6 + $0x40] sm:$0xff]
          %v1897 = vld [vmem:[%s6 + $0x48] sm:$0xff]
          %v1898 = vld [vmem:[%s6 + $0x50] sm:$0xff]
          %v1899 = vld [vmem:[%s6 + $0x58] sm:$0xff]
          %v1900 = vld [vmem:[%s6 + $0x60] sm:$0xff]
          %v1901 = vld [vmem:[%s6 + $0x68] sm:$0xff]
          %v1902 = vld [vmem:[%s6 + $0x70] sm:$0xff]
          %v1903 = vld [vmem:[%s6 + $0x78] sm:$0xff]
          %v1904 = vld [vmem:[%s7] sm:$0x1]
          %v1906 = vperm.slane %v1904, 0
          %1908 = vmatpush.msra.mxu0 %v1903
          %1909 = vmatpush.msra.mxu0 %v1902
          %1910 = vmatpush.msra.mxu0 %v1901
          %1911 = vmatpush.msra.mxu0 %v1900
          %1912 = vmatpush.msra.mxu0 %v1899
          %1913 = vmatpush.msra.mxu0 %v1898
          %1914 = vmatpush.msra.mxu0 %v1897
          %1915 = vmatpush.msra.mxu0 %v1896
          %1916 = vmatpush.msra.mxu0 %v1895
          %1917 = vmatpush.msra.mxu0 %v1894
          %1918 = vmatpush.msra.mxu0 %v1893
          %1919 = vmatpush.msra.mxu0 %v1892
          %1920 = vmatpush.msra.mxu0 %v1891
          %1921 = vmatpush.msra.mxu0 %v1890
          %1922 = vmatpush.msra.mxu0 %v1889
          %1923 = vmatpush.msra.mxu0 %v1888
          %1924 = vmatmul.f32.gmra.mxu0 %v1841
          %v1925 = vpop.f32.mrf.mxu0
          %v1926 = vadd.f32 %v1906, %v1925
          %1927 = vmatmul.f32.gmra.mxu0 %v1844
          %v1928 = vpop.f32.mrf.mxu0
          %v1929 = vadd.f32 %v1906, %v1928
          %1930 = vmatmul.f32.gmra.mxu0 %v1847
          %v1931 = vpop.f32.mrf.mxu0
          %v1932 = vadd.f32 %v1906, %v1931
          %1933 = vmatmul.f32.gmra.mxu0 %v1850
          %v1934 = vpop.f32.mrf.mxu0
          %v1935 = vadd.f32 %v1906, %v1934
          %1936 = vmatmul.f32.gmra.mxu0 %v1853
          %v1937 = vpop.f32.mrf.mxu0
          %v1938 = vadd.f32 %v1906, %v1937
          %1939 = vmatmul.f32.gmra.mxu0 %v1856
          %v1940 = vpop.f32.mrf.mxu0
          %v1941 = vadd.f32 %v1906, %v1940
          %1942 = vmatmul.f32.gmra.mxu0 %v1859
          %v1943 = vpop.f32.mrf.mxu0
          %v1944 = vadd.f32 %v1906, %v1943
          %1945 = vmatmul.f32.gmra.mxu0 %v1862
          %v1946 = vpop.f32.mrf.mxu0
          %v1947 = vadd.f32 %v1906, %v1946
          %1948 = vmatmul.f32.gmra.mxu0 %v1865
          %v1949 = vpop.f32.mrf.mxu0
          %v1950 = vadd.f32 %v1906, %v1949
          %1951 = vmatmul.f32.gmra.mxu0 %v1868
          %v1952 = vpop.f32.mrf.mxu0
          %v1953 = vadd.f32 %v1906, %v1952
          %1954 = vmatmul.f32.gmra.mxu0 %v1871
          %v1955 = vpop.f32.mrf.mxu0
          %v1956 = vadd.f32 %v1906, %v1955
          %1957 = vmatmul.f32.gmra.mxu0 %v1874
          %v1958 = vpop.f32.mrf.mxu0
          %v1959 = vadd.f32 %v1906, %v1958
          %1960 = vmatmul.f32.gmra.mxu0 %v1877
          %v1961 = vpop.f32.mrf.mxu0
          %v1962 = vadd.f32 %v1906, %v1961
          %1963 = vmatmul.f32.gmra.mxu0 %v1880
          %v1964 = vpop.f32.mrf.mxu0
          %v1965 = vadd.f32 %v1906, %v1964
          %1966 = vmatmul.f32.gmra.mxu0 %v1883
          %v1967 = vpop.f32.mrf.mxu0
          %v1968 = vadd.f32 %v1906, %v1967
          %1969 = vmatmul.f32.gmra.mxu0 %v1886
          %v1970 = vpop.f32.mrf.mxu0
          %v1971 = vadd.f32 %v1906, %v1970
          %1972 = vdwg.mxu0
          %v1973 = vmax.f32 %v1926, 0.0
          %v1974 = vmax.f32 %v1929, 0.0
          %v1975 = vmax.f32 %v1932, 0.0
          %v1976 = vmax.f32 %v1935, 0.0
          %v1977 = vmax.f32 %v1938, 0.0
          %v1978 = vmax.f32 %v1941, 0.0
          %v1979 = vmax.f32 %v1944, 0.0
          %v1980 = vmax.f32 %v1947, 0.0
          %v1981 = vmax.f32 %v1950, 0.0
          %v1982 = vmax.f32 %v1953, 0.0
          %v1983 = vmax.f32 %v1956, 0.0
          %v1984 = vmax.f32 %v1959, 0.0
          %v1985 = vmax.f32 %v1962, 0.0
          %v1986 = vmax.f32 %v1965, 0.0
          %v1987 = vmax.f32 %v1968, 0.0
          %v1988 = vmax.f32 %v1971, 0.0
          %1989 = vst [vmem:[%s405] sm:$0xff] %v1973
          %1990 = vst [vmem:[%s405 + $0x8] sm:$0xff] %v1974
          %1991 = vst [vmem:[%s405 + $0x10] sm:$0xff] %v1975
          %1992 = vst [vmem:[%s405 + $0x18] sm:$0xff] %v1976
          %1993 = vst [vmem:[%s405 + $0x20] sm:$0xff] %v1977
          %1994 = vst [vmem:[%s405 + $0x28] sm:$0xff] %v1978
          %1995 = vst [vmem:[%s405 + $0x30] sm:$0xff] %v1979
          %1996 = vst [vmem:[%s405 + $0x38] sm:$0xff] %v1980
          %1997 = vst [vmem:[%s405 + $0x40] sm:$0xff] %v1981
          %1998 = vst [vmem:[%s405 + $0x48] sm:$0xff] %v1982
          %1999 = vst [vmem:[%s405 + $0x50] sm:$0xff] %v1983
          %2000 = vst [vmem:[%s405 + $0x58] sm:$0xff] %v1984
          %2001 = vst [vmem:[%s405 + $0x60] sm:$0xff] %v1985
          %2002 = vst [vmem:[%s405 + $0x68] sm:$0xff] %v1986
          %2003 = vst [vmem:[%s405 + $0x70] sm:$0xff] %v1987
          %2004 = vst [vmem:[%s405 + $0x78] sm:$0xff] %v1988
        $region75: #{graphsage_forward.6} parent=51 // pred_fallthru
          _
        %s2005 = smul.u32 16, %s27
        %p2006 = scmp.lt.s32.totalorder %s2005, 31
        %s2007 = scalar_select %p2006, %s2005, 31
        %s2008 = smul.addr %s2007, 8
        %s2009 = scalar_lea.vmem %s8, %s2008
        // Predicated region
        $region76: #{graphsage_forward.6} parent=51 // pred_check
          %p2010 = pneg %p238
        $region77: #{graphsage_forward.6} parent=51 // pred_check_branch
          %2012 = sbr.rel (%p2010) target = $region79
        $region78: #{graphsage_forward.6} parent=51 // pred_region
          %s2013 = smul.u32 16, %s27
        $region79: #{graphsage_forward.6} parent=51 // pred_fallthru
          _
      $region52: #{graphsage_forward.6} parent=5 // pred_fallthru
        _
      %p2014 = scmp.le.s32.totalorder 2, %s18
      // Predicated region
      $region80: #{graphsage_forward.6} parent=5 // pred_check
        %p2015 = pneg %p2014
      $region81: #{graphsage_forward.6} parent=5 // pred_check_branch
        %2017 = sbr.rel (%p2015) target = $region83
      $region82: #{graphsage_forward.6} parent=5 // pred_region
        %s2018 = ssub.s32 %s18, 2
        // Predicated region
        $region84: #{graphsage_forward.6} parent=82 // pred_check
          %p2019 = pneg %p244
        $region85: #{graphsage_forward.6} parent=82 // pred_check_branch
          %2021 = sbr.rel (%p2019) target = $region87
        $region86: #{graphsage_forward.6} parent=82 // pred_region
          %s2022 = smul.u32 16, %s29
          %p2023 = scmp.lt.s32.totalorder %s2022, 31
          %s2024 = scalar_select %p2023, %s2022, 31
          %s2025 = smul.addr %s2024, 8
          %s2026 = scalar_lea.vmem %s8, %s2025
        $region87: #{graphsage_forward.6} parent=82 // pred_fallthru
          _
      $region83: #{graphsage_forward.6} parent=5 // pred_fallthru
        _
    $region6: #{graphsage_forward.6} parent=1 // loop_footer
      %s22 = sadd.s32 1, %s18
    $region7: #{graphsage_forward.6} parent=1 // loop_footer_branch
      %17 = sbr.rel target = $region3
    $region8: #{graphsage_forward.6} parent=1 // loop_exit
      _
    %2027 = vsyncpa [#allocation4], 1
    %s2028 = scalar_lea.sflag [#allocation4], 1
    %2029 = vsyncpa %s2028, 1
    %2030 = vsyncpa [#allocation6], 1

// kernel: graphsage_forward.5
$region0: #{graphsage_forward.5}
  #allocation0 [shape = 'u32[]', space=smem, size = 0x4, offset = 0x4, fixed_abs, tag = 'smem constant byte address 0x4 - core index']
  #allocation1 [shape = 'u32[72,128]{1,0:T(1,128)}', space=vmem, size = 0x9000, scoped, tag = 'internal scratch']
  #allocation2 [shape = 'f32[128,128]{1,0:T(8,128)}', space=vmem, size = 0x10000, scoped, tag = 'scratch operand']
  %s0 = inlined_call_operand.hbm [shape: bf16[256,256], index: 0, kind: input, shape index: {}]
  %s1 = inlined_call_operand.hbm [shape: f32[256,128], index: 1, kind: input, shape index: {}, may-alias: {1,2}]
  %s2 = inlined_call_operand.hbm [shape: f32[256,128], index: 2, kind: input, shape index: {}, may-alias: {1,2}]
  %s3 = inlined_call_operand.vmem [shape: f32[256,1], index: 3, kind: input, shape index: {}]
  %s4 = inlined_call_operand.hbm [shape: f32[256,128], index: 4, kind: input, shape index: {}]
  %s5 = inlined_call_operand.vmem [shape: f32[1,128], index: 5, kind: input, shape index: {}]
  %s6 = inlined_call_operand.vmem [shape: f32[128,128], index: 6, kind: input, shape index: {}]
  %s7 = inlined_call_operand.vmem [shape: f32[1,128], index: 7, kind: input, shape index: {}]
  %s8 = inlined_call_operand.vmem [shape: f32[256,128], index: 8, kind: output, shape index: {}]
  %s9 = sld [smem:[#allocation0]]
  $region96: #{graphsage_forward.5} parent=0
    _
  %s11 = ssub.s32 1, %s9
  %s12 = scalar_select 0, %s11, %s9
  $region1: #{graphsage_forward.5} parent=0
    #allocation3 [shape = 'u8[131072]{0}', space=vmem, size = 0x20000, scoped, tag = 'input window, operand 0']
    #allocation4 [shape = 's32[2]{0}', space=sflag, size = 0x8, scoped, tag = 'scoped memory for graphsage_forward.5']
    #allocation5 [shape = 'u8[131072]{0}', space=vmem, size = 0x20000, scoped, tag = 'input window, operand 1, single buffered']
    #allocation6 [shape = 's32[1]{0}', space=sflag, size = 0x4, scoped, tag = 'scoped memory for graphsage_forward.5']
    #allocation7 [shape = 'u8[131072]{0}', space=vmem, size = 0x20000, scoped, tag = 'input window, operand 2']
    #allocation8 [shape = 'u8[131072]{0}', space=vmem, size = 0x20000, scoped, tag = 'input window, operand 4, single buffered']
    %13 = vsyncpa [#allocation4], 0
    %s14 = scalar_lea.sflag [#allocation4], 1
    %15 = vsyncpa %s14, 0
    %16 = vsyncpa [#allocation6], 0
    loop: start=0, step=1, limit=4
    $region2: #{graphsage_forward.5} parent=1 // loop_pre_header
      _
    $region3: #{graphsage_forward.5} parent=1 // loop_header
      %s18 = sphi 0, %s22
      %p19 = scmp.ge.s32.totalorder %s18, 4
      %s25 = sphi 0, %s37
      %s26 = sphi 0, %s33
      %s27 = sphi 0, %s25
      %s28 = sphi 0, %s26
      %s29 = sphi 0, %s27
      %s30 = sphi 0, %s28
      %s42 = sphi 0, %s44
      %s45 = sphi 0, %s42
      %s46 = sphi 0, %s45
      %s62 = sphi 0, %s46
      %s66 = sphi 0, %s66
      %s68 = sphi 0, %s66
      %s69 = sphi 0, %s68
      %s83 = sphi 0, %s69
      %s89 = sphi 0, %s91
      %s92 = sphi 0, %s89
      %s93 = sphi 0, %s92
      %s109 = sphi 0, %s93
      %s115 = sphi 0, %s117
      %s118 = sphi 0, %s115
      %s119 = sphi 0, %s118
      %s135 = sphi 0, %s119
      %s139 = sphi 0, %s139
      %s141 = sphi 0, %s139
      %s142 = sphi 0, %s141
      %s156 = sphi 0, %s142
      %s160 = sphi 0, %s160
      %s162 = sphi 0, %s160
      %s163 = sphi 0, %s162
      %s177 = sphi 0, %s163
      %s181 = sphi 0, %s181
      %s183 = sphi 0, %s181
      %s184 = sphi 0, %s183
      %s198 = sphi 0, %s184
      %s202 = sphi 0, %s202
      %s204 = sphi 0, %s202
      %s205 = sphi 0, %s204
      %s219 = sphi 0, %s205
      %s225 = sphi 0, %s227
      %s228 = sphi 0, %s225
      %s229 = sphi 0, %s228
      %s245 = sphi 0, %s229
    $region4: #{graphsage_forward.5} parent=1 // loop_header_branch
      %21 = sbr.rel (%p19) target = $region8
    $region5: #{graphsage_forward.5} parent=1 // loop_body
      %s23 = ssub.s32 %s18, 1
      %s24 = ssub.s32 %s18, 2
      %s31 = sadd.s32 1, %s26
      %p32 = scmp.ge.s32.totalorder %s31, 1
      %s33 = scalar_select %p32, 0, %s31
      %s34 = sadd.s32 1, %s25
      %s35 = scalar_select %p32, %s34, %s25
      %p36 = scmp.ge.s32.totalorder %s35, 2
      %s37 = scalar_select %p36, 0, %s35
      %s38 = ssub.s32 %s26, %s33
      %s39 = ssub.s32 %s25, %s37
      %s40 = sor.u32 %s38, %s39
      %p41 = scmp.eq.s32.totalorder %s40, 0
      %s43 = sadd.s32 %s42, 1
      %s44 = scalar_select %p41, %s42, %s43
      %p47 = pneg %p41
      %p48 = scmp.eq.s32.totalorder %s18, 1
      %p49 = por %p47, %p48
      %p50 = scmp.ne.s32.totalorder %s42, %s45
      %p51 = scmp.eq.s32.totalorder %s18, 0
      %p52 = por %p50, %p51
      %p53 = scmp.ne.s32.totalorder %s42, %s45
      %p54 = scmp.eq.s32.totalorder %s23, 1
      %p55 = por %p53, %p54
      %p56 = scmp.ne.s32.totalorder %s45, %s46
      %p57 = scmp.eq.s32.totalorder %s23, 0
      %p58 = por %p56, %p57
      %p59 = scmp.ne.s32.totalorder %s45, %s46
      %p60 = scmp.eq.s32.totalorder %s24, 1
      %p61 = por %p59, %p60
      %p63 = scmp.ne.s32.totalorder %s46, %s62
      %p64 = scmp.eq.s32.totalorder %s24, 0
      %p65 = por %p63, %p64
      %s67 = sadd.s32 %s66, 1
      %p70 = scmp.eq.s32.totalorder %s18, 1
      %p71 = scmp.ne.s32.totalorder %s66, %s68
      %p72 = scmp.eq.s32.totalorder %s18, 0
      %p73 = por %p71, %p72
      %p74 = scmp.ne.s32.totalorder %s66, %s68
      %p75 = scmp.eq.s32.totalorder %s23, 1
      %p76 = por %p74, %p75
      %p77 = scmp.ne.s32.totalorder %s68, %s69
      %p78 = scmp.eq.s32.totalorder %s23, 0
      %p79 = por %p77, %p78
      %p80 = scmp.ne.s32.totalorder %s68, %s69
      %p81 = scmp.eq.s32.totalorder %s24, 1
      %p82 = por %p80, %p81
      %p84 = scmp.ne.s32.totalorder %s69, %s83
      %p85 = scmp.eq.s32.totalorder %s24, 0
      %p86 = por %p84, %p85
      %s87 = ssub.s32 %s25, %s37
      %p88 = scmp.eq.s32.totalorder %s87, 0
      %s90 = sadd.s32 %s89, 1
      %s91 = scalar_select %p88, %s89, %s90
      %p94 = pneg %p88
      %p95 = scmp.eq.s32.totalorder %s18, 1
      %p96 = por %p94, %p95
      %p97 = scmp.ne.s32.totalorder %s89, %s92
      %p98 = scmp.eq.s32.totalorder %s18, 0
      %p99 = por %p97, %p98
      %p100 = scmp.ne.s32.totalorder %s89, %s92
      %p101 = scmp.eq.s32.totalorder %s23, 1
      %p102 = por %p100, %p101
      %p103 = scmp.ne.s32.totalorder %s92, %s93
      %p104 = scmp.eq.s32.totalorder %s23, 0
      %p105 = por %p103, %p104
      %p106 = scmp.ne.s32.totalorder %s92, %s93
      %p107 = scmp.eq.s32.totalorder %s24, 1
      %p108 = por %p106, %p107
      %p110 = scmp.ne.s32.totalorder %s93, %s109
      %p111 = scmp.eq.s32.totalorder %s24, 0
      %p112 = por %p110, %p111
      %s113 = ssub.s32 %s25, %s37
      %p114 = scmp.eq.s32.totalorder %s113, 0
      %s116 = sadd.s32 %s115, 1
      %s117 = scalar_select %p114, %s115, %s116
      %p120 = pneg %p114
      %p121 = scmp.eq.s32.totalorder %s18, 1
      %p122 = por %p120, %p121
      %p123 = scmp.ne.s32.totalorder %s115, %s118
      %p124 = scmp.eq.s32.totalorder %s18, 0
      %p125 = por %p123, %p124
      %p126 = scmp.ne.s32.totalorder %s115, %s118
      %p127 = scmp.eq.s32.totalorder %s23, 1
      %p128 = por %p126, %p127
      %p129 = scmp.ne.s32.totalorder %s118, %s119
      %p130 = scmp.eq.s32.totalorder %s23, 0
      %p131 = por %p129, %p130
      %p132 = scmp.ne.s32.totalorder %s118, %s119
      %p133 = scmp.eq.s32.totalorder %s24, 1
      %p134 = por %p132, %p133
      %p136 = scmp.ne.s32.totalorder %s119, %s135
      %p137 = scmp.eq.s32.totalorder %s24, 0
      %p138 = por %p136, %p137
      %s140 = sadd.s32 %s139, 1
      %p143 = scmp.eq.s32.totalorder %s18, 1
      %p144 = scmp.ne.s32.totalorder %s139, %s141
      %p145 = scmp.eq.s32.totalorder %s18, 0
      %p146 = por %p144, %p145
      %p147 = scmp.ne.s32.totalorder %s139, %s141
      %p148 = scmp.eq.s32.totalorder %s23, 1
      %p149 = por %p147, %p148
      %p150 = scmp.ne.s32.totalorder %s141, %s142
      %p151 = scmp.eq.s32.totalorder %s23, 0
      %p152 = por %p150, %p151
      %p153 = scmp.ne.s32.totalorder %s141, %s142
      %p154 = scmp.eq.s32.totalorder %s24, 1
      %p155 = por %p153, %p154
      %p157 = scmp.ne.s32.totalorder %s142, %s156
      %p158 = scmp.eq.s32.totalorder %s24, 0
      %p159 = por %p157, %p158
      %s161 = sadd.s32 %s160, 1
      %p164 = scmp.eq.s32.totalorder %s18, 1
      %p165 = scmp.ne.s32.totalorder %s160, %s162
      %p166 = scmp.eq.s32.totalorder %s18, 0
      %p167 = por %p165, %p166
      %p168 = scmp.ne.s32.totalorder %s160, %s162
      %p169 = scmp.eq.s32.totalorder %s23, 1
      %p170 = por %p168, %p169
      %p171 = scmp.ne.s32.totalorder %s162, %s163
      %p172 = scmp.eq.s32.totalorder %s23, 0
      %p173 = por %p171, %p172
      %p174 = scmp.ne.s32.totalorder %s162, %s163
      %p175 = scmp.eq.s32.totalorder %s24, 1
      %p176 = por %p174, %p175
      %p178 = scmp.ne.s32.totalorder %s163, %s177
      %p179 = scmp.eq.s32.totalorder %s24, 0
      %p180 = por %p178, %p179
      %s182 = sadd.s32 %s181, 1
      %p185 = scmp.eq.s32.totalorder %s18, 1
      %p186 = scmp.ne.s32.totalorder %s181, %s183
      %p187 = scmp.eq.s32.totalorder %s18, 0
      %p188 = por %p186, %p187
      %p189 = scmp.ne.s32.totalorder %s181, %s183
      %p190 = scmp.eq.s32.totalorder %s23, 1
      %p191 = por %p189, %p190
      %p192 = scmp.ne.s32.totalorder %s183, %s184
      %p193 = scmp.eq.s32.totalorder %s23, 0
      %p194 = por %p192, %p193
      %p195 = scmp.ne.s32.totalorder %s183, %s184
      %p196 = scmp.eq.s32.totalorder %s24, 1
      %p197 = por %p195, %p196
      %p199 = scmp.ne.s32.totalorder %s184, %s198
      %p200 = scmp.eq.s32.totalorder %s24, 0
      %p201 = por %p199, %p200
      %s203 = sadd.s32 %s202, 1
      %p206 = scmp.eq.s32.totalorder %s18, 1
      %p207 = scmp.ne.s32.totalorder %s202, %s204
      %p208 = scmp.eq.s32.totalorder %s18, 0
      %p209 = por %p207, %p208
      %p210 = scmp.ne.s32.totalorder %s202, %s204
      %p211 = scmp.eq.s32.totalorder %s23, 1
      %p212 = por %p210, %p211
      %p213 = scmp.ne.s32.totalorder %s204, %s205
      %p214 = scmp.eq.s32.totalorder %s23, 0
      %p215 = por %p213, %p214
      %p216 = scmp.ne.s32.totalorder %s204, %s205
      %p217 = scmp.eq.s32.totalorder %s24, 1
      %p218 = por %p216, %p217
      %p220 = scmp.ne.s32.totalorder %s205, %s219
      %p221 = scmp.eq.s32.totalorder %s24, 0
      %p222 = por %p220, %p221
      %s223 = ssub.s32 %s25, %s37
      %p224 = scmp.eq.s32.totalorder %s223, 0
      %s226 = sadd.s32 %s225, 1
      %s227 = scalar_select %p224, %s225, %s226
      %p230 = pneg %p224
      %p231 = scmp.eq.s32.totalorder %s18, 1
      %p232 = por %p230, %p231
      %p233 = scmp.ne.s32.totalorder %s225, %s228
      %p234 = scmp.eq.s32.totalorder %s18, 0
      %p235 = por %p233, %p234
      %p236 = scmp.ne.s32.totalorder %s225, %s228
      %p237 = scmp.eq.s32.totalorder %s23, 1
      %p238 = por %p236, %p237
      %p239 = scmp.ne.s32.totalorder %s228, %s229
      %p240 = scmp.eq.s32.totalorder %s23, 0
      %p241 = por %p239, %p240
      %p242 = scmp.ne.s32.totalorder %s228, %s229
      %p243 = scmp.eq.s32.totalorder %s24, 1
      %p244 = por %p242, %p243
      %p246 = scmp.ne.s32.totalorder %s229, %s245
      %p247 = scmp.eq.s32.totalorder %s24, 0
      %p248 = por %p246, %p247
      %p249 = scmp.le.s32.totalorder 1, %s18
      %p250 = scmp.lt.s32.totalorder %s18, 3
      %p251 = pnand %p249, %p250
      %p252 = pneg %p251
      // Predicated region
      $region9: #{graphsage_forward.5} parent=5 // pred_check
        _
      $region10: #{graphsage_forward.5} parent=5 // pred_check_branch
        %254 = sbr.rel (%p251) target = $region12
      $region11: #{graphsage_forward.5} parent=5 // pred_region
        %s255 = ssub.s32 %s18, 1
        // Predicated region
        $region13: #{graphsage_forward.5} parent=11 // pred_check
          %p256 = pneg %p79
        $region14: #{graphsage_forward.5} parent=11 // pred_check_branch
          %258 = sbr.rel (%p256) target = $region16
        $region15: #{graphsage_forward.5} parent=11 // pred_region
          %260 = vsyncadd [#allocation6], 0
          %s261 = sshll.u32 %s1, 4
          %s262 = int_to_ptr.hbm [resolvable:$true] %s261
          %s263 = sshll.u32 [#allocation5], 4
          %s264 = int_to_ptr.vmem [resolvable:$true] %s263
          %269 = dma.hbm_to_vmem [thread:$0]  %s262, 4096, %s264, [#allocation6], 128, 128, 8
        $region16: #{graphsage_forward.5} parent=11 // pred_fallthru
          _
        // Predicated region
        $region17: #{graphsage_forward.5} parent=11 // pred_check
          %p270 = pneg %p152
        $region18: #{graphsage_forward.5} parent=11 // pred_check_branch
          %272 = sbr.rel (%p270) target = $region20
        $region19: #{graphsage_forward.5} parent=11 // pred_region
          %274 = vsyncadd [#allocation6], 0
          %s275 = sshll.u32 %s4, 4
          %s276 = int_to_ptr.hbm [resolvable:$true] %s275
          %s277 = sshll.u32 [#allocation8], 4
          %s278 = int_to_ptr.vmem [resolvable:$true] %s277
          %283 = dma.hbm_to_vmem [thread:$0]  %s276, 4096, %s278, [#allocation6], 128, 128, 8
        $region20: #{graphsage_forward.5} parent=11 // pred_fallthru
          _
        // Predicated region
        $region21: #{graphsage_forward.5} parent=11 // pred_check
          %p284 = pneg %p173
        $region22: #{graphsage_forward.5} parent=11 // pred_check_branch
          %286 = sbr.rel (%p284) target = $region24
        $region23: #{graphsage_forward.5} parent=11 // pred_region
          _
        $region24: #{graphsage_forward.5} parent=11 // pred_fallthru
          _
        // Predicated region
        $region25: #{graphsage_forward.5} parent=11 // pred_check
          %p287 = pneg %p194
        $region26: #{graphsage_forward.5} parent=11 // pred_check_branch
          %289 = sbr.rel (%p287) target = $region28
        $region27: #{graphsage_forward.5} parent=11 // pred_region
          _
        $region28: #{graphsage_forward.5} parent=11 // pred_fallthru
          _
        // Predicated region
        $region29: #{graphsage_forward.5} parent=11 // pred_check
          %p290 = pneg %p215
        $region30: #{graphsage_forward.5} parent=11 // pred_check_branch
          %292 = sbr.rel (%p290) target = $region32
        $region31: #{graphsage_forward.5} parent=11 // pred_region
          _
        $region32: #{graphsage_forward.5} parent=11 // pred_fallthru
          _
      $region12: #{graphsage_forward.5} parent=5 // pred_fallthru
        _
      %p293 = scmp.lt.s32.totalorder %s18, 2
      // Predicated region
      $region33: #{graphsage_forward.5} parent=5 // pred_check
        %p294 = pneg %p293
      $region34: #{graphsage_forward.5} parent=5 // pred_check_branch
        %296 = sbr.rel (%p294) target = $region36
      $region35: #{graphsage_forward.5} parent=5 // pred_region
        // Predicated region
        $region37: #{graphsage_forward.5} parent=35 // pred_check
          %p297 = pneg %p52
        $region38: #{graphsage_forward.5} parent=35 // pred_check_branch
          %299 = sbr.rel (%p297) target = $region40
        $region39: #{graphsage_forward.5} parent=35 // pred_region
          %s300 = sand.u32 %s18, 1
          %s301 = scalar_lea.sflag [#allocation4], %s300
          %s302 = sand.u32 %s42, 1
          %s303 = smul.addr %s302, 128
          %s304 = scalar_lea.vmem [#allocation3], %s303
          %s305 = smul.u32 32, %s26
          %307 = vsyncadd %s301, 0
          %s308 = smul.addr %s305, 2
          %s309 = sadd.s32 %s25, %s308
          %s310 = smul.addr %s309, 4
          %s311 = scalar_lea.hbm %s0, %s310
          %s312 = sshll.u32 %s311, 4
          %s313 = int_to_ptr.hbm [resolvable:$true] %s312
          %s314 = sshll.u32 %s304, 4
          %s315 = int_to_ptr.vmem [resolvable:$true] %s314
          %320 = dma.hbm_to_vmem [thread:$0]  %s313, 2048, %s315, %s301, 128, 64, 4
        $region40: #{graphsage_forward.5} parent=35 // pred_fallthru
          _
        // Predicated region
        $region41: #{graphsage_forward.5} parent=35 // pred_check
          %p321 = pneg %p99
        $region42: #{graphsage_forward.5} parent=35 // pred_check_branch
          %323 = sbr.rel (%p321) target = $region44
        $region43: #{graphsage_forward.5} parent=35 // pred_region
          %s324 = sand.u32 %s18, 1
          %s325 = scalar_lea.sflag [#allocation4], %s324
          %s326 = sand.u32 %s89, 1
          %s327 = smul.addr %s326, 128
          %s328 = scalar_lea.vmem [#allocation7], %s327
          %s329 = smul.u32 16, %s25
          %331 = vsyncadd %s325, 0
          %s332 = smul.addr %s329, 8
          %s333 = scalar_lea.hbm %s2, %s332
          %s334 = sshll.u32 %s333, 4
          %s335 = int_to_ptr.hbm [resolvable:$true] %s334
          %s336 = sshll.u32 %s328, 4
          %s337 = int_to_ptr.vmem [resolvable:$true] %s336
          %342 = dma.hbm_to_vmem [thread:$0]  %s335, 2048, %s337, %s325, 128, 128, 8
        $region44: #{graphsage_forward.5} parent=35 // pred_fallthru
          _
        // Predicated region
        $region45: #{graphsage_forward.5} parent=35 // pred_check
          %p343 = pneg %p125
        $region46: #{graphsage_forward.5} parent=35 // pred_check_branch
          %345 = sbr.rel (%p343) target = $region48
        $region47: #{graphsage_forward.5} parent=35 // pred_region
          %s346 = smul.u32 16, %s25
          %p347 = scmp.lt.s32.totalorder %s346, 31
          %s348 = scalar_select %p347, %s346, 31
          %s349 = smul.addr %s348, 8
          %s350 = scalar_lea.vmem %s3, %s349
          %s351 = smul.u32 16, %s25
        $region48: #{graphsage_forward.5} parent=35 // pred_fallthru
          _
      $region36: #{graphsage_forward.5} parent=5 // pred_fallthru
        _
      %p352 = scmp.le.s32.totalorder 1, %s18
      %p353 = scmp.lt.s32.totalorder %s18, 3
      %p354 = pnand %p352, %p353
      %p355 = pneg %p354
      // Predicated region
      $region49: #{graphsage_forward.5} parent=5 // pred_check
        _
      $region50: #{graphsage_forward.5} parent=5 // pred_check_branch
        %357 = sbr.rel (%p354) target = $region52
      $region51: #{graphsage_forward.5} parent=5 // pred_region
        %s358 = ssub.s32 %s18, 1
        %s359 = sand.u32 %s23, 1
        %s360 = scalar_lea.sflag [#allocation4], %s359
        %s361 = sand.u32 %s45, 1
        %s362 = smul.addr %s361, 128
        %s363 = scalar_lea.vmem [#allocation3], %s362
        // Predicated region
        $region53: #{graphsage_forward.5} parent=51 // pred_check
          %p364 = pneg %p58
        $region54: #{graphsage_forward.5} parent=51 // pred_check_branch
          %366 = sbr.rel (%p364) target = $region56
        $region55: #{graphsage_forward.5} parent=51 // pred_region
          %368 = dma.done %s360, 2048
        $region56: #{graphsage_forward.5} parent=51 // pred_fallthru
          _
        // Predicated region
        $region57: #{graphsage_forward.5} parent=51 // pred_check
          %p369 = pneg %p79
        $region58: #{graphsage_forward.5} parent=51 // pred_check_branch
          %371 = sbr.rel (%p369) target = $region60
        $region59: #{graphsage_forward.5} parent=51 // pred_region
          %373 = dma.done [#allocation6], 4096
        $region60: #{graphsage_forward.5} parent=51 // pred_fallthru
          _
        %s374 = sand.u32 %s23, 1
        %s375 = scalar_lea.sflag [#allocation4], %s374
        %s376 = sand.u32 %s92, 1
        %s377 = smul.addr %s376, 128
        %s378 = scalar_lea.vmem [#allocation7], %s377
        // Predicated region
        $region61: #{graphsage_forward.5} parent=51 // pred_check
          %p379 = pneg %p105
        $region62: #{graphsage_forward.5} parent=51 // pred_check_branch
          %381 = sbr.rel (%p379) target = $region64
        $region63: #{graphsage_forward.5} parent=51 // pred_region
          %383 = dma.done %s375, 2048
        $region64: #{graphsage_forward.5} parent=51 // pred_fallthru
          _
        // Predicated region
        $region65: #{graphsage_forward.5} parent=51 // pred_check
          %p384 = pneg %p152
        $region66: #{graphsage_forward.5} parent=51 // pred_check_branch
          %386 = sbr.rel (%p384) target = $region68
        $region67: #{graphsage_forward.5} parent=51 // pred_region
          %388 = dma.done [#allocation6], 4096
        $region68: #{graphsage_forward.5} parent=51 // pred_fallthru
          _
        %s389 = sand.u32 %s23, 1
        %s390 = scalar_lea.sflag [#allocation4], %s389
        %s391 = sand.u32 %s45, 1
        %s392 = smul.addr %s391, 128
        %s393 = scalar_lea.vmem [#allocation3], %s392
        %p394 = pneg %p58
        %p395 = pneg %p55
        %p396 = pneg %p79
        %p397 = pneg %p76
        %s398 = sand.u32 %s23, 1
        %s399 = scalar_lea.sflag [#allocation4], %s398
        %s400 = sand.u32 %s92, 1
        %s401 = smul.addr %s400, 128
        %s402 = scalar_lea.vmem [#allocation7], %s401
        %p403 = pneg %p105
        %p404 = pneg %p102
        %s405 = smul.u32 16, %s27
        %p406 = scmp.lt.s32.totalorder %s405, 31
        %s407 = scalar_select %p406, %s405, 31
        %s408 = smul.addr %s407, 8
        %s409 = scalar_lea.vmem %s3, %s408
        %p410 = pneg %p131
        %p411 = pneg %p128
        %p412 = pneg %p152
        %p413 = pneg %p149
        %p414 = pneg %p173
        %p415 = pneg %p170
        %p416 = pneg %p194
        %p417 = pneg %p191
        %p418 = pneg %p215
        %p419 = pneg %p212
        %p420 = pneg %p241
        %p421 = pneg %p238
        %s422 = smul.u32 16, %s27
        %p423 = scmp.lt.s32.totalorder %s422, 31
        %s424 = scalar_select %p423, %s422, 31
        %s425 = smul.addr %s424, 8
        %s426 = scalar_lea.vmem %s8, %s425
        %s427 = smul.u32 32, %s28
        %s428 = smul.u32 16, %s27
        %s429 = smul.u32 16, %s27
        %p430 = scmp.lt.s32.totalorder %s429, 31
        %s431 = scalar_select %p430, %s429, 31
        %s432 = smul.addr %s431, 8
        %s433 = scalar_lea.vmem %s3, %s432
        %s434 = smul.u32 16, %s27
        %s435 = smul.u32 16, %s27
        %p436 = scmp.lt.s32.totalorder %s435, 31
        %s437 = scalar_select %p436, %s435, 31
        %s438 = smul.addr %s437, 8
        %s439 = scalar_lea.vmem %s8, %s438
        %s440 = smul.u32 16, %s27
        %p441 = scmp.eq.s32.totalorder %s28, 0
        // Predicated region
        $region69: #{graphsage_forward.5} parent=51 // pred_check
          %p442 = pneg %p441
        $region70: #{graphsage_forward.5} parent=51 // pred_check_branch
          %444 = sbr.rel (%p442) target = $region72
        $region71: #{graphsage_forward.5} parent=51 // pred_region
          %445 = vst [vmem:[#allocation2] sm:$0xff] -1e+30
          %446 = vst [vmem:[#allocation2 + $0x8] sm:$0xff] -1e+30
          %447 = vst [vmem:[#allocation2 + $0x10] sm:$0xff] -1e+30
          %448 = vst [vmem:[#allocation2 + $0x18] sm:$0xff] -1e+30
          %449 = vst [vmem:[#allocation2 + $0x20] sm:$0xff] -1e+30
          %450 = vst [vmem:[#allocation2 + $0x28] sm:$0xff] -1e+30
          %451 = vst [vmem:[#allocation2 + $0x30] sm:$0xff] -1e+30
          %452 = vst [vmem:[#allocation2 + $0x38] sm:$0xff] -1e+30
          %453 = vst [vmem:[#allocation2 + $0x40] sm:$0xff] -1e+30
          %454 = vst [vmem:[#allocation2 + $0x48] sm:$0xff] -1e+30
          %455 = vst [vmem:[#allocation2 + $0x50] sm:$0xff] -1e+30
          %456 = vst [vmem:[#allocation2 + $0x58] sm:$0xff] -1e+30
          %457 = vst [vmem:[#allocation2 + $0x60] sm:$0xff] -1e+30
          %458 = vst [vmem:[#allocation2 + $0x68] sm:$0xff] -1e+30
          %459 = vst [vmem:[#allocation2 + $0x70] sm:$0xff] -1e+30
          %460 = vst [vmem:[#allocation2 + $0x78] sm:$0xff] -1e+30
        $region72: #{graphsage_forward.5} parent=51 // pred_fallthru
          _
        %s461 = smul.u32 %s28, 256
        %v462 = vld [vmem:[#allocation2] sm:$0xff]
        %v463 = vld [vmem:[#allocation2 + $0x8] sm:$0xff]
        %v464 = vld [vmem:[#allocation2 + $0x10] sm:$0xff]
        %v465 = vld [vmem:[#allocation2 + $0x18] sm:$0xff]
        %v466 = vld [vmem:[#allocation2 + $0x20] sm:$0xff]
        %v467 = vld [vmem:[#allocation2 + $0x28] sm:$0xff]
        %v468 = vld [vmem:[#allocation2 + $0x30] sm:$0xff]
        %v469 = vld [vmem:[#allocation2 + $0x38] sm:$0xff]
        %v470 = vld [vmem:[#allocation2 + $0x40] sm:$0xff]
        %v471 = vld [vmem:[#allocation2 + $0x48] sm:$0xff]
        %v472 = vld [vmem:[#allocation2 + $0x50] sm:$0xff]
        %v473 = vld [vmem:[#allocation2 + $0x58] sm:$0xff]
        %v474 = vld [vmem:[#allocation2 + $0x60] sm:$0xff]
        %v475 = vld [vmem:[#allocation2 + $0x68] sm:$0xff]
        %v476 = vld [vmem:[#allocation2 + $0x70] sm:$0xff]
        %v477 = vld [vmem:[#allocation2 + $0x78] sm:$0xff]
        loop: start=0, step=1, limit=32
        $region73: #{graphsage_forward.5} parent=51 // loop_pre_header
          _
        $region74: #{graphsage_forward.5} parent=51 // loop_header
          %s479 = sphi 0, %s483
          %p480 = scmp.ge.s32.totalorder %s479, 32
          %v484 = vphi %v462, %v1561
          %v485 = vphi %v463, %v1562
          %v486 = vphi %v464, %v1563
          %v487 = vphi %v465, %v1564
          %v488 = vphi %v466, %v1565
          %v489 = vphi %v467, %v1566
          %v490 = vphi %v468, %v1567
          %v491 = vphi %v469, %v1568
          %v492 = vphi %v470, %v1569
          %v493 = vphi %v471, %v1570
          %v494 = vphi %v472, %v1571
          %v495 = vphi %v473, %v1572
          %v496 = vphi %v474, %v1573
          %v497 = vphi %v475, %v1574
          %v498 = vphi %v476, %v1575
          %v499 = vphi %v477, %v1576
        $region75: #{graphsage_forward.5} parent=51 // loop_header_branch
          %482 = sbr.rel (%p480) target = $region79
        $region76: #{graphsage_forward.5} parent=51 // loop_body
          %s500 = smul.u32 %s479, 8
          %s501 = sadd.s32 %s461, %s500
          %s502 = sshra.s32 %s500, 3
          %s503 = sand.u32 %s500, 7
          %s504 = smul.addr %s502, 4
          %s505 = scalar_lea.vmem %s363, %s504 [#allocation3]
          %v506 = vld [vmem:[%s505] sm:$0xf]
          %s507 = scalar_lea.vmem [#allocation5], %s501
          %v508 = vld [vmem:[%s507] sm:$0xff]
          %v509 = vunpack.c.l.bf16 %v506
          %vm510 = vcmp.gt.f32.partialorder %v509, 0.0
          %v511 = vsel %vm510, 0.0, -1e+30
          %v513 = vrot.slane %v508, 1
          %v514 = vperm.slane %v511, 0
          %v515 = vlaneseq
          %v516 = vshrl.u32 %v515, 7
          %518 = vset.pattern.permute.xlu0 %v516
          %519 = vperm.xlu0 %518, %v514
          %v520 = vpop.permute.xlu0 %519
          %v521 = vlaneseq
          %v522 = vshrl.u32 %v521, 7
          %v523 = vadd.s32 %v522, 8
          %524 = vset.pattern.permute.xlu0 %v523
          %525 = vperm.xlu0 %524, %v514
          %v526 = vpop.permute.xlu0 %525
          %v527 = vlaneseq
          %v528 = vshrl.u32 %v527, 7
          %v529 = vadd.s32 %v528, 16
          %530 = vset.pattern.permute.xlu0 %v529
          %531 = vperm.xlu0 %530, %v514
          %v532 = vpop.permute.xlu0 %531
          %v533 = vlaneseq
          %v534 = vshrl.u32 %v533, 7
          %v535 = vadd.s32 %v534, 24
          %536 = vset.pattern.permute.xlu0 %v535
          %537 = vperm.xlu0 %536, %v514
          %v538 = vpop.permute.xlu0 %537
          %v539 = vlaneseq
          %v540 = vshrl.u32 %v539, 7
          %v541 = vadd.s32 %v540, 32
          %542 = vset.pattern.permute.xlu0 %v541
          %543 = vperm.xlu0 %542, %v514
          %v544 = vpop.permute.xlu0 %543
          %v545 = vlaneseq
          %v546 = vshrl.u32 %v545, 7
          %v547 = vadd.s32 %v546, 40
          %548 = vset.pattern.permute.xlu0 %v547
          %549 = vperm.xlu0 %548, %v514
          %v550 = vpop.permute.xlu0 %549
          %v551 = vlaneseq
          %v552 = vshrl.u32 %v551, 7
          %v553 = vadd.s32 %v552, 48
          %554 = vset.pattern.permute.xlu0 %v553
          %555 = vperm.xlu0 %554, %v514
          %v556 = vpop.permute.xlu0 %555
          %v557 = vlaneseq
          %v558 = vshrl.u32 %v557, 7
          %v559 = vadd.s32 %v558, 56
          %560 = vset.pattern.permute.xlu0 %v559
          %561 = vperm.xlu0 %560, %v514
          %v562 = vpop.permute.xlu0 %561
          %v563 = vlaneseq
          %v564 = vshrl.u32 %v563, 7
          %v565 = vadd.s32 %v564, 64
          %566 = vset.pattern.permute.xlu0 %v565
          %567 = vperm.xlu0 %566, %v514
          %v568 = vpop.permute.xlu0 %567
          %v569 = vlaneseq
          %v570 = vshrl.u32 %v569, 7
          %v571 = vadd.s32 %v570, 72
          %572 = vset.pattern.permute.xlu0 %v571
          %573 = vperm.xlu0 %572, %v514
          %v574 = vpop.permute.xlu0 %573
          %v575 = vlaneseq
          %v576 = vshrl.u32 %v575, 7
          %v577 = vadd.s32 %v576, 80
          %578 = vset.pattern.permute.xlu0 %v577
          %579 = vperm.xlu0 %578, %v514
          %v580 = vpop.permute.xlu0 %579
          %v581 = vlaneseq
          %v582 = vshrl.u32 %v581, 7
          %v583 = vadd.s32 %v582, 88
          %584 = vset.pattern.permute.xlu0 %v583
          %585 = vperm.xlu0 %584, %v514
          %v586 = vpop.permute.xlu0 %585
          %v587 = vlaneseq
          %v588 = vshrl.u32 %v587, 7
          %v589 = vadd.s32 %v588, 96
          %590 = vset.pattern.permute.xlu0 %v589
          %591 = vperm.xlu0 %590, %v514
          %v592 = vpop.permute.xlu0 %591
          %v593 = vlaneseq
          %v594 = vshrl.u32 %v593, 7
          %v595 = vadd.s32 %v594, 104
          %596 = vset.pattern.permute.xlu0 %v595
          %597 = vperm.xlu0 %596, %v514
          %v598 = vpop.permute.xlu0 %597
          %v599 = vlaneseq
          %v600 = vshrl.u32 %v599, 7
          %v601 = vadd.s32 %v600, 112
          %602 = vset.pattern.permute.xlu0 %v601
          %603 = vperm.xlu0 %602, %v514
          %v604 = vpop.permute.xlu0 %603
          %v605 = vlaneseq
          %v606 = vshrl.u32 %v605, 7
          %v607 = vadd.s32 %v606, 120
          %608 = vset.pattern.permute.xlu0 %v607
          %609 = vperm.xlu0 %608, %v514
          %v610 = vpop.permute.xlu0 %609
          %v611 = vperm.slane %v511, 1
          %v612 = vlaneseq
          %v613 = vshrl.u32 %v612, 7
          %615 = vset.pattern.permute.xlu0 %v613
          %616 = vperm.xlu0 %615, %v611
          %v617 = vpop.permute.xlu0 %616
          %v618 = vlaneseq
          %v619 = vshrl.u32 %v618, 7
          %v620 = vadd.s32 %v619, 8
          %621 = vset.pattern.permute.xlu0 %v620
          %622 = vperm.xlu0 %621, %v611
          %v623 = vpop.permute.xlu0 %622
          %v624 = vlaneseq
          %v625 = vshrl.u32 %v624, 7
          %v626 = vadd.s32 %v625, 16
          %627 = vset.pattern.permute.xlu0 %v626
          %628 = vperm.xlu0 %627, %v611
          %v629 = vpop.permute.xlu0 %628
          %v630 = vlaneseq
          %v631 = vshrl.u32 %v630, 7
          %v632 = vadd.s32 %v631, 24
          %633 = vset.pattern.permute.xlu0 %v632
          %634 = vperm.xlu0 %633, %v611
          %v635 = vpop.permute.xlu0 %634
          %v636 = vlaneseq
          %v637 = vshrl.u32 %v636, 7
          %v638 = vadd.s32 %v637, 32
          %639 = vset.pattern.permute.xlu0 %v638
          %640 = vperm.xlu0 %639, %v611
          %v641 = vpop.permute.xlu0 %640
          %v642 = vlaneseq
          %v643 = vshrl.u32 %v642, 7
          %v644 = vadd.s32 %v643, 40
          %645 = vset.pattern.permute.xlu0 %v644
          %646 = vperm.xlu0 %645, %v611
          %v647 = vpop.permute.xlu0 %646
          %v648 = vlaneseq
          %v649 = vshrl.u32 %v648, 7
          %v650 = vadd.s32 %v649, 48
          %651 = vset.pattern.permute.xlu0 %v650
          %652 = vperm.xlu0 %651, %v611
          %v653 = vpop.permute.xlu0 %652
          %v654 = vlaneseq
          %v655 = vshrl.u32 %v654, 7
          %v656 = vadd.s32 %v655, 56
          %657 = vset.pattern.permute.xlu0 %v656
          %658 = vperm.xlu0 %657, %v611
          %v659 = vpop.permute.xlu0 %658
          %v660 = vlaneseq
          %v661 = vshrl.u32 %v660, 7
          %v662 = vadd.s32 %v661, 64
          %663 = vset.pattern.permute.xlu0 %v662
          %664 = vperm.xlu0 %663, %v611
          %v665 = vpop.permute.xlu0 %664
          %v666 = vlaneseq
          %v667 = vshrl.u32 %v666, 7
          %v668 = vadd.s32 %v667, 72
          %669 = vset.pattern.permute.xlu0 %v668
          %670 = vperm.xlu0 %669, %v611
          %v671 = vpop.permute.xlu0 %670
          %v672 = vlaneseq
          %v673 = vshrl.u32 %v672, 7
          %v674 = vadd.s32 %v673, 80
          %675 = vset.pattern.permute.xlu0 %v674
          %676 = vperm.xlu0 %675, %v611
          %v677 = vpop.permute.xlu0 %676
          %v678 = vlaneseq
          %v679 = vshrl.u32 %v678, 7
          %v680 = vadd.s32 %v679, 88
          %681 = vset.pattern.permute.xlu0 %v680
          %682 = vperm.xlu0 %681, %v611
          %v683 = vpop.permute.xlu0 %682
          %v684 = vlaneseq
          %v685 = vshrl.u32 %v684, 7
          %v686 = vadd.s32 %v685, 96
          %687 = vset.pattern.permute.xlu0 %v686
          %688 = vperm.xlu0 %687, %v611
          %v689 = vpop.permute.xlu0 %688
          %v690 = vlaneseq
          %v691 = vshrl.u32 %v690, 7
          %v692 = vadd.s32 %v691, 104
          %693 = vset.pattern.permute.xlu0 %v692
          %694 = vperm.xlu0 %693, %v611
          %v695 = vpop.permute.xlu0 %694
          %v696 = vlaneseq
          %v697 = vshrl.u32 %v696, 7
          %v698 = vadd.s32 %v697, 112
          %699 = vset.pattern.permute.xlu0 %v698
          %700 = vperm.xlu0 %699, %v611
          %v701 = vpop.permute.xlu0 %700
          %v702 = vlaneseq
          %v703 = vshrl.u32 %v702, 7
          %v704 = vadd.s32 %v703, 120
          %705 = vset.pattern.permute.xlu0 %v704
          %706 = vperm.xlu0 %705, %v611
          %v707 = vpop.permute.xlu0 %706
          %v708 = vperm.slane %v508, 0
          %v709 = vperm.slane %v513, 0
          %v712 = vadd.f32 %v708, %v520
          %v713 = vadd.f32 %v708, %v526
          %v714 = vadd.f32 %v708, %v532
          %v715 = vadd.f32 %v708, %v538
          %v716 = vadd.f32 %v708, %v544
          %v717 = vadd.f32 %v708, %v550
          %v718 = vadd.f32 %v708, %v556
          %v719 = vadd.f32 %v708, %v562
          %v720 = vadd.f32 %v708, %v568
          %v721 = vadd.f32 %v708, %v574
          %v722 = vadd.f32 %v708, %v580
          %v723 = vadd.f32 %v708, %v586
          %v724 = vadd.f32 %v708, %v592
          %v725 = vadd.f32 %v708, %v598
          %v726 = vadd.f32 %v708, %v604
          %v727 = vadd.f32 %v708, %v610
          %v728 = vadd.f32 %v709, %v617
          %v729 = vadd.f32 %v709, %v623
          %v730 = vadd.f32 %v709, %v629
          %v731 = vadd.f32 %v709, %v635
          %v732 = vadd.f32 %v709, %v641
          %v733 = vadd.f32 %v709, %v647
          %v734 = vadd.f32 %v709, %v653
          %v735 = vadd.f32 %v709, %v659
          %v736 = vadd.f32 %v709, %v665
          %v737 = vadd.f32 %v709, %v671
          %v738 = vadd.f32 %v709, %v677
          %v739 = vadd.f32 %v709, %v683
          %v740 = vadd.f32 %v709, %v689
          %v741 = vadd.f32 %v709, %v695
          %v742 = vadd.f32 %v709, %v701
          %v743 = vadd.f32 %v709, %v707
          %v744 = vmax.f32 %v712, %v728
          %v745 = vmax.f32 %v713, %v729
          %v746 = vmax.f32 %v714, %v730
          %v747 = vmax.f32 %v715, %v731
          %v748 = vmax.f32 %v716, %v732
          %v749 = vmax.f32 %v717, %v733
          %v750 = vmax.f32 %v718, %v734
          %v751 = vmax.f32 %v719, %v735
          %v752 = vmax.f32 %v720, %v736
          %v753 = vmax.f32 %v721, %v737
          %v754 = vmax.f32 %v722, %v738
          %v755 = vmax.f32 %v723, %v739
          %v756 = vmax.f32 %v724, %v740
          %v757 = vmax.f32 %v725, %v741
          %v758 = vmax.f32 %v726, %v742
          %v759 = vmax.f32 %v727, %v743
          %v760 = vmax.f32 %v484, %v744
          %v761 = vmax.f32 %v485, %v745
          %v762 = vmax.f32 %v486, %v746
          %v763 = vmax.f32 %v487, %v747
          %v764 = vmax.f32 %v488, %v748
          %v765 = vmax.f32 %v489, %v749
          %v766 = vmax.f32 %v490, %v750
          %v767 = vmax.f32 %v491, %v751
          %v768 = vmax.f32 %v492, %v752
          %v769 = vmax.f32 %v493, %v753
          %v770 = vmax.f32 %v494, %v754
          %v771 = vmax.f32 %v495, %v755
          %v772 = vmax.f32 %v496, %v756
          %v773 = vmax.f32 %v497, %v757
          %v774 = vmax.f32 %v498, %v758
          %v775 = vmax.f32 %v499, %v759
          %776 = vst [vmem:[#allocation1] sm:$0xff] %v508
          %s777 = scalar_lea.vmem [#allocation1], 2
          %v778 = vld [vmem:[%s777] ss:$9 sm:$0xff]
          %s779 = scalar_lea.vmem [#allocation1], 3
          %v780 = vld [vmem:[%s779] ss:$9 sm:$0xff]
          %v781 = vperm.slane %v511, 2
          %v782 = vlaneseq
          %v783 = vshrl.u32 %v782, 7
          %785 = vset.pattern.permute.xlu0 %v783
          %786 = vperm.xlu0 %785, %v781
          %v787 = vpop.permute.xlu0 %786
          %v788 = vlaneseq
          %v789 = vshrl.u32 %v788, 7
          %v790 = vadd.s32 %v789, 8
          %791 = vset.pattern.permute.xlu0 %v790
          %792 = vperm.xlu0 %791, %v781
          %v793 = vpop.permute.xlu0 %792
          %v794 = vlaneseq
          %v795 = vshrl.u32 %v794, 7
          %v796 = vadd.s32 %v795, 16
          %797 = vset.pattern.permute.xlu0 %v796
          %798 = vperm.xlu0 %797, %v781
          %v799 = vpop.permute.xlu0 %798
          %v800 = vlaneseq
          %v801 = vshrl.u32 %v800, 7
          %v802 = vadd.s32 %v801, 24
          %803 = vset.pattern.permute.xlu0 %v802
          %804 = vperm.xlu0 %803, %v781
          %v805 = vpop.permute.xlu0 %804
          %v806 = vlaneseq
          %v807 = vshrl.u32 %v806, 7
          %v808 = vadd.s32 %v807, 32
          %809 = vset.pattern.permute.xlu0 %v808
          %810 = vperm.xlu0 %809, %v781
          %v811 = vpop.permute.xlu0 %810
          %v812 = vlaneseq
          %v813 = vshrl.u32 %v812, 7
          %v814 = vadd.s32 %v813, 40
          %815 = vset.pattern.permute.xlu0 %v814
          %816 = vperm.xlu0 %815, %v781
          %v817 = vpop.permute.xlu0 %816
          %v818 = vlaneseq
          %v819 = vshrl.u32 %v818, 7
          %v820 = vadd.s32 %v819, 48
          %821 = vset.pattern.permute.xlu0 %v820
          %822 = vperm.xlu0 %821, %v781
          %v823 = vpop.permute.xlu0 %822
          %v824 = vlaneseq
          %v825 = vshrl.u32 %v824, 7
          %v826 = vadd.s32 %v825, 56
          %827 = vset.pattern.permute.xlu0 %v826
          %828 = vperm.xlu0 %827, %v781
          %v829 = vpop.permute.xlu0 %828
          %v830 = vlaneseq
          %v831 = vshrl.u32 %v830, 7
          %v832 = vadd.s32 %v831, 64
          %833 = vset.pattern.permute.xlu0 %v832
          %834 = vperm.xlu0 %833, %v781
          %v835 = vpop.permute.xlu0 %834
          %v836 = vlaneseq
          %v837 = vshrl.u32 %v836, 7
          %v838 = vadd.s32 %v837, 72
          %839 = vset.pattern.permute.xlu0 %v838
          %840 = vperm.xlu0 %839, %v781
          %v841 = vpop.permute.xlu0 %840
          %v842 = vlaneseq
          %v843 = vshrl.u32 %v842, 7
          %v844 = vadd.s32 %v843, 80
          %845 = vset.pattern.permute.xlu0 %v844
          %846 = vperm.xlu0 %845, %v781
          %v847 = vpop.permute.xlu0 %846
          %v848 = vlaneseq
          %v849 = vshrl.u32 %v848, 7
          %v850 = vadd.s32 %v849, 88
          %851 = vset.pattern.permute.xlu0 %v850
          %852 = vperm.xlu0 %851, %v781
          %v853 = vpop.permute.xlu0 %852
          %v854 = vlaneseq
          %v855 = vshrl.u32 %v854, 7
          %v856 = vadd.s32 %v855, 96
          %857 = vset.pattern.permute.xlu0 %v856
          %858 = vperm.xlu0 %857, %v781
          %v859 = vpop.permute.xlu0 %858
          %v860 = vlaneseq
          %v861 = vshrl.u32 %v860, 7
          %v862 = vadd.s32 %v861, 104
          %863 = vset.pattern.permute.xlu0 %v862
          %864 = vperm.xlu0 %863, %v781
          %v865 = vpop.permute.xlu0 %864
          %v866 = vlaneseq
          %v867 = vshrl.u32 %v866, 7
          %v868 = vadd.s32 %v867, 112
          %869 = vset.pattern.permute.xlu0 %v868
          %870 = vperm.xlu0 %869, %v781
          %v871 = vpop.permute.xlu0 %870
          %v872 = vlaneseq
          %v873 = vshrl.u32 %v872, 7
          %v874 = vadd.s32 %v873, 120
          %875 = vset.pattern.permute.xlu0 %v874
          %876 = vperm.xlu0 %875, %v781
          %v877 = vpop.permute.xlu0 %876
          %v878 = vperm.slane %v511, 3
          %v879 = vlaneseq
          %v880 = vshrl.u32 %v879, 7
          %882 = vset.pattern.permute.xlu0 %v880
          %883 = vperm.xlu0 %882, %v878
          %v884 = vpop.permute.xlu0 %883
          %v885 = vlaneseq
          %v886 = vshrl.u32 %v885, 7
          %v887 = vadd.s32 %v886, 8
          %888 = vset.pattern.permute.xlu0 %v887
          %889 = vperm.xlu0 %888, %v878
          %v890 = vpop.permute.xlu0 %889
          %v891 = vlaneseq
          %v892 = vshrl.u32 %v891, 7
          %v893 = vadd.s32 %v892, 16
          %894 = vset.pattern.permute.xlu0 %v893
          %895 = vperm.xlu0 %894, %v878
          %v896 = vpop.permute.xlu0 %895
          %v897 = vlaneseq
          %v898 = vshrl.u32 %v897, 7
          %v899 = vadd.s32 %v898, 24
          %900 = vset.pattern.permute.xlu0 %v899
          %901 = vperm.xlu0 %900, %v878
          %v902 = vpop.permute.xlu0 %901
          %v903 = vlaneseq
          %v904 = vshrl.u32 %v903, 7
          %v905 = vadd.s32 %v904, 32
          %906 = vset.pattern.permute.xlu0 %v905
          %907 = vperm.xlu0 %906, %v878
          %v908 = vpop.permute.xlu0 %907
          %v909 = vlaneseq
          %v910 = vshrl.u32 %v909, 7
          %v911 = vadd.s32 %v910, 40
          %912 = vset.pattern.permute.xlu0 %v911
          %913 = vperm.xlu0 %912, %v878
          %v914 = vpop.permute.xlu0 %913
          %v915 = vlaneseq
          %v916 = vshrl.u32 %v915, 7
          %v917 = vadd.s32 %v916, 48
          %918 = vset.pattern.permute.xlu0 %v917
          %919 = vperm.xlu0 %918, %v878
          %v920 = vpop.permute.xlu0 %919
          %v921 = vlaneseq
          %v922 = vshrl.u32 %v921, 7
          %v923 = vadd.s32 %v922, 56
          %924 = vset.pattern.permute.xlu0 %v923
          %925 = vperm.xlu0 %924, %v878
          %v926 = vpop.permute.xlu0 %925
          %v927 = vlaneseq
          %v928 = vshrl.u32 %v927, 7
          %v929 = vadd.s32 %v928, 64
          %930 = vset.pattern.permute.xlu0 %v929
          %931 = vperm.xlu0 %930, %v878
          %v932 = vpop.permute.xlu0 %931
          %v933 = vlaneseq
          %v934 = vshrl.u32 %v933, 7
          %v935 = vadd.s32 %v934, 72
          %936 = vset.pattern.permute.xlu0 %v935
          %937 = vperm.xlu0 %936, %v878
          %v938 = vpop.permute.xlu0 %937
          %v939 = vlaneseq
          %v940 = vshrl.u32 %v939, 7
          %v941 = vadd.s32 %v940, 80
          %942 = vset.pattern.permute.xlu0 %v941
          %943 = vperm.xlu0 %942, %v878
          %v944 = vpop.permute.xlu0 %943
          %v945 = vlaneseq
          %v946 = vshrl.u32 %v945, 7
          %v947 = vadd.s32 %v946, 88
          %948 = vset.pattern.permute.xlu0 %v947
          %949 = vperm.xlu0 %948, %v878
          %v950 = vpop.permute.xlu0 %949
          %v951 = vlaneseq
          %v952 = vshrl.u32 %v951, 7
          %v953 = vadd.s32 %v952, 96
          %954 = vset.pattern.permute.xlu0 %v953
          %955 = vperm.xlu0 %954, %v878
          %v956 = vpop.permute.xlu0 %955
          %v957 = vlaneseq
          %v958 = vshrl.u32 %v957, 7
          %v959 = vadd.s32 %v958, 104
          %960 = vset.pattern.permute.xlu0 %v959
          %961 = vperm.xlu0 %960, %v878
          %v962 = vpop.permute.xlu0 %961
          %v963 = vlaneseq
          %v964 = vshrl.u32 %v963, 7
          %v965 = vadd.s32 %v964, 112
          %966 = vset.pattern.permute.xlu0 %v965
          %967 = vperm.xlu0 %966, %v878
          %v968 = vpop.permute.xlu0 %967
          %v969 = vlaneseq
          %v970 = vshrl.u32 %v969, 7
          %v971 = vadd.s32 %v970, 120
          %972 = vset.pattern.permute.xlu0 %v971
          %973 = vperm.xlu0 %972, %v878
          %v974 = vpop.permute.xlu0 %973
          %v975 = vperm.slane %v778, 0
          %v976 = vperm.slane %v780, 0
          %v979 = vadd.f32 %v975, %v787
          %v980 = vadd.f32 %v975, %v793
          %v981 = vadd.f32 %v975, %v799
          %v982 = vadd.f32 %v975, %v805
          %v983 = vadd.f32 %v975, %v811
          %v984 = vadd.f32 %v975, %v817
          %v985 = vadd.f32 %v975, %v823
          %v986 = vadd.f32 %v975, %v829
          %v987 = vadd.f32 %v975, %v835
          %v988 = vadd.f32 %v975, %v841
          %v989 = vadd.f32 %v975, %v847
          %v990 = vadd.f32 %v975, %v853
          %v991 = vadd.f32 %v975, %v859
          %v992 = vadd.f32 %v975, %v865
          %v993 = vadd.f32 %v975, %v871
          %v994 = vadd.f32 %v975, %v877
          %v995 = vadd.f32 %v976, %v884
          %v996 = vadd.f32 %v976, %v890
          %v997 = vadd.f32 %v976, %v896
          %v998 = vadd.f32 %v976, %v902
          %v999 = vadd.f32 %v976, %v908
          %v1000 = vadd.f32 %v976, %v914
          %v1001 = vadd.f32 %v976, %v920
          %v1002 = vadd.f32 %v976, %v926
          %v1003 = vadd.f32 %v976, %v932
          %v1004 = vadd.f32 %v976, %v938
          %v1005 = vadd.f32 %v976, %v944
          %v1006 = vadd.f32 %v976, %v950
          %v1007 = vadd.f32 %v976, %v956
          %v1008 = vadd.f32 %v976, %v962
          %v1009 = vadd.f32 %v976, %v968
          %v1010 = vadd.f32 %v976, %v974
          %v1011 = vmax.f32 %v979, %v995
          %v1012 = vmax.f32 %v980, %v996
          %v1013 = vmax.f32 %v981, %v997
          %v1014 = vmax.f32 %v982, %v998
          %v1015 = vmax.f32 %v983, %v999
          %v1016 = vmax.f32 %v984, %v1000
          %v1017 = vmax.f32 %v985, %v1001
          %v1018 = vmax.f32 %v986, %v1002
          %v1019 = vmax.f32 %v987, %v1003
          %v1020 = vmax.f32 %v988, %v1004
          %v1021 = vmax.f32 %v989, %v1005
          %v1022 = vmax.f32 %v990, %v1006
          %v1023 = vmax.f32 %v991, %v1007
          %v1024 = vmax.f32 %v992, %v1008
          %v1025 = vmax.f32 %v993, %v1009
          %v1026 = vmax.f32 %v994, %v1010
          %v1027 = vmax.f32 %v760, %v1011
          %v1028 = vmax.f32 %v761, %v1012
          %v1029 = vmax.f32 %v762, %v1013
          %v1030 = vmax.f32 %v763, %v1014
          %v1031 = vmax.f32 %v764, %v1015
          %v1032 = vmax.f32 %v765, %v1016
          %v1033 = vmax.f32 %v766, %v1017
          %v1034 = vmax.f32 %v767, %v1018
          %v1035 = vmax.f32 %v768, %v1019
          %v1036 = vmax.f32 %v769, %v1020
          %v1037 = vmax.f32 %v770, %v1021
          %v1038 = vmax.f32 %v771, %v1022
          %v1039 = vmax.f32 %v772, %v1023
          %v1040 = vmax.f32 %v773, %v1024
          %v1041 = vmax.f32 %v774, %v1025
          %v1042 = vmax.f32 %v775, %v1026
          %1043 = vst [vmem:[#allocation1] sm:$0xff] %v508
          %s1044 = scalar_lea.vmem [#allocation1], 4
          %v1045 = vld [vmem:[%s1044] ss:$9 sm:$0xff]
          %s1046 = scalar_lea.vmem [#allocation1], 5
          %v1047 = vld [vmem:[%s1046] ss:$9 sm:$0xff]
          %v1048 = vperm.slane %v511, 4
          %v1049 = vlaneseq
          %v1050 = vshrl.u32 %v1049, 7
          %1052 = vset.pattern.permute.xlu0 %v1050
          %1053 = vperm.xlu0 %1052, %v1048
          %v1054 = vpop.permute.xlu0 %1053
          %v1055 = vlaneseq
          %v1056 = vshrl.u32 %v1055, 7
          %v1057 = vadd.s32 %v1056, 8
          %1058 = vset.pattern.permute.xlu0 %v1057
          %1059 = vperm.xlu0 %1058, %v1048
          %v1060 = vpop.permute.xlu0 %1059
          %v1061 = vlaneseq
          %v1062 = vshrl.u32 %v1061, 7
          %v1063 = vadd.s32 %v1062, 16
          %1064 = vset.pattern.permute.xlu0 %v1063
          %1065 = vperm.xlu0 %1064, %v1048
          %v1066 = vpop.permute.xlu0 %1065
          %v1067 = vlaneseq
          %v1068 = vshrl.u32 %v1067, 7
          %v1069 = vadd.s32 %v1068, 24
          %1070 = vset.pattern.permute.xlu0 %v1069
          %1071 = vperm.xlu0 %1070, %v1048
          %v1072 = vpop.permute.xlu0 %1071
          %v1073 = vlaneseq
          %v1074 = vshrl.u32 %v1073, 7
          %v1075 = vadd.s32 %v1074, 32
          %1076 = vset.pattern.permute.xlu0 %v1075
          %1077 = vperm.xlu0 %1076, %v1048
          %v1078 = vpop.permute.xlu0 %1077
          %v1079 = vlaneseq
          %v1080 = vshrl.u32 %v1079, 7
          %v1081 = vadd.s32 %v1080, 40
          %1082 = vset.pattern.permute.xlu0 %v1081
          %1083 = vperm.xlu0 %1082, %v1048
          %v1084 = vpop.permute.xlu0 %1083
          %v1085 = vlaneseq
          %v1086 = vshrl.u32 %v1085, 7
          %v1087 = vadd.s32 %v1086, 48
          %1088 = vset.pattern.permute.xlu0 %v1087
          %1089 = vperm.xlu0 %1088, %v1048
          %v1090 = vpop.permute.xlu0 %1089
          %v1091 = vlaneseq
          %v1092 = vshrl.u32 %v1091, 7
          %v1093 = vadd.s32 %v1092, 56
          %1094 = vset.pattern.permute.xlu0 %v1093
          %1095 = vperm.xlu0 %1094, %v1048
          %v1096 = vpop.permute.xlu0 %1095
          %v1097 = vlaneseq
          %v1098 = vshrl.u32 %v1097, 7
          %v1099 = vadd.s32 %v1098, 64
          %1100 = vset.pattern.permute.xlu0 %v1099
          %1101 = vperm.xlu0 %1100, %v1048
          %v1102 = vpop.permute.xlu0 %1101
          %v1103 = vlaneseq
          %v1104 = vshrl.u32 %v1103, 7
          %v1105 = vadd.s32 %v1104, 72
          %1106 = vset.pattern.permute.xlu0 %v1105
          %1107 = vperm.xlu0 %1106, %v1048
          %v1108 = vpop.permute.xlu0 %1107
          %v1109 = vlaneseq
          %v1110 = vshrl.u32 %v1109, 7
          %v1111 = vadd.s32 %v1110, 80
          %1112 = vset.pattern.permute.xlu0 %v1111
          %1113 = vperm.xlu0 %1112, %v1048
          %v1114 = vpop.permute.xlu0 %1113
          %v1115 = vlaneseq
          %v1116 = vshrl.u32 %v1115, 7
          %v1117 = vadd.s32 %v1116, 88
          %1118 = vset.pattern.permute.xlu0 %v1117
          %1119 = vperm.xlu0 %1118, %v1048
          %v1120 = vpop.permute.xlu0 %1119
          %v1121 = vlaneseq
          %v1122 = vshrl.u32 %v1121, 7
          %v1123 = vadd.s32 %v1122, 96
          %1124 = vset.pattern.permute.xlu0 %v1123
          %1125 = vperm.xlu0 %1124, %v1048
          %v1126 = vpop.permute.xlu0 %1125
          %v1127 = vlaneseq
          %v1128 = vshrl.u32 %v1127, 7
          %v1129 = vadd.s32 %v1128, 104
          %1130 = vset.pattern.permute.xlu0 %v1129
          %1131 = vperm.xlu0 %1130, %v1048
          %v1132 = vpop.permute.xlu0 %1131
          %v1133 = vlaneseq
          %v1134 = vshrl.u32 %v1133, 7
          %v1135 = vadd.s32 %v1134, 112
          %1136 = vset.pattern.permute.xlu0 %v1135
          %1137 = vperm.xlu0 %1136, %v1048
          %v1138 = vpop.permute.xlu0 %1137
          %v1139 = vlaneseq
          %v1140 = vshrl.u32 %v1139, 7
          %v1141 = vadd.s32 %v1140, 120
          %1142 = vset.pattern.permute.xlu0 %v1141
          %1143 = vperm.xlu0 %1142, %v1048
          %v1144 = vpop.permute.xlu0 %1143
          %v1145 = vperm.slane %v511, 5
          %v1146 = vlaneseq
          %v1147 = vshrl.u32 %v1146, 7
          %1149 = vset.pattern.permute.xlu0 %v1147
          %1150 = vperm.xlu0 %1149, %v1145
          %v1151 = vpop.permute.xlu0 %1150
          %v1152 = vlaneseq
          %v1153 = vshrl.u32 %v1152, 7
          %v1154 = vadd.s32 %v1153, 8
          %1155 = vset.pattern.permute.xlu0 %v1154
          %1156 = vperm.xlu0 %1155, %v1145
          %v1157 = vpop.permute.xlu0 %1156
          %v1158 = vlaneseq
          %v1159 = vshrl.u32 %v1158, 7
          %v1160 = vadd.s32 %v1159, 16
          %1161 = vset.pattern.permute.xlu0 %v1160
          %1162 = vperm.xlu0 %1161, %v1145
          %v1163 = vpop.permute.xlu0 %1162
          %v1164 = vlaneseq
          %v1165 = vshrl.u32 %v1164, 7
          %v1166 = vadd.s32 %v1165, 24
          %1167 = vset.pattern.permute.xlu0 %v1166
          %1168 = vperm.xlu0 %1167, %v1145
          %v1169 = vpop.permute.xlu0 %1168
          %v1170 = vlaneseq
          %v1171 = vshrl.u32 %v1170, 7
          %v1172 = vadd.s32 %v1171, 32
          %1173 = vset.pattern.permute.xlu0 %v1172
          %1174 = vperm.xlu0 %1173, %v1145
          %v1175 = vpop.permute.xlu0 %1174
          %v1176 = vlaneseq
          %v1177 = vshrl.u32 %v1176, 7
          %v1178 = vadd.s32 %v1177, 40
          %1179 = vset.pattern.permute.xlu0 %v1178
          %1180 = vperm.xlu0 %1179, %v1145
          %v1181 = vpop.permute.xlu0 %1180
          %v1182 = vlaneseq
          %v1183 = vshrl.u32 %v1182, 7
          %v1184 = vadd.s32 %v1183, 48
          %1185 = vset.pattern.permute.xlu0 %v1184
          %1186 = vperm.xlu0 %1185, %v1145
          %v1187 = vpop.permute.xlu0 %1186
          %v1188 = vlaneseq
          %v1189 = vshrl.u32 %v1188, 7
          %v1190 = vadd.s32 %v1189, 56
          %1191 = vset.pattern.permute.xlu0 %v1190
          %1192 = vperm.xlu0 %1191, %v1145
          %v1193 = vpop.permute.xlu0 %1192
          %v1194 = vlaneseq
          %v1195 = vshrl.u32 %v1194, 7
          %v1196 = vadd.s32 %v1195, 64
          %1197 = vset.pattern.permute.xlu0 %v1196
          %1198 = vperm.xlu0 %1197, %v1145
          %v1199 = vpop.permute.xlu0 %1198
          %v1200 = vlaneseq
          %v1201 = vshrl.u32 %v1200, 7
          %v1202 = vadd.s32 %v1201, 72
          %1203 = vset.pattern.permute.xlu0 %v1202
          %1204 = vperm.xlu0 %1203, %v1145
          %v1205 = vpop.permute.xlu0 %1204
          %v1206 = vlaneseq
          %v1207 = vshrl.u32 %v1206, 7
          %v1208 = vadd.s32 %v1207, 80
          %1209 = vset.pattern.permute.xlu0 %v1208
          %1210 = vperm.xlu0 %1209, %v1145
          %v1211 = vpop.permute.xlu0 %1210
          %v1212 = vlaneseq
          %v1213 = vshrl.u32 %v1212, 7
          %v1214 = vadd.s32 %v1213, 88
          %1215 = vset.pattern.permute.xlu0 %v1214
          %1216 = vperm.xlu0 %1215, %v1145
          %v1217 = vpop.permute.xlu0 %1216
          %v1218 = vlaneseq
          %v1219 = vshrl.u32 %v1218, 7
          %v1220 = vadd.s32 %v1219, 96
          %1221 = vset.pattern.permute.xlu0 %v1220
          %1222 = vperm.xlu0 %1221, %v1145
          %v1223 = vpop.permute.xlu0 %1222
          %v1224 = vlaneseq
          %v1225 = vshrl.u32 %v1224, 7
          %v1226 = vadd.s32 %v1225, 104
          %1227 = vset.pattern.permute.xlu0 %v1226
          %1228 = vperm.xlu0 %1227, %v1145
          %v1229 = vpop.permute.xlu0 %1228
          %v1230 = vlaneseq
          %v1231 = vshrl.u32 %v1230, 7
          %v1232 = vadd.s32 %v1231, 112
          %1233 = vset.pattern.permute.xlu0 %v1232
          %1234 = vperm.xlu0 %1233, %v1145
          %v1235 = vpop.permute.xlu0 %1234
          %v1236 = vlaneseq
          %v1237 = vshrl.u32 %v1236, 7
          %v1238 = vadd.s32 %v1237, 120
          %1239 = vset.pattern.permute.xlu0 %v1238
          %1240 = vperm.xlu0 %1239, %v1145
          %v1241 = vpop.permute.xlu0 %1240
          %v1242 = vperm.slane %v1045, 0
          %v1243 = vperm.slane %v1047, 0
          %v1246 = vadd.f32 %v1242, %v1054
          %v1247 = vadd.f32 %v1242, %v1060
          %v1248 = vadd.f32 %v1242, %v1066
          %v1249 = vadd.f32 %v1242, %v1072
          %v1250 = vadd.f32 %v1242, %v1078
          %v1251 = vadd.f32 %v1242, %v1084
          %v1252 = vadd.f32 %v1242, %v1090
          %v1253 = vadd.f32 %v1242, %v1096
          %v1254 = vadd.f32 %v1242, %v1102
          %v1255 = vadd.f32 %v1242, %v1108
          %v1256 = vadd.f32 %v1242, %v1114
          %v1257 = vadd.f32 %v1242, %v1120
          %v1258 = vadd.f32 %v1242, %v1126
          %v1259 = vadd.f32 %v1242, %v1132
          %v1260 = vadd.f32 %v1242, %v1138
          %v1261 = vadd.f32 %v1242, %v1144
          %v1262 = vadd.f32 %v1243, %v1151
          %v1263 = vadd.f32 %v1243, %v1157
          %v1264 = vadd.f32 %v1243, %v1163
          %v1265 = vadd.f32 %v1243, %v1169
          %v1266 = vadd.f32 %v1243, %v1175
          %v1267 = vadd.f32 %v1243, %v1181
          %v1268 = vadd.f32 %v1243, %v1187
          %v1269 = vadd.f32 %v1243, %v1193
          %v1270 = vadd.f32 %v1243, %v1199
          %v1271 = vadd.f32 %v1243, %v1205
          %v1272 = vadd.f32 %v1243, %v1211
          %v1273 = vadd.f32 %v1243, %v1217
          %v1274 = vadd.f32 %v1243, %v1223
          %v1275 = vadd.f32 %v1243, %v1229
          %v1276 = vadd.f32 %v1243, %v1235
          %v1277 = vadd.f32 %v1243, %v1241
          %v1278 = vmax.f32 %v1246, %v1262
          %v1279 = vmax.f32 %v1247, %v1263
          %v1280 = vmax.f32 %v1248, %v1264
          %v1281 = vmax.f32 %v1249, %v1265
          %v1282 = vmax.f32 %v1250, %v1266
          %v1283 = vmax.f32 %v1251, %v1267
          %v1284 = vmax.f32 %v1252, %v1268
          %v1285 = vmax.f32 %v1253, %v1269
          %v1286 = vmax.f32 %v1254, %v1270
          %v1287 = vmax.f32 %v1255, %v1271
          %v1288 = vmax.f32 %v1256, %v1272
          %v1289 = vmax.f32 %v1257, %v1273
          %v1290 = vmax.f32 %v1258, %v1274
          %v1291 = vmax.f32 %v1259, %v1275
          %v1292 = vmax.f32 %v1260, %v1276
          %v1293 = vmax.f32 %v1261, %v1277
          %v1294 = vmax.f32 %v1027, %v1278
          %v1295 = vmax.f32 %v1028, %v1279
          %v1296 = vmax.f32 %v1029, %v1280
          %v1297 = vmax.f32 %v1030, %v1281
          %v1298 = vmax.f32 %v1031, %v1282
          %v1299 = vmax.f32 %v1032, %v1283
          %v1300 = vmax.f32 %v1033, %v1284
          %v1301 = vmax.f32 %v1034, %v1285
          %v1302 = vmax.f32 %v1035, %v1286
          %v1303 = vmax.f32 %v1036, %v1287
          %v1304 = vmax.f32 %v1037, %v1288
          %v1305 = vmax.f32 %v1038, %v1289
          %v1306 = vmax.f32 %v1039, %v1290
          %v1307 = vmax.f32 %v1040, %v1291
          %v1308 = vmax.f32 %v1041, %v1292
          %v1309 = vmax.f32 %v1042, %v1293
          %1310 = vst [vmem:[#allocation1] sm:$0xff] %v508
          %s1311 = scalar_lea.vmem [#allocation1], 6
          %v1312 = vld [vmem:[%s1311] ss:$9 sm:$0xff]
          %s1313 = scalar_lea.vmem [#allocation1], 7
          %v1314 = vld [vmem:[%s1313] ss:$9 sm:$0xff]
          %v1315 = vperm.slane %v511, 6
          %v1316 = vlaneseq
          %v1317 = vshrl.u32 %v1316, 7
          %1319 = vset.pattern.permute.xlu0 %v1317
          %1320 = vperm.xlu0 %1319, %v1315
          %v1321 = vpop.permute.xlu0 %1320
          %v1322 = vlaneseq
          %v1323 = vshrl.u32 %v1322, 7
          %v1324 = vadd.s32 %v1323, 8
          %1325 = vset.pattern.permute.xlu0 %v1324
          %1326 = vperm.xlu0 %1325, %v1315
          %v1327 = vpop.permute.xlu0 %1326
          %v1328 = vlaneseq
          %v1329 = vshrl.u32 %v1328, 7
          %v1330 = vadd.s32 %v1329, 16
          %1331 = vset.pattern.permute.xlu0 %v1330
          %1332 = vperm.xlu0 %1331, %v1315
          %v1333 = vpop.permute.xlu0 %1332
          %v1334 = vlaneseq
          %v1335 = vshrl.u32 %v1334, 7
          %v1336 = vadd.s32 %v1335, 24
          %1337 = vset.pattern.permute.xlu0 %v1336
          %1338 = vperm.xlu0 %1337, %v1315
          %v1339 = vpop.permute.xlu0 %1338
          %v1340 = vlaneseq
          %v1341 = vshrl.u32 %v1340, 7
          %v1342 = vadd.s32 %v1341, 32
          %1343 = vset.pattern.permute.xlu0 %v1342
          %1344 = vperm.xlu0 %1343, %v1315
          %v1345 = vpop.permute.xlu0 %1344
          %v1346 = vlaneseq
          %v1347 = vshrl.u32 %v1346, 7
          %v1348 = vadd.s32 %v1347, 40
          %1349 = vset.pattern.permute.xlu0 %v1348
          %1350 = vperm.xlu0 %1349, %v1315
          %v1351 = vpop.permute.xlu0 %1350
          %v1352 = vlaneseq
          %v1353 = vshrl.u32 %v1352, 7
          %v1354 = vadd.s32 %v1353, 48
          %1355 = vset.pattern.permute.xlu0 %v1354
          %1356 = vperm.xlu0 %1355, %v1315
          %v1357 = vpop.permute.xlu0 %1356
          %v1358 = vlaneseq
          %v1359 = vshrl.u32 %v1358, 7
          %v1360 = vadd.s32 %v1359, 56
          %1361 = vset.pattern.permute.xlu0 %v1360
          %1362 = vperm.xlu0 %1361, %v1315
          %v1363 = vpop.permute.xlu0 %1362
          %v1364 = vlaneseq
          %v1365 = vshrl.u32 %v1364, 7
          %v1366 = vadd.s32 %v1365, 64
          %1367 = vset.pattern.permute.xlu0 %v1366
          %1368 = vperm.xlu0 %1367, %v1315
          %v1369 = vpop.permute.xlu0 %1368
          %v1370 = vlaneseq
          %v1371 = vshrl.u32 %v1370, 7
          %v1372 = vadd.s32 %v1371, 72
          %1373 = vset.pattern.permute.xlu0 %v1372
          %1374 = vperm.xlu0 %1373, %v1315
          %v1375 = vpop.permute.xlu0 %1374
          %v1376 = vlaneseq
          %v1377 = vshrl.u32 %v1376, 7
          %v1378 = vadd.s32 %v1377, 80
          %1379 = vset.pattern.permute.xlu0 %v1378
          %1380 = vperm.xlu0 %1379, %v1315
          %v1381 = vpop.permute.xlu0 %1380
          %v1382 = vlaneseq
          %v1383 = vshrl.u32 %v1382, 7
          %v1384 = vadd.s32 %v1383, 88
          %1385 = vset.pattern.permute.xlu0 %v1384
          %1386 = vperm.xlu0 %1385, %v1315
          %v1387 = vpop.permute.xlu0 %1386
          %v1388 = vlaneseq
          %v1389 = vshrl.u32 %v1388, 7
          %v1390 = vadd.s32 %v1389, 96
          %1391 = vset.pattern.permute.xlu0 %v1390
          %1392 = vperm.xlu0 %1391, %v1315
          %v1393 = vpop.permute.xlu0 %1392
          %v1394 = vlaneseq
          %v1395 = vshrl.u32 %v1394, 7
          %v1396 = vadd.s32 %v1395, 104
          %1397 = vset.pattern.permute.xlu0 %v1396
          %1398 = vperm.xlu0 %1397, %v1315
          %v1399 = vpop.permute.xlu0 %1398
          %v1400 = vlaneseq
          %v1401 = vshrl.u32 %v1400, 7
          %v1402 = vadd.s32 %v1401, 112
          %1403 = vset.pattern.permute.xlu0 %v1402
          %1404 = vperm.xlu0 %1403, %v1315
          %v1405 = vpop.permute.xlu0 %1404
          %v1406 = vlaneseq
          %v1407 = vshrl.u32 %v1406, 7
          %v1408 = vadd.s32 %v1407, 120
          %1409 = vset.pattern.permute.xlu0 %v1408
          %1410 = vperm.xlu0 %1409, %v1315
          %v1411 = vpop.permute.xlu0 %1410
          %v1412 = vperm.slane %v511, 7
          %v1413 = vlaneseq
          %v1414 = vshrl.u32 %v1413, 7
          %1416 = vset.pattern.permute.xlu0 %v1414
          %1417 = vperm.xlu0 %1416, %v1412
          %v1418 = vpop.permute.xlu0 %1417
          %v1419 = vlaneseq
          %v1420 = vshrl.u32 %v1419, 7
          %v1421 = vadd.s32 %v1420, 8
          %1422 = vset.pattern.permute.xlu0 %v1421
          %1423 = vperm.xlu0 %1422, %v1412
          %v1424 = vpop.permute.xlu0 %1423
          %v1425 = vlaneseq
          %v1426 = vshrl.u32 %v1425, 7
          %v1427 = vadd.s32 %v1426, 16
          %1428 = vset.pattern.permute.xlu0 %v1427
          %1429 = vperm.xlu0 %1428, %v1412
          %v1430 = vpop.permute.xlu0 %1429
          %v1431 = vlaneseq
          %v1432 = vshrl.u32 %v1431, 7
          %v1433 = vadd.s32 %v1432, 24
          %1434 = vset.pattern.permute.xlu0 %v1433
          %1435 = vperm.xlu0 %1434, %v1412
          %v1436 = vpop.permute.xlu0 %1435
          %v1437 = vlaneseq
          %v1438 = vshrl.u32 %v1437, 7
          %v1439 = vadd.s32 %v1438, 32
          %1440 = vset.pattern.permute.xlu0 %v1439
          %1441 = vperm.xlu0 %1440, %v1412
          %v1442 = vpop.permute.xlu0 %1441
          %v1443 = vlaneseq
          %v1444 = vshrl.u32 %v1443, 7
          %v1445 = vadd.s32 %v1444, 40
          %1446 = vset.pattern.permute.xlu0 %v1445
          %1447 = vperm.xlu0 %1446, %v1412
          %v1448 = vpop.permute.xlu0 %1447
          %v1449 = vlaneseq
          %v1450 = vshrl.u32 %v1449, 7
          %v1451 = vadd.s32 %v1450, 48
          %1452 = vset.pattern.permute.xlu0 %v1451
          %1453 = vperm.xlu0 %1452, %v1412
          %v1454 = vpop.permute.xlu0 %1453
          %v1455 = vlaneseq
          %v1456 = vshrl.u32 %v1455, 7
          %v1457 = vadd.s32 %v1456, 56
          %1458 = vset.pattern.permute.xlu0 %v1457
          %1459 = vperm.xlu0 %1458, %v1412
          %v1460 = vpop.permute.xlu0 %1459
          %v1461 = vlaneseq
          %v1462 = vshrl.u32 %v1461, 7
          %v1463 = vadd.s32 %v1462, 64
          %1464 = vset.pattern.permute.xlu0 %v1463
          %1465 = vperm.xlu0 %1464, %v1412
          %v1466 = vpop.permute.xlu0 %1465
          %v1467 = vlaneseq
          %v1468 = vshrl.u32 %v1467, 7
          %v1469 = vadd.s32 %v1468, 72
          %1470 = vset.pattern.permute.xlu0 %v1469
          %1471 = vperm.xlu0 %1470, %v1412
          %v1472 = vpop.permute.xlu0 %1471
          %v1473 = vlaneseq
          %v1474 = vshrl.u32 %v1473, 7
          %v1475 = vadd.s32 %v1474, 80
          %1476 = vset.pattern.permute.xlu0 %v1475
          %1477 = vperm.xlu0 %1476, %v1412
          %v1478 = vpop.permute.xlu0 %1477
          %v1479 = vlaneseq
          %v1480 = vshrl.u32 %v1479, 7
          %v1481 = vadd.s32 %v1480, 88
          %1482 = vset.pattern.permute.xlu0 %v1481
          %1483 = vperm.xlu0 %1482, %v1412
          %v1484 = vpop.permute.xlu0 %1483
          %v1485 = vlaneseq
          %v1486 = vshrl.u32 %v1485, 7
          %v1487 = vadd.s32 %v1486, 96
          %1488 = vset.pattern.permute.xlu0 %v1487
          %1489 = vperm.xlu0 %1488, %v1412
          %v1490 = vpop.permute.xlu0 %1489
          %v1491 = vlaneseq
          %v1492 = vshrl.u32 %v1491, 7
          %v1493 = vadd.s32 %v1492, 104
          %1494 = vset.pattern.permute.xlu0 %v1493
          %1495 = vperm.xlu0 %1494, %v1412
          %v1496 = vpop.permute.xlu0 %1495
          %v1497 = vlaneseq
          %v1498 = vshrl.u32 %v1497, 7
          %v1499 = vadd.s32 %v1498, 112
          %1500 = vset.pattern.permute.xlu0 %v1499
          %1501 = vperm.xlu0 %1500, %v1412
          %v1502 = vpop.permute.xlu0 %1501
          %v1503 = vlaneseq
          %v1504 = vshrl.u32 %v1503, 7
          %v1505 = vadd.s32 %v1504, 120
          %1506 = vset.pattern.permute.xlu0 %v1505
          %1507 = vperm.xlu0 %1506, %v1412
          %v1508 = vpop.permute.xlu0 %1507
          %v1509 = vperm.slane %v1312, 0
          %v1510 = vperm.slane %v1314, 0
          %v1513 = vadd.f32 %v1509, %v1321
          %v1514 = vadd.f32 %v1509, %v1327
          %v1515 = vadd.f32 %v1509, %v1333
          %v1516 = vadd.f32 %v1509, %v1339
          %v1517 = vadd.f32 %v1509, %v1345
          %v1518 = vadd.f32 %v1509, %v1351
          %v1519 = vadd.f32 %v1509, %v1357
          %v1520 = vadd.f32 %v1509, %v1363
          %v1521 = vadd.f32 %v1509, %v1369
          %v1522 = vadd.f32 %v1509, %v1375
          %v1523 = vadd.f32 %v1509, %v1381
          %v1524 = vadd.f32 %v1509, %v1387
          %v1525 = vadd.f32 %v1509, %v1393
          %v1526 = vadd.f32 %v1509, %v1399
          %v1527 = vadd.f32 %v1509, %v1405
          %v1528 = vadd.f32 %v1509, %v1411
          %v1529 = vadd.f32 %v1510, %v1418
          %v1530 = vadd.f32 %v1510, %v1424
          %v1531 = vadd.f32 %v1510, %v1430
          %v1532 = vadd.f32 %v1510, %v1436
          %v1533 = vadd.f32 %v1510, %v1442
          %v1534 = vadd.f32 %v1510, %v1448
          %v1535 = vadd.f32 %v1510, %v1454
          %v1536 = vadd.f32 %v1510, %v1460
          %v1537 = vadd.f32 %v1510, %v1466
          %v1538 = vadd.f32 %v1510, %v1472
          %v1539 = vadd.f32 %v1510, %v1478
          %v1540 = vadd.f32 %v1510, %v1484
          %v1541 = vadd.f32 %v1510, %v1490
          %v1542 = vadd.f32 %v1510, %v1496
          %v1543 = vadd.f32 %v1510, %v1502
          %v1544 = vadd.f32 %v1510, %v1508
          %v1545 = vmax.f32 %v1513, %v1529
          %v1546 = vmax.f32 %v1514, %v1530
          %v1547 = vmax.f32 %v1515, %v1531
          %v1548 = vmax.f32 %v1516, %v1532
          %v1549 = vmax.f32 %v1517, %v1533
          %v1550 = vmax.f32 %v1518, %v1534
          %v1551 = vmax.f32 %v1519, %v1535
          %v1552 = vmax.f32 %v1520, %v1536
          %v1553 = vmax.f32 %v1521, %v1537
          %v1554 = vmax.f32 %v1522, %v1538
          %v1555 = vmax.f32 %v1523, %v1539
          %v1556 = vmax.f32 %v1524, %v1540
          %v1557 = vmax.f32 %v1525, %v1541
          %v1558 = vmax.f32 %v1526, %v1542
          %v1559 = vmax.f32 %v1527, %v1543
          %v1560 = vmax.f32 %v1528, %v1544
          %v1561 = vmax.f32 %v1294, %v1545
          %v1562 = vmax.f32 %v1295, %v1546
          %v1563 = vmax.f32 %v1296, %v1547
          %v1564 = vmax.f32 %v1297, %v1548
          %v1565 = vmax.f32 %v1298, %v1549
          %v1566 = vmax.f32 %v1299, %v1550
          %v1567 = vmax.f32 %v1300, %v1551
          %v1568 = vmax.f32 %v1301, %v1552
          %v1569 = vmax.f32 %v1302, %v1553
          %v1570 = vmax.f32 %v1303, %v1554
          %v1571 = vmax.f32 %v1304, %v1555
          %v1572 = vmax.f32 %v1305, %v1556
          %v1573 = vmax.f32 %v1306, %v1557
          %v1574 = vmax.f32 %v1307, %v1558
          %v1575 = vmax.f32 %v1308, %v1559
          %v1576 = vmax.f32 %v1309, %v1560
        $region77: #{graphsage_forward.5} parent=51 // loop_footer
          %s483 = sadd.s32 1, %s479
        $region78: #{graphsage_forward.5} parent=51 // loop_footer_branch
          %478 = sbr.rel target = $region74
        $region79: #{graphsage_forward.5} parent=51 // loop_exit
          _
        %1577 = vst [vmem:[#allocation2] sm:$0xff] %v484
        %1578 = vst [vmem:[#allocation2 + $0x8] sm:$0xff] %v485
        %1579 = vst [vmem:[#allocation2 + $0x10] sm:$0xff] %v486
        %1580 = vst [vmem:[#allocation2 + $0x18] sm:$0xff] %v487
        %1581 = vst [vmem:[#allocation2 + $0x20] sm:$0xff] %v488
        %1582 = vst [vmem:[#allocation2 + $0x28] sm:$0xff] %v489
        %1583 = vst [vmem:[#allocation2 + $0x30] sm:$0xff] %v490
        %1584 = vst [vmem:[#allocation2 + $0x38] sm:$0xff] %v491
        %1585 = vst [vmem:[#allocation2 + $0x40] sm:$0xff] %v492
        %1586 = vst [vmem:[#allocation2 + $0x48] sm:$0xff] %v493
        %1587 = vst [vmem:[#allocation2 + $0x50] sm:$0xff] %v494
        %1588 = vst [vmem:[#allocation2 + $0x58] sm:$0xff] %v495
        %1589 = vst [vmem:[#allocation2 + $0x60] sm:$0xff] %v496
        %1590 = vst [vmem:[#allocation2 + $0x68] sm:$0xff] %v497
        %1591 = vst [vmem:[#allocation2 + $0x70] sm:$0xff] %v498
        %1592 = vst [vmem:[#allocation2 + $0x78] sm:$0xff] %v499
        // Predicated region
        $region80: #{graphsage_forward.5} parent=51 // pred_check
          %p1593 = pneg %p441
        $region81: #{graphsage_forward.5} parent=51 // pred_check_branch
          %1595 = sbr.rel (%p1593) target = $region83
        $region82: #{graphsage_forward.5} parent=51 // pred_region
          %v1596 = vld [vmem:[%s433] sm:$0xff]
          %v1597 = vld [vmem:[%s433 + $0x8] sm:$0xff]
          %v1598 = vld [vmem:[%s433 + $0x10] sm:$0xff]
          %v1599 = vld [vmem:[%s433 + $0x18] sm:$0xff]
          %v1600 = vld [vmem:[%s433 + $0x20] sm:$0xff]
          %v1601 = vld [vmem:[%s433 + $0x28] sm:$0xff]
          %v1602 = vld [vmem:[%s433 + $0x30] sm:$0xff]
          %v1603 = vld [vmem:[%s433 + $0x38] sm:$0xff]
          %v1604 = vld [vmem:[%s433 + $0x40] sm:$0xff]
          %v1605 = vld [vmem:[%s433 + $0x48] sm:$0xff]
          %v1606 = vld [vmem:[%s433 + $0x50] sm:$0xff]
          %v1607 = vld [vmem:[%s433 + $0x58] sm:$0xff]
          %v1608 = vld [vmem:[%s433 + $0x60] sm:$0xff]
          %v1609 = vld [vmem:[%s433 + $0x68] sm:$0xff]
          %v1610 = vld [vmem:[%s433 + $0x70] sm:$0xff]
          %v1611 = vld [vmem:[%s433 + $0x78] sm:$0xff]
          %vm1612 = vcmp.gt.f32.partialorder %v1596, 0.0
          %vm1613 = vcmp.gt.f32.partialorder %v1597, 0.0
          %vm1614 = vcmp.gt.f32.partialorder %v1598, 0.0
          %vm1615 = vcmp.gt.f32.partialorder %v1599, 0.0
          %vm1616 = vcmp.gt.f32.partialorder %v1600, 0.0
          %vm1617 = vcmp.gt.f32.partialorder %v1601, 0.0
          %vm1618 = vcmp.gt.f32.partialorder %v1602, 0.0
          %vm1619 = vcmp.gt.f32.partialorder %v1603, 0.0
          %vm1620 = vcmp.gt.f32.partialorder %v1604, 0.0
          %vm1621 = vcmp.gt.f32.partialorder %v1605, 0.0
          %vm1622 = vcmp.gt.f32.partialorder %v1606, 0.0
          %vm1623 = vcmp.gt.f32.partialorder %v1607, 0.0
          %vm1624 = vcmp.gt.f32.partialorder %v1608, 0.0
          %vm1625 = vcmp.gt.f32.partialorder %v1609, 0.0
          %vm1626 = vcmp.gt.f32.partialorder %v1610, 0.0
          %vm1627 = vcmp.gt.f32.partialorder %v1611, 0.0
          %v1628 = vld [vmem:[#allocation2] sm:$0xff]
          %v1629 = vld [vmem:[#allocation2 + $0x8] sm:$0xff]
          %v1630 = vld [vmem:[#allocation2 + $0x10] sm:$0xff]
          %v1631 = vld [vmem:[#allocation2 + $0x18] sm:$0xff]
          %v1632 = vld [vmem:[#allocation2 + $0x20] sm:$0xff]
          %v1633 = vld [vmem:[#allocation2 + $0x28] sm:$0xff]
          %v1634 = vld [vmem:[#allocation2 + $0x30] sm:$0xff]
          %v1635 = vld [vmem:[#allocation2 + $0x38] sm:$0xff]
          %v1636 = vld [vmem:[#allocation2 + $0x40] sm:$0xff]
          %v1637 = vld [vmem:[#allocation2 + $0x48] sm:$0xff]
          %v1638 = vld [vmem:[#allocation2 + $0x50] sm:$0xff]
          %v1639 = vld [vmem:[#allocation2 + $0x58] sm:$0xff]
          %v1640 = vld [vmem:[#allocation2 + $0x60] sm:$0xff]
          %v1641 = vld [vmem:[#allocation2 + $0x68] sm:$0xff]
          %v1642 = vld [vmem:[#allocation2 + $0x70] sm:$0xff]
          %v1643 = vld [vmem:[#allocation2 + $0x78] sm:$0xff]
          %v1644 = vsel %vm1612, 1, 0
          %v1645 = vsel %vm1613, 1, 0
          %v1646 = vsel %vm1614, 1, 0
          %v1647 = vsel %vm1615, 1, 0
          %v1648 = vsel %vm1616, 1, 0
          %v1649 = vsel %vm1617, 1, 0
          %v1650 = vsel %vm1618, 1, 0
          %v1651 = vsel %vm1619, 1, 0
          %v1652 = vsel %vm1620, 1, 0
          %v1653 = vsel %vm1621, 1, 0
          %v1654 = vsel %vm1622, 1, 0
          %v1655 = vsel %vm1623, 1, 0
          %v1656 = vsel %vm1624, 1, 0
          %v1657 = vsel %vm1625, 1, 0
          %v1658 = vsel %vm1626, 1, 0
          %v1659 = vsel %vm1627, 1, 0
          %1660 = vset.pattern.permute.xlu0 0
          %1661 = vperm.xlu0 %1660, %v1644
          %v1662 = vpop.permute.xlu0 %1661
          %1663 = vset.pattern.permute.xlu0 0
          %1664 = vperm.xlu0 %1663, %v1645
          %v1665 = vpop.permute.xlu0 %1664
          %1666 = vset.pattern.permute.xlu0 0
          %1667 = vperm.xlu0 %1666, %v1646
          %v1668 = vpop.permute.xlu0 %1667
          %1669 = vset.pattern.permute.xlu0 0
          %1670 = vperm.xlu0 %1669, %v1647
          %v1671 = vpop.permute.xlu0 %1670
          %1672 = vset.pattern.permute.xlu0 0
          %1673 = vperm.xlu0 %1672, %v1648
          %v1674 = vpop.permute.xlu0 %1673
          %1675 = vset.pattern.permute.xlu0 0
          %1676 = vperm.xlu0 %1675, %v1649
          %v1677 = vpop.permute.xlu0 %1676
          %1678 = vset.pattern.permute.xlu0 0
          %1679 = vperm.xlu0 %1678, %v1650
          %v1680 = vpop.permute.xlu0 %1679
          %1681 = vset.pattern.permute.xlu0 0
          %1682 = vperm.xlu0 %1681, %v1651
          %v1683 = vpop.permute.xlu0 %1682
          %1684 = vset.pattern.permute.xlu0 0
          %1685 = vperm.xlu0 %1684, %v1652
          %v1686 = vpop.permute.xlu0 %1685
          %1687 = vset.pattern.permute.xlu0 0
          %1688 = vperm.xlu0 %1687, %v1653
          %v1689 = vpop.permute.xlu0 %1688
          %1690 = vset.pattern.permute.xlu0 0
          %1691 = vperm.xlu0 %1690, %v1654
          %v1692 = vpop.permute.xlu0 %1691
          %1693 = vset.pattern.permute.xlu0 0
          %1694 = vperm.xlu0 %1693, %v1655
          %v1695 = vpop.permute.xlu0 %1694
          %1696 = vset.pattern.permute.xlu0 0
          %1697 = vperm.xlu0 %1696, %v1656
          %v1698 = vpop.permute.xlu0 %1697
          %1699 = vset.pattern.permute.xlu0 0
          %1700 = vperm.xlu0 %1699, %v1657
          %v1701 = vpop.permute.xlu0 %1700
          %1702 = vset.pattern.permute.xlu0 0
          %1703 = vperm.xlu0 %1702, %v1658
          %v1704 = vpop.permute.xlu0 %1703
          %1705 = vset.pattern.permute.xlu0 0
          %1706 = vperm.xlu0 %1705, %v1659
          %v1707 = vpop.permute.xlu0 %1706
          %vm1708 = vcmp.eq.s32.totalorder %v1662, 1
          %vm1709 = vcmp.eq.s32.totalorder %v1665, 1
          %vm1710 = vcmp.eq.s32.totalorder %v1668, 1
          %vm1711 = vcmp.eq.s32.totalorder %v1671, 1
          %vm1712 = vcmp.eq.s32.totalorder %v1674, 1
          %vm1713 = vcmp.eq.s32.totalorder %v1677, 1
          %vm1714 = vcmp.eq.s32.totalorder %v1680, 1
          %vm1715 = vcmp.eq.s32.totalorder %v1683, 1
          %vm1716 = vcmp.eq.s32.totalorder %v1686, 1
          %vm1717 = vcmp.eq.s32.totalorder %v1689, 1
          %vm1718 = vcmp.eq.s32.totalorder %v1692, 1
          %vm1719 = vcmp.eq.s32.totalorder %v1695, 1
          %vm1720 = vcmp.eq.s32.totalorder %v1698, 1
          %vm1721 = vcmp.eq.s32.totalorder %v1701, 1
          %vm1722 = vcmp.eq.s32.totalorder %v1704, 1
          %vm1723 = vcmp.eq.s32.totalorder %v1707, 1
          %v1724 = vsel %vm1708, %v1628, 0.0
          %v1725 = vsel %vm1709, %v1629, 0.0
          %v1726 = vsel %vm1710, %v1630, 0.0
          %v1727 = vsel %vm1711, %v1631, 0.0
          %v1728 = vsel %vm1712, %v1632, 0.0
          %v1729 = vsel %vm1713, %v1633, 0.0
          %v1730 = vsel %vm1714, %v1634, 0.0
          %v1731 = vsel %vm1715, %v1635, 0.0
          %v1732 = vsel %vm1716, %v1636, 0.0
          %v1733 = vsel %vm1717, %v1637, 0.0
          %v1734 = vsel %vm1718, %v1638, 0.0
          %v1735 = vsel %vm1719, %v1639, 0.0
          %v1736 = vsel %vm1720, %v1640, 0.0
          %v1737 = vsel %vm1721, %v1641, 0.0
          %v1738 = vsel %vm1722, %v1642, 0.0
          %v1739 = vsel %vm1723, %v1643, 0.0
          %v1740 = vld [vmem:[%s378] sm:$0xff]
          %v1741 = vld [vmem:[%s378 + $0x8] sm:$0xff]
          %v1742 = vld [vmem:[%s378 + $0x10] sm:$0xff]
          %v1743 = vld [vmem:[%s378 + $0x18] sm:$0xff]
          %v1744 = vld [vmem:[%s378 + $0x20] sm:$0xff]
          %v1745 = vld [vmem:[%s378 + $0x28] sm:$0xff]
          %v1746 = vld [vmem:[%s378 + $0x30] sm:$0xff]
          %v1747 = vld [vmem:[%s378 + $0x38] sm:$0xff]
          %v1748 = vld [vmem:[%s378 + $0x40] sm:$0xff]
          %v1749 = vld [vmem:[%s378 + $0x48] sm:$0xff]
          %v1750 = vld [vmem:[%s378 + $0x50] sm:$0xff]
          %v1751 = vld [vmem:[%s378 + $0x58] sm:$0xff]
          %v1752 = vld [vmem:[%s378 + $0x60] sm:$0xff]
          %v1753 = vld [vmem:[%s378 + $0x68] sm:$0xff]
          %v1754 = vld [vmem:[%s378 + $0x70] sm:$0xff]
          %v1755 = vld [vmem:[%s378 + $0x78] sm:$0xff]
          %v1756 = vld [vmem:[#allocation8] sm:$0xff]
          %v1757 = vld [vmem:[#allocation8 + $0x8] sm:$0xff]
          %v1758 = vld [vmem:[#allocation8 + $0x10] sm:$0xff]
          %v1759 = vld [vmem:[#allocation8 + $0x18] sm:$0xff]
          %v1760 = vld [vmem:[#allocation8 + $0x20] sm:$0xff]
          %v1761 = vld [vmem:[#allocation8 + $0x28] sm:$0xff]
          %v1762 = vld [vmem:[#allocation8 + $0x30] sm:$0xff]
          %v1763 = vld [vmem:[#allocation8 + $0x38] sm:$0xff]
          %v1764 = vld [vmem:[#allocation8 + $0x40] sm:$0xff]
          %v1765 = vld [vmem:[#allocation8 + $0x48] sm:$0xff]
          %v1766 = vld [vmem:[#allocation8 + $0x50] sm:$0xff]
          %v1767 = vld [vmem:[#allocation8 + $0x58] sm:$0xff]
          %v1768 = vld [vmem:[#allocation8 + $0x60] sm:$0xff]
          %v1769 = vld [vmem:[#allocation8 + $0x68] sm:$0xff]
          %v1770 = vld [vmem:[#allocation8 + $0x70] sm:$0xff]
          %v1771 = vld [vmem:[#allocation8 + $0x78] sm:$0xff]
          %v1772 = vld [vmem:[#allocation8 + $0x80] sm:$0xff]
          %v1773 = vld [vmem:[#allocation8 + $0x88] sm:$0xff]
          %v1774 = vld [vmem:[#allocation8 + $0x90] sm:$0xff]
          %v1775 = vld [vmem:[#allocation8 + $0x98] sm:$0xff]
          %v1776 = vld [vmem:[#allocation8 + $0xa0] sm:$0xff]
          %v1777 = vld [vmem:[#allocation8 + $0xa8] sm:$0xff]
          %v1778 = vld [vmem:[#allocation8 + $0xb0] sm:$0xff]
          %v1779 = vld [vmem:[#allocation8 + $0xb8] sm:$0xff]
          %v1780 = vld [vmem:[#allocation8 + $0xc0] sm:$0xff]
          %v1781 = vld [vmem:[#allocation8 + $0xc8] sm:$0xff]
          %v1782 = vld [vmem:[#allocation8 + $0xd0] sm:$0xff]
          %v1783 = vld [vmem:[#allocation8 + $0xd8] sm:$0xff]
          %v1784 = vld [vmem:[#allocation8 + $0xe0] sm:$0xff]
          %v1785 = vld [vmem:[#allocation8 + $0xe8] sm:$0xff]
          %v1786 = vld [vmem:[#allocation8 + $0xf0] sm:$0xff]
          %v1787 = vld [vmem:[#allocation8 + $0xf8] sm:$0xff]
          %v1788 = vld [vmem:[%s5] sm:$0x1]
          %v1790 = vperm.slane %v1788, 0
          %1792 = vmatpush.msra.mxu0 %v1771
          %1793 = vmatpush.msra.mxu0 %v1770
          %1794 = vmatpush.msra.mxu0 %v1769
          %1795 = vmatpush.msra.mxu0 %v1768
          %1796 = vmatpush.msra.mxu0 %v1767
          %1797 = vmatpush.msra.mxu0 %v1766
          %1798 = vmatpush.msra.mxu0 %v1765
          %1799 = vmatpush.msra.mxu0 %v1764
          %1800 = vmatpush.msra.mxu0 %v1763
          %1801 = vmatpush.msra.mxu0 %v1762
          %1802 = vmatpush.msra.mxu0 %v1761
          %1803 = vmatpush.msra.mxu0 %v1760
          %1804 = vmatpush.msra.mxu0 %v1759
          %1805 = vmatpush.msra.mxu0 %v1758
          %1806 = vmatpush.msra.mxu0 %v1757
          %1807 = vmatpush.msra.mxu0 %v1756
          %1808 = vmatmul.f32.gmra.mxu0 %v1724
          %v1809 = vpop.f32.mrf.mxu0
          %v1810 = vadd.f32 %v1790, %v1809
          %1811 = vmatmul.f32.gmra.mxu0 %v1725
          %v1812 = vpop.f32.mrf.mxu0
          %v1813 = vadd.f32 %v1790, %v1812
          %1814 = vmatmul.f32.gmra.mxu0 %v1726
          %v1815 = vpop.f32.mrf.mxu0
          %v1816 = vadd.f32 %v1790, %v1815
          %1817 = vmatmul.f32.gmra.mxu0 %v1727
          %v1818 = vpop.f32.mrf.mxu0
          %v1819 = vadd.f32 %v1790, %v1818
          %1820 = vmatmul.f32.gmra.mxu0 %v1728
          %v1821 = vpop.f32.mrf.mxu0
          %v1822 = vadd.f32 %v1790, %v1821
          %1823 = vmatmul.f32.gmra.mxu0 %v1729
          %v1824 = vpop.f32.mrf.mxu0
          %v1825 = vadd.f32 %v1790, %v1824
          %1826 = vmatmul.f32.gmra.mxu0 %v1730
          %v1827 = vpop.f32.mrf.mxu0
          %v1828 = vadd.f32 %v1790, %v1827
          %1829 = vmatmul.f32.gmra.mxu0 %v1731
          %v1830 = vpop.f32.mrf.mxu0
          %v1831 = vadd.f32 %v1790, %v1830
          %1832 = vmatmul.f32.gmra.mxu0 %v1732
          %v1833 = vpop.f32.mrf.mxu0
          %v1834 = vadd.f32 %v1790, %v1833
          %1835 = vmatmul.f32.gmra.mxu0 %v1733
          %v1836 = vpop.f32.mrf.mxu0
          %v1837 = vadd.f32 %v1790, %v1836
          %1838 = vmatmul.f32.gmra.mxu0 %v1734
          %v1839 = vpop.f32.mrf.mxu0
          %v1840 = vadd.f32 %v1790, %v1839
          %1841 = vmatmul.f32.gmra.mxu0 %v1735
          %v1842 = vpop.f32.mrf.mxu0
          %v1843 = vadd.f32 %v1790, %v1842
          %1844 = vmatmul.f32.gmra.mxu0 %v1736
          %v1845 = vpop.f32.mrf.mxu0
          %v1846 = vadd.f32 %v1790, %v1845
          %1847 = vmatmul.f32.gmra.mxu0 %v1737
          %v1848 = vpop.f32.mrf.mxu0
          %v1849 = vadd.f32 %v1790, %v1848
          %1850 = vmatmul.f32.gmra.mxu0 %v1738
          %v1851 = vpop.f32.mrf.mxu0
          %v1852 = vadd.f32 %v1790, %v1851
          %1853 = vmatmul.f32.gmra.mxu0 %v1739
          %v1854 = vpop.f32.mrf.mxu0
          %v1855 = vadd.f32 %v1790, %v1854
          %1856 = vdwg.mxu0
          %1857 = vmatpush.msra.mxu0 %v1787
          %1858 = vmatpush.msra.mxu0 %v1786
          %1859 = vmatpush.msra.mxu0 %v1785
          %1860 = vmatpush.msra.mxu0 %v1784
          %1861 = vmatpush.msra.mxu0 %v1783
          %1862 = vmatpush.msra.mxu0 %v1782
          %1863 = vmatpush.msra.mxu0 %v1781
          %1864 = vmatpush.msra.mxu0 %v1780
          %1865 = vmatpush.msra.mxu0 %v1779
          %1866 = vmatpush.msra.mxu0 %v1778
          %1867 = vmatpush.msra.mxu0 %v1777
          %1868 = vmatpush.msra.mxu0 %v1776
          %1869 = vmatpush.msra.mxu0 %v1775
          %1870 = vmatpush.msra.mxu0 %v1774
          %1871 = vmatpush.msra.mxu0 %v1773
          %1872 = vmatpush.msra.mxu0 %v1772
          %1873 = vmatmul.f32.gmra.mxu0 %v1740
          %v1874 = vpop.f32.mrf.mxu0
          %v1875 = vadd.f32 %v1810, %v1874
          %1876 = vmatmul.f32.gmra.mxu0 %v1741
          %v1877 = vpop.f32.mrf.mxu0
          %v1878 = vadd.f32 %v1813, %v1877
          %1879 = vmatmul.f32.gmra.mxu0 %v1742
          %v1880 = vpop.f32.mrf.mxu0
          %v1881 = vadd.f32 %v1816, %v1880
          %1882 = vmatmul.f32.gmra.mxu0 %v1743
          %v1883 = vpop.f32.mrf.mxu0
          %v1884 = vadd.f32 %v1819, %v1883
          %1885 = vmatmul.f32.gmra.mxu0 %v1744
          %v1886 = vpop.f32.mrf.mxu0
          %v1887 = vadd.f32 %v1822, %v1886
          %1888 = vmatmul.f32.gmra.mxu0 %v1745
          %v1889 = vpop.f32.mrf.mxu0
          %v1890 = vadd.f32 %v1825, %v1889
          %1891 = vmatmul.f32.gmra.mxu0 %v1746
          %v1892 = vpop.f32.mrf.mxu0
          %v1893 = vadd.f32 %v1828, %v1892
          %1894 = vmatmul.f32.gmra.mxu0 %v1747
          %v1895 = vpop.f32.mrf.mxu0
          %v1896 = vadd.f32 %v1831, %v1895
          %1897 = vmatmul.f32.gmra.mxu0 %v1748
          %v1898 = vpop.f32.mrf.mxu0
          %v1899 = vadd.f32 %v1834, %v1898
          %1900 = vmatmul.f32.gmra.mxu0 %v1749
          %v1901 = vpop.f32.mrf.mxu0
          %v1902 = vadd.f32 %v1837, %v1901
          %1903 = vmatmul.f32.gmra.mxu0 %v1750
          %v1904 = vpop.f32.mrf.mxu0
          %v1905 = vadd.f32 %v1840, %v1904
          %1906 = vmatmul.f32.gmra.mxu0 %v1751
          %v1907 = vpop.f32.mrf.mxu0
          %v1908 = vadd.f32 %v1843, %v1907
          %1909 = vmatmul.f32.gmra.mxu0 %v1752
          %v1910 = vpop.f32.mrf.mxu0
          %v1911 = vadd.f32 %v1846, %v1910
          %1912 = vmatmul.f32.gmra.mxu0 %v1753
          %v1913 = vpop.f32.mrf.mxu0
          %v1914 = vadd.f32 %v1849, %v1913
          %1915 = vmatmul.f32.gmra.mxu0 %v1754
          %v1916 = vpop.f32.mrf.mxu0
          %v1917 = vadd.f32 %v1852, %v1916
          %1918 = vmatmul.f32.gmra.mxu0 %v1755
          %v1919 = vpop.f32.mrf.mxu0
          %v1920 = vadd.f32 %v1855, %v1919
          %1921 = vdwg.mxu0
          %v1922 = vld [vmem:[%s6] sm:$0xff]
          %v1923 = vld [vmem:[%s6 + $0x8] sm:$0xff]
          %v1924 = vld [vmem:[%s6 + $0x10] sm:$0xff]
          %v1925 = vld [vmem:[%s6 + $0x18] sm:$0xff]
          %v1926 = vld [vmem:[%s6 + $0x20] sm:$0xff]
          %v1927 = vld [vmem:[%s6 + $0x28] sm:$0xff]
          %v1928 = vld [vmem:[%s6 + $0x30] sm:$0xff]
          %v1929 = vld [vmem:[%s6 + $0x38] sm:$0xff]
          %v1930 = vld [vmem:[%s6 + $0x40] sm:$0xff]
          %v1931 = vld [vmem:[%s6 + $0x48] sm:$0xff]
          %v1932 = vld [vmem:[%s6 + $0x50] sm:$0xff]
          %v1933 = vld [vmem:[%s6 + $0x58] sm:$0xff]
          %v1934 = vld [vmem:[%s6 + $0x60] sm:$0xff]
          %v1935 = vld [vmem:[%s6 + $0x68] sm:$0xff]
          %v1936 = vld [vmem:[%s6 + $0x70] sm:$0xff]
          %v1937 = vld [vmem:[%s6 + $0x78] sm:$0xff]
          %v1938 = vld [vmem:[%s7] sm:$0x1]
          %v1940 = vperm.slane %v1938, 0
          %1942 = vmatpush.msra.mxu0 %v1937
          %1943 = vmatpush.msra.mxu0 %v1936
          %1944 = vmatpush.msra.mxu0 %v1935
          %1945 = vmatpush.msra.mxu0 %v1934
          %1946 = vmatpush.msra.mxu0 %v1933
          %1947 = vmatpush.msra.mxu0 %v1932
          %1948 = vmatpush.msra.mxu0 %v1931
          %1949 = vmatpush.msra.mxu0 %v1930
          %1950 = vmatpush.msra.mxu0 %v1929
          %1951 = vmatpush.msra.mxu0 %v1928
          %1952 = vmatpush.msra.mxu0 %v1927
          %1953 = vmatpush.msra.mxu0 %v1926
          %1954 = vmatpush.msra.mxu0 %v1925
          %1955 = vmatpush.msra.mxu0 %v1924
          %1956 = vmatpush.msra.mxu0 %v1923
          %1957 = vmatpush.msra.mxu0 %v1922
          %1958 = vmatmul.f32.gmra.mxu0 %v1875
          %v1959 = vpop.f32.mrf.mxu0
          %v1960 = vadd.f32 %v1940, %v1959
          %1961 = vmatmul.f32.gmra.mxu0 %v1878
          %v1962 = vpop.f32.mrf.mxu0
          %v1963 = vadd.f32 %v1940, %v1962
          %1964 = vmatmul.f32.gmra.mxu0 %v1881
          %v1965 = vpop.f32.mrf.mxu0
          %v1966 = vadd.f32 %v1940, %v1965
          %1967 = vmatmul.f32.gmra.mxu0 %v1884
          %v1968 = vpop.f32.mrf.mxu0
          %v1969 = vadd.f32 %v1940, %v1968
          %1970 = vmatmul.f32.gmra.mxu0 %v1887
          %v1971 = vpop.f32.mrf.mxu0
          %v1972 = vadd.f32 %v1940, %v1971
          %1973 = vmatmul.f32.gmra.mxu0 %v1890
          %v1974 = vpop.f32.mrf.mxu0
          %v1975 = vadd.f32 %v1940, %v1974
          %1976 = vmatmul.f32.gmra.mxu0 %v1893
          %v1977 = vpop.f32.mrf.mxu0
          %v1978 = vadd.f32 %v1940, %v1977
          %1979 = vmatmul.f32.gmra.mxu0 %v1896
          %v1980 = vpop.f32.mrf.mxu0
          %v1981 = vadd.f32 %v1940, %v1980
          %1982 = vmatmul.f32.gmra.mxu0 %v1899
          %v1983 = vpop.f32.mrf.mxu0
          %v1984 = vadd.f32 %v1940, %v1983
          %1985 = vmatmul.f32.gmra.mxu0 %v1902
          %v1986 = vpop.f32.mrf.mxu0
          %v1987 = vadd.f32 %v1940, %v1986
          %1988 = vmatmul.f32.gmra.mxu0 %v1905
          %v1989 = vpop.f32.mrf.mxu0
          %v1990 = vadd.f32 %v1940, %v1989
          %1991 = vmatmul.f32.gmra.mxu0 %v1908
          %v1992 = vpop.f32.mrf.mxu0
          %v1993 = vadd.f32 %v1940, %v1992
          %1994 = vmatmul.f32.gmra.mxu0 %v1911
          %v1995 = vpop.f32.mrf.mxu0
          %v1996 = vadd.f32 %v1940, %v1995
          %1997 = vmatmul.f32.gmra.mxu0 %v1914
          %v1998 = vpop.f32.mrf.mxu0
          %v1999 = vadd.f32 %v1940, %v1998
          %2000 = vmatmul.f32.gmra.mxu0 %v1917
          %v2001 = vpop.f32.mrf.mxu0
          %v2002 = vadd.f32 %v1940, %v2001
          %2003 = vmatmul.f32.gmra.mxu0 %v1920
          %v2004 = vpop.f32.mrf.mxu0
          %v2005 = vadd.f32 %v1940, %v2004
          %2006 = vdwg.mxu0
          %v2007 = vmax.f32 %v1960, 0.0
          %v2008 = vmax.f32 %v1963, 0.0
          %v2009 = vmax.f32 %v1966, 0.0
          %v2010 = vmax.f32 %v1969, 0.0
          %v2011 = vmax.f32 %v1972, 0.0
          %v2012 = vmax.f32 %v1975, 0.0
          %v2013 = vmax.f32 %v1978, 0.0
          %v2014 = vmax.f32 %v1981, 0.0
          %v2015 = vmax.f32 %v1984, 0.0
          %v2016 = vmax.f32 %v1987, 0.0
          %v2017 = vmax.f32 %v1990, 0.0
          %v2018 = vmax.f32 %v1993, 0.0
          %v2019 = vmax.f32 %v1996, 0.0
          %v2020 = vmax.f32 %v1999, 0.0
          %v2021 = vmax.f32 %v2002, 0.0
          %v2022 = vmax.f32 %v2005, 0.0
          %2023 = vst [vmem:[%s439] sm:$0xff] %v2007
          %2024 = vst [vmem:[%s439 + $0x8] sm:$0xff] %v2008
          %2025 = vst [vmem:[%s439 + $0x10] sm:$0xff] %v2009
          %2026 = vst [vmem:[%s439 + $0x18] sm:$0xff] %v2010
          %2027 = vst [vmem:[%s439 + $0x20] sm:$0xff] %v2011
          %2028 = vst [vmem:[%s439 + $0x28] sm:$0xff] %v2012
          %2029 = vst [vmem:[%s439 + $0x30] sm:$0xff] %v2013
          %2030 = vst [vmem:[%s439 + $0x38] sm:$0xff] %v2014
          %2031 = vst [vmem:[%s439 + $0x40] sm:$0xff] %v2015
          %2032 = vst [vmem:[%s439 + $0x48] sm:$0xff] %v2016
          %2033 = vst [vmem:[%s439 + $0x50] sm:$0xff] %v2017
          %2034 = vst [vmem:[%s439 + $0x58] sm:$0xff] %v2018
          %2035 = vst [vmem:[%s439 + $0x60] sm:$0xff] %v2019
          %2036 = vst [vmem:[%s439 + $0x68] sm:$0xff] %v2020
          %2037 = vst [vmem:[%s439 + $0x70] sm:$0xff] %v2021
          %2038 = vst [vmem:[%s439 + $0x78] sm:$0xff] %v2022
        $region83: #{graphsage_forward.5} parent=51 // pred_fallthru
          _
        %s2039 = smul.u32 16, %s27
        %p2040 = scmp.lt.s32.totalorder %s2039, 31
        %s2041 = scalar_select %p2040, %s2039, 31
        %s2042 = smul.addr %s2041, 8
        %s2043 = scalar_lea.vmem %s8, %s2042
        // Predicated region
        $region84: #{graphsage_forward.5} parent=51 // pred_check
          %p2044 = pneg %p238
        $region85: #{graphsage_forward.5} parent=51 // pred_check_branch
          %2046 = sbr.rel (%p2044) target = $region87
        $region86: #{graphsage_forward.5} parent=51 // pred_region
          %s2047 = smul.u32 16, %s27
        $region87: #{graphsage_forward.5} parent=51 // pred_fallthru
          _
      $region52: #{graphsage_forward.5} parent=5 // pred_fallthru
        _
      %p2048 = scmp.le.s32.totalorder 2, %s18
      // Predicated region
      $region88: #{graphsage_forward.5} parent=5 // pred_check
        %p2049 = pneg %p2048
      $region89: #{graphsage_forward.5} parent=5 // pred_check_branch
        %2051 = sbr.rel (%p2049) target = $region91
      $region90: #{graphsage_forward.5} parent=5 // pred_region
        %s2052 = ssub.s32 %s18, 2
        // Predicated region
        $region92: #{graphsage_forward.5} parent=90 // pred_check
          %p2053 = pneg %p244
        $region93: #{graphsage_forward.5} parent=90 // pred_check_branch
          %2055 = sbr.rel (%p2053) target = $region95
        $region94: #{graphsage_forward.5} parent=90 // pred_region
          %s2056 = smul.u32 16, %s29
          %p2057 = scmp.lt.s32.totalorder %s2056, 31
          %s2058 = scalar_select %p2057, %s2056, 31
          %s2059 = smul.addr %s2058, 8
          %s2060 = scalar_lea.vmem %s8, %s2059
        $region95: #{graphsage_forward.5} parent=90 // pred_fallthru
          _
      $region91: #{graphsage_forward.5} parent=5 // pred_fallthru
        _
    $region6: #{graphsage_forward.5} parent=1 // loop_footer
      %s22 = sadd.s32 1, %s18
    $region7: #{graphsage_forward.5} parent=1 // loop_footer_branch
      %17 = sbr.rel target = $region3
    $region8: #{graphsage_forward.5} parent=1 // loop_exit
      _
    %2061 = vsyncpa [#allocation4], 1
    %s2062 = scalar_lea.sflag [#allocation4], 1
    %2063 = vsyncpa %s2062, 1
    %2064 = vsyncpa [#allocation6], 1

// kernel: graphsage_forward.9
$region0: #{graphsage_forward.9}
  #allocation0 [shape = 'u32[]', space=smem, size = 0x4, offset = 0x4, fixed_abs, tag = 'smem constant byte address 0x4 - core index']
  #allocation1 [shape = 'u32[72,128]{1,0:T(1,128)}', space=vmem, size = 0x9000, scoped, tag = 'internal scratch']
  #allocation2 [shape = 'f32[8,512]{1,0:T(8,128)}', space=vmem, size = 0x4000, scoped, tag = 'scratch operand']
  %s0 = inlined_call_operand.vmem [shape: bf16[256,8], index: 0, kind: input, shape index: {}]
  %s1 = inlined_call_operand.vmem [shape: f32[8,1], index: 1, kind: input, shape index: {}]
  %s2 = inlined_call_operand.vmem [shape: f32[256,128], index: 2, kind: input, shape index: {}]
  %s3 = inlined_call_operand.vmem [shape: f32[256,128], index: 3, kind: input, shape index: {}]
  %s4 = inlined_call_operand.vmem [shape: f32[256,128], index: 4, kind: input, shape index: {}]
  %s5 = inlined_call_operand.vmem [shape: f32[256,128], index: 5, kind: input, shape index: {}]
  %s6 = inlined_call_operand.hbm [shape: f32[512,128], index: 6, kind: input, shape index: {}]
  %s7 = inlined_call_operand.vmem [shape: f32[1,128], index: 7, kind: input, shape index: {}]
  %s8 = inlined_call_operand.vmem [shape: f32[128,128], index: 8, kind: input, shape index: {}]
  %s9 = inlined_call_operand.vmem [shape: f32[1,128], index: 9, kind: input, shape index: {}]
  %s10 = inlined_call_operand.hbm [shape: f32[8,128], index: 10, kind: output, shape index: {0}]
  %s11 = inlined_call_operand.hbm [shape: f32[8,128], index: 11, kind: output, shape index: {1}]
  %s12 = inlined_call_operand.hbm [shape: f32[8,128], index: 12, kind: output, shape index: {2}]
  %13 = xla_tuple %s10, %s11, %s12
  %s14 = sld [smem:[#allocation0]]
  $region85: #{graphsage_forward.9} parent=0
    _
  %s16 = ssub.s32 1, %s14
  %s17 = scalar_select 0, %s16, %s14
  $region1: #{graphsage_forward.9} parent=0
    #allocation3 [shape = 'u8[262144]{0}', space=vmem, size = 0x40000, scoped, tag = 'input window, operand 6, single buffered']
    #allocation4 [shape = 's32[1]{0}', space=sflag, size = 0x4, scoped, tag = 'scoped memory for graphsage_forward.9']
    #allocation5 [shape = 's32[1]{0}', space=sflag, size = 0x4, scoped, tag = 'scoped memory for graphsage_forward.9']
    #allocation6 [shape = 'u8[4096]{0}', space=vmem, size = 0x1000, scoped, tag = 'output window, operand 0, single buffered']
    #allocation7 [shape = 'u8[4096]{0}', space=vmem, size = 0x1000, scoped, tag = 'output window, operand 1, single buffered']
    #allocation8 [shape = 's32[1]{0}', space=sflag, size = 0x4, scoped, tag = 'scoped memory for graphsage_forward.9']
    #allocation9 [shape = 'u8[4096]{0}', space=vmem, size = 0x1000, scoped, tag = 'output window, operand 2, single buffered']
    %18 = vsyncpa [#allocation4], 0
    %19 = vsyncpa [#allocation5], 0
    %20 = vsyncpa [#allocation8], 0
    // Predicated region
    $region2: #{graphsage_forward.9} parent=1 // pred_check
      _
    $region3: #{graphsage_forward.9} parent=1 // pred_check_branch
      %22 = sbr.rel (0) target = $region5
    $region4: #{graphsage_forward.9} parent=1 // pred_region
      _
    $region5: #{graphsage_forward.9} parent=1 // pred_fallthru
      _
    // Predicated region
    $region6: #{graphsage_forward.9} parent=1 // pred_check
      _
    $region7: #{graphsage_forward.9} parent=1 // pred_check_branch
      %24 = sbr.rel (0) target = $region9
    $region8: #{graphsage_forward.9} parent=1 // pred_region
      _
    $region9: #{graphsage_forward.9} parent=1 // pred_fallthru
      _
    // Predicated region
    $region10: #{graphsage_forward.9} parent=1 // pred_check
      _
    $region11: #{graphsage_forward.9} parent=1 // pred_check_branch
      %26 = sbr.rel (0) target = $region13
    $region12: #{graphsage_forward.9} parent=1 // pred_region
      _
    $region13: #{graphsage_forward.9} parent=1 // pred_fallthru
      _
    // Predicated region
    $region14: #{graphsage_forward.9} parent=1 // pred_check
      _
    $region15: #{graphsage_forward.9} parent=1 // pred_check_branch
      %28 = sbr.rel (0) target = $region17
    $region16: #{graphsage_forward.9} parent=1 // pred_region
      _
    $region17: #{graphsage_forward.9} parent=1 // pred_fallthru
      _
    // Predicated region
    $region18: #{graphsage_forward.9} parent=1 // pred_check
      _
    $region19: #{graphsage_forward.9} parent=1 // pred_check_branch
      %30 = sbr.rel (0) target = $region21
    $region20: #{graphsage_forward.9} parent=1 // pred_region
      _
    $region21: #{graphsage_forward.9} parent=1 // pred_fallthru
      _
    // Predicated region
    $region22: #{graphsage_forward.9} parent=1 // pred_check
      _
    $region23: #{graphsage_forward.9} parent=1 // pred_check_branch
      %32 = sbr.rel (0) target = $region25
    $region24: #{graphsage_forward.9} parent=1 // pred_region
      _
    $region25: #{graphsage_forward.9} parent=1 // pred_fallthru
      _
    // Predicated region
    $region26: #{graphsage_forward.9} parent=1 // pred_check
      _
    $region27: #{graphsage_forward.9} parent=1 // pred_check_branch
      %34 = sbr.rel (0) target = $region29
    $region28: #{graphsage_forward.9} parent=1 // pred_region
      %36 = vsyncadd [#allocation4], 0
      %s37 = sshll.u32 %s6, 4
      %s38 = int_to_ptr.hbm [resolvable:$true] %s37
      %s39 = sshll.u32 [#allocation3], 4
      %s40 = int_to_ptr.vmem [resolvable:$true] %s39
      %45 = dma.hbm_to_vmem [thread:$0]  %s38, 8192, %s40, [#allocation4], 128, 128, 8
    $region29: #{graphsage_forward.9} parent=1 // pred_fallthru
      _
    // Predicated region
    $region30: #{graphsage_forward.9} parent=1 // pred_check
      _
    $region31: #{graphsage_forward.9} parent=1 // pred_check_branch
      %47 = sbr.rel (0) target = $region33
    $region32: #{graphsage_forward.9} parent=1 // pred_region
      _
    $region33: #{graphsage_forward.9} parent=1 // pred_fallthru
      _
    // Predicated region
    $region34: #{graphsage_forward.9} parent=1 // pred_check
      _
    $region35: #{graphsage_forward.9} parent=1 // pred_check_branch
      %49 = sbr.rel (0) target = $region37
    $region36: #{graphsage_forward.9} parent=1 // pred_region
      _
    $region37: #{graphsage_forward.9} parent=1 // pred_fallthru
      _
    // Predicated region
    $region38: #{graphsage_forward.9} parent=1 // pred_check
      _
    $region39: #{graphsage_forward.9} parent=1 // pred_check_branch
      %51 = sbr.rel (0) target = $region41
    $region40: #{graphsage_forward.9} parent=1 // pred_region
      _
    $region41: #{graphsage_forward.9} parent=1 // pred_fallthru
      _
    // Predicated region
    $region42: #{graphsage_forward.9} parent=1 // pred_check
      _
    $region43: #{graphsage_forward.9} parent=1 // pred_check_branch
      %53 = sbr.rel (0) target = $region45
    $region44: #{graphsage_forward.9} parent=1 // pred_region
      %55 = dma.done [#allocation4], 8192
    $region45: #{graphsage_forward.9} parent=1 // pred_fallthru
      _
    %p56 = scmp.eq.s32.totalorder 0, 0
    // Predicated region
    $region46: #{graphsage_forward.9} parent=1 // pred_check
      %p57 = pneg %p56
    $region47: #{graphsage_forward.9} parent=1 // pred_check_branch
      %59 = sbr.rel (%p57) target = $region49
    $region48: #{graphsage_forward.9} parent=1 // pred_region
      %60 = vst [vmem:[#allocation2] sm:$0xff] -1e+30
      %61 = vst [vmem:[#allocation2 + $0x8] sm:$0xff] -1e+30
      %62 = vst [vmem:[#allocation2 + $0x10] sm:$0xff] -1e+30
      %63 = vst [vmem:[#allocation2 + $0x18] sm:$0xff] -1e+30
    $region49: #{graphsage_forward.9} parent=1 // pred_fallthru
      _
    %v64 = vld [vmem:[#allocation2] sm:$0xff]
    %v65 = vld [vmem:[#allocation2 + $0x8] sm:$0xff]
    %v66 = vld [vmem:[#allocation2 + $0x10] sm:$0xff]
    %v67 = vld [vmem:[#allocation2 + $0x18] sm:$0xff]
    loop: start=0, step=1, limit=32
    $region50: #{graphsage_forward.9} parent=1 // loop_pre_header
      _
    $region51: #{graphsage_forward.9} parent=1 // loop_header
      %s69 = sphi 0, %s73
      %p70 = scmp.ge.s32.totalorder %s69, 32
      %v74 = vphi %v64, %v193
      %v75 = vphi %v65, %v244
      %v76 = vphi %v66, %v295
      %v77 = vphi %v67, %v346
    $region52: #{graphsage_forward.9} parent=1 // loop_header_branch
      %72 = sbr.rel (%p70) target = $region56
    $region53: #{graphsage_forward.9} parent=1 // loop_body
      %s78 = smul.u32 %s69, 8
      %s79 = sshra.s32 %s78, 3
      %s80 = sand.u32 %s78, 7
      %s81 = smul.addr %s79, 4
      %s82 = scalar_lea.vmem %s0, %s81
      %v83 = vld [vmem:[%s82] sm:$0xf]
      %v84 = vunpack.c.l.bf16 %v83
      %vm85 = vcmp.gt.f32.partialorder %v84, 0.0
      %v86 = vsel %vm85, 0.0, -1e+30
      %s87 = scalar_lea.vmem %s2, %s78
      %v88 = vld [vmem:[%s87] sm:$0xff]
      %v90 = vrot.slane %v88, 1
      %v91 = vperm.slane %v86, 0
      %v92 = vlaneseq
      %v93 = vshrl.u32 %v92, 7
      %95 = vset.pattern.permute.xlu0 %v93
      %96 = vperm.xlu0 %95, %v91
      %v97 = vpop.permute.xlu0 %96
      %v98 = vperm.slane %v86, 1
      %v99 = vlaneseq
      %v100 = vshrl.u32 %v99, 7
      %102 = vset.pattern.permute.xlu0 %v100
      %103 = vperm.xlu0 %102, %v98
      %v104 = vpop.permute.xlu0 %103
      %v105 = vperm.slane %v88, 0
      %v106 = vperm.slane %v90, 0
      %v109 = vadd.f32 %v105, %v97
      %v110 = vadd.f32 %v106, %v104
      %v111 = vmax.f32 %v109, %v110
      %v112 = vmax.f32 %v74, %v111
      %113 = vst [vmem:[#allocation1] sm:$0xff] %v88
      %s114 = scalar_lea.vmem [#allocation1], 2
      %v115 = vld [vmem:[%s114] ss:$9 sm:$0xff]
      %s116 = scalar_lea.vmem [#allocation1], 3
      %v117 = vld [vmem:[%s116] ss:$9 sm:$0xff]
      %v118 = vperm.slane %v86, 2
      %v119 = vlaneseq
      %v120 = vshrl.u32 %v119, 7
      %122 = vset.pattern.permute.xlu0 %v120
      %123 = vperm.xlu0 %122, %v118
      %v124 = vpop.permute.xlu0 %123
      %v125 = vperm.slane %v86, 3
      %v126 = vlaneseq
      %v127 = vshrl.u32 %v126, 7
      %129 = vset.pattern.permute.xlu0 %v127
      %130 = vperm.xlu0 %129, %v125
      %v131 = vpop.permute.xlu0 %130
      %v132 = vperm.slane %v115, 0
      %v133 = vperm.slane %v117, 0
      %v136 = vadd.f32 %v132, %v124
      %v137 = vadd.f32 %v133, %v131
      %v138 = vmax.f32 %v136, %v137
      %v139 = vmax.f32 %v112, %v138
      %140 = vst [vmem:[#allocation1] sm:$0xff] %v88
      %s141 = scalar_lea.vmem [#allocation1], 4
      %v142 = vld [vmem:[%s141] ss:$9 sm:$0xff]
      %s143 = scalar_lea.vmem [#allocation1], 5
      %v144 = vld [vmem:[%s143] ss:$9 sm:$0xff]
      %v145 = vperm.slane %v86, 4
      %v146 = vlaneseq
      %v147 = vshrl.u32 %v146, 7
      %149 = vset.pattern.permute.xlu0 %v147
      %150 = vperm.xlu0 %149, %v145
      %v151 = vpop.permute.xlu0 %150
      %v152 = vperm.slane %v86, 5
      %v153 = vlaneseq
      %v154 = vshrl.u32 %v153, 7
      %156 = vset.pattern.permute.xlu0 %v154
      %157 = vperm.xlu0 %156, %v152
      %v158 = vpop.permute.xlu0 %157
      %v159 = vperm.slane %v142, 0
      %v160 = vperm.slane %v144, 0
      %v163 = vadd.f32 %v159, %v151
      %v164 = vadd.f32 %v160, %v158
      %v165 = vmax.f32 %v163, %v164
      %v166 = vmax.f32 %v139, %v165
      %167 = vst [vmem:[#allocation1] sm:$0xff] %v88
      %s168 = scalar_lea.vmem [#allocation1], 6
      %v169 = vld [vmem:[%s168] ss:$9 sm:$0xff]
      %s170 = scalar_lea.vmem [#allocation1], 7
      %v171 = vld [vmem:[%s170] ss:$9 sm:$0xff]
      %v172 = vperm.slane %v86, 6
      %v173 = vlaneseq
      %v174 = vshrl.u32 %v173, 7
      %176 = vset.pattern.permute.xlu0 %v174
      %177 = vperm.xlu0 %176, %v172
      %v178 = vpop.permute.xlu0 %177
      %v179 = vperm.slane %v86, 7
      %v180 = vlaneseq
      %v181 = vshrl.u32 %v180, 7
      %183 = vset.pattern.permute.xlu0 %v181
      %184 = vperm.xlu0 %183, %v179
      %v185 = vpop.permute.xlu0 %184
      %v186 = vperm.slane %v169, 0
      %v187 = vperm.slane %v171, 0
      %v190 = vadd.f32 %v186, %v178
      %v191 = vadd.f32 %v187, %v185
      %v192 = vmax.f32 %v190, %v191
      %v193 = vmax.f32 %v166, %v192
      %s194 = scalar_lea.vmem %s3, %s78
      %v195 = vld [vmem:[%s194] sm:$0xff]
      %v197 = vrot.slane %v195, 1
      %v198 = vperm.slane %v195, 0
      %v199 = vperm.slane %v197, 0
      %v202 = vadd.f32 %v198, %v97
      %v203 = vadd.f32 %v199, %v104
      %v204 = vmax.f32 %v202, %v203
      %v205 = vmax.f32 %v75, %v204
      %206 = vst [vmem:[#allocation1] sm:$0xff] %v195
      %s207 = scalar_lea.vmem [#allocation1], 2
      %v208 = vld [vmem:[%s207] ss:$9 sm:$0xff]
      %s209 = scalar_lea.vmem [#allocation1], 3
      %v210 = vld [vmem:[%s209] ss:$9 sm:$0xff]
      %v211 = vperm.slane %v208, 0
      %v212 = vperm.slane %v210, 0
      %v215 = vadd.f32 %v211, %v124
      %v216 = vadd.f32 %v212, %v131
      %v217 = vmax.f32 %v215, %v216
      %v218 = vmax.f32 %v205, %v217
      %219 = vst [vmem:[#allocation1] sm:$0xff] %v195
      %s220 = scalar_lea.vmem [#allocation1], 4
      %v221 = vld [vmem:[%s220] ss:$9 sm:$0xff]
      %s222 = scalar_lea.vmem [#allocation1], 5
      %v223 = vld [vmem:[%s222] ss:$9 sm:$0xff]
      %v224 = vperm.slane %v221, 0
      %v225 = vperm.slane %v223, 0
      %v228 = vadd.f32 %v224, %v151
      %v229 = vadd.f32 %v225, %v158
      %v230 = vmax.f32 %v228, %v229
      %v231 = vmax.f32 %v218, %v230
      %232 = vst [vmem:[#allocation1] sm:$0xff] %v195
      %s233 = scalar_lea.vmem [#allocation1], 6
      %v234 = vld [vmem:[%s233] ss:$9 sm:$0xff]
      %s235 = scalar_lea.vmem [#allocation1], 7
      %v236 = vld [vmem:[%s235] ss:$9 sm:$0xff]
      %v237 = vperm.slane %v234, 0
      %v238 = vperm.slane %v236, 0
      %v241 = vadd.f32 %v237, %v178
      %v242 = vadd.f32 %v238, %v185
      %v243 = vmax.f32 %v241, %v242
      %v244 = vmax.f32 %v231, %v243
      %s245 = scalar_lea.vmem %s4, %s78
      %v246 = vld [vmem:[%s245] sm:$0xff]
      %v248 = vrot.slane %v246, 1
      %v249 = vperm.slane %v246, 0
      %v250 = vperm.slane %v248, 0
      %v253 = vadd.f32 %v249, %v97
      %v254 = vadd.f32 %v250, %v104
      %v255 = vmax.f32 %v253, %v254
      %v256 = vmax.f32 %v76, %v255
      %257 = vst [vmem:[#allocation1] sm:$0xff] %v246
      %s258 = scalar_lea.vmem [#allocation1], 2
      %v259 = vld [vmem:[%s258] ss:$9 sm:$0xff]
      %s260 = scalar_lea.vmem [#allocation1], 3
      %v261 = vld [vmem:[%s260] ss:$9 sm:$0xff]
      %v262 = vperm.slane %v259, 0
      %v263 = vperm.slane %v261, 0
      %v266 = vadd.f32 %v262, %v124
      %v267 = vadd.f32 %v263, %v131
      %v268 = vmax.f32 %v266, %v267
      %v269 = vmax.f32 %v256, %v268
      %270 = vst [vmem:[#allocation1] sm:$0xff] %v246
      %s271 = scalar_lea.vmem [#allocation1], 4
      %v272 = vld [vmem:[%s271] ss:$9 sm:$0xff]
      %s273 = scalar_lea.vmem [#allocation1], 5
      %v274 = vld [vmem:[%s273] ss:$9 sm:$0xff]
      %v275 = vperm.slane %v272, 0
      %v276 = vperm.slane %v274, 0
      %v279 = vadd.f32 %v275, %v151
      %v280 = vadd.f32 %v276, %v158
      %v281 = vmax.f32 %v279, %v280
      %v282 = vmax.f32 %v269, %v281
      %283 = vst [vmem:[#allocation1] sm:$0xff] %v246
      %s284 = scalar_lea.vmem [#allocation1], 6
      %v285 = vld [vmem:[%s284] ss:$9 sm:$0xff]
      %s286 = scalar_lea.vmem [#allocation1], 7
      %v287 = vld [vmem:[%s286] ss:$9 sm:$0xff]
      %v288 = vperm.slane %v285, 0
      %v289 = vperm.slane %v287, 0
      %v292 = vadd.f32 %v288, %v178
      %v293 = vadd.f32 %v289, %v185
      %v294 = vmax.f32 %v292, %v293
      %v295 = vmax.f32 %v282, %v294
      %s296 = scalar_lea.vmem %s5, %s78
      %v297 = vld [vmem:[%s296] sm:$0xff]
      %v299 = vrot.slane %v297, 1
      %v300 = vperm.slane %v297, 0
      %v301 = vperm.slane %v299, 0
      %v304 = vadd.f32 %v300, %v97
      %v305 = vadd.f32 %v301, %v104
      %v306 = vmax.f32 %v304, %v305
      %v307 = vmax.f32 %v77, %v306
      %308 = vst [vmem:[#allocation1] sm:$0xff] %v297
      %s309 = scalar_lea.vmem [#allocation1], 2
      %v310 = vld [vmem:[%s309] ss:$9 sm:$0xff]
      %s311 = scalar_lea.vmem [#allocation1], 3
      %v312 = vld [vmem:[%s311] ss:$9 sm:$0xff]
      %v313 = vperm.slane %v310, 0
      %v314 = vperm.slane %v312, 0
      %v317 = vadd.f32 %v313, %v124
      %v318 = vadd.f32 %v314, %v131
      %v319 = vmax.f32 %v317, %v318
      %v320 = vmax.f32 %v307, %v319
      %321 = vst [vmem:[#allocation1] sm:$0xff] %v297
      %s322 = scalar_lea.vmem [#allocation1], 4
      %v323 = vld [vmem:[%s322] ss:$9 sm:$0xff]
      %s324 = scalar_lea.vmem [#allocation1], 5
      %v325 = vld [vmem:[%s324] ss:$9 sm:$0xff]
      %v326 = vperm.slane %v323, 0
      %v327 = vperm.slane %v325, 0
      %v330 = vadd.f32 %v326, %v151
      %v331 = vadd.f32 %v327, %v158
      %v332 = vmax.f32 %v330, %v331
      %v333 = vmax.f32 %v320, %v332
      %334 = vst [vmem:[#allocation1] sm:$0xff] %v297
      %s335 = scalar_lea.vmem [#allocation1], 6
      %v336 = vld [vmem:[%s335] ss:$9 sm:$0xff]
      %s337 = scalar_lea.vmem [#allocation1], 7
      %v338 = vld [vmem:[%s337] ss:$9 sm:$0xff]
      %v339 = vperm.slane %v336, 0
      %v340 = vperm.slane %v338, 0
      %v343 = vadd.f32 %v339, %v178
      %v344 = vadd.f32 %v340, %v185
      %v345 = vmax.f32 %v343, %v344
      %v346 = vmax.f32 %v333, %v345
    $region54: #{graphsage_forward.9} parent=1 // loop_footer
      %s73 = sadd.s32 1, %s69
    $region55: #{graphsage_forward.9} parent=1 // loop_footer_branch
      %68 = sbr.rel target = $region51
    $region56: #{graphsage_forward.9} parent=1 // loop_exit
      _
    %347 = vst [vmem:[#allocation2] sm:$0xff] %v74
    %348 = vst [vmem:[#allocation2 + $0x8] sm:$0xff] %v75
    %349 = vst [vmem:[#allocation2 + $0x10] sm:$0xff] %v76
    %350 = vst [vmem:[#allocation2 + $0x18] sm:$0xff] %v77
    // Predicated region
    $region57: #{graphsage_forward.9} parent=1 // pred_check
      %p351 = pneg %p56
    $region58: #{graphsage_forward.9} parent=1 // pred_check_branch
      %353 = sbr.rel (%p351) target = $region60
    $region59: #{graphsage_forward.9} parent=1 // pred_region
      %v354 = vld [vmem:[%s1] sm:$0xff]
      %vm355 = vcmp.gt.f32.partialorder %v354, 0.0
      %v356 = vld [vmem:[#allocation2] sm:$0xff]
      %v357 = vld [vmem:[#allocation2 + $0x8] sm:$0xff]
      %v358 = vld [vmem:[#allocation2 + $0x10] sm:$0xff]
      %v359 = vld [vmem:[#allocation2 + $0x18] sm:$0xff]
      %v360 = vsel %vm355, 1, 0
      %361 = vset.pattern.permute.xlu0 0
      %362 = vperm.xlu0 %361, %v360
      %v363 = vpop.permute.xlu0 %362
      %vm364 = vcmp.eq.s32.totalorder %v363, 1
      %v365 = vsel %vm364, %v356, 0.0
      %v366 = vsel %vm364, %v357, 0.0
      %v367 = vsel %vm364, %v358, 0.0
      %v368 = vsel %vm364, %v359, 0.0
      %v369 = vld [vmem:[#allocation3] sm:$0xff]
      %v370 = vld [vmem:[#allocation3 + $0x8] sm:$0xff]
      %v371 = vld [vmem:[#allocation3 + $0x10] sm:$0xff]
      %v372 = vld [vmem:[#allocation3 + $0x18] sm:$0xff]
      %v373 = vld [vmem:[#allocation3 + $0x20] sm:$0xff]
      %v374 = vld [vmem:[#allocation3 + $0x28] sm:$0xff]
      %v375 = vld [vmem:[#allocation3 + $0x30] sm:$0xff]
      %v376 = vld [vmem:[#allocation3 + $0x38] sm:$0xff]
      %v377 = vld [vmem:[#allocation3 + $0x40] sm:$0xff]
      %v378 = vld [vmem:[#allocation3 + $0x48] sm:$0xff]
      %v379 = vld [vmem:[#allocation3 + $0x50] sm:$0xff]
      %v380 = vld [vmem:[#allocation3 + $0x58] sm:$0xff]
      %v381 = vld [vmem:[#allocation3 + $0x60] sm:$0xff]
      %v382 = vld [vmem:[#allocation3 + $0x68] sm:$0xff]
      %v383 = vld [vmem:[#allocation3 + $0x70] sm:$0xff]
      %v384 = vld [vmem:[#allocation3 + $0x78] sm:$0xff]
      %v385 = vld [vmem:[#allocation3 + $0x80] sm:$0xff]
      %v386 = vld [vmem:[#allocation3 + $0x88] sm:$0xff]
      %v387 = vld [vmem:[#allocation3 + $0x90] sm:$0xff]
      %v388 = vld [vmem:[#allocation3 + $0x98] sm:$0xff]
      %v389 = vld [vmem:[#allocation3 + $0xa0] sm:$0xff]
      %v390 = vld [vmem:[#allocation3 + $0xa8] sm:$0xff]
      %v391 = vld [vmem:[#allocation3 + $0xb0] sm:$0xff]
      %v392 = vld [vmem:[#allocation3 + $0xb8] sm:$0xff]
      %v393 = vld [vmem:[#allocation3 + $0xc0] sm:$0xff]
      %v394 = vld [vmem:[#allocation3 + $0xc8] sm:$0xff]
      %v395 = vld [vmem:[#allocation3 + $0xd0] sm:$0xff]
      %v396 = vld [vmem:[#allocation3 + $0xd8] sm:$0xff]
      %v397 = vld [vmem:[#allocation3 + $0xe0] sm:$0xff]
      %v398 = vld [vmem:[#allocation3 + $0xe8] sm:$0xff]
      %v399 = vld [vmem:[#allocation3 + $0xf0] sm:$0xff]
      %v400 = vld [vmem:[#allocation3 + $0xf8] sm:$0xff]
      %v401 = vld [vmem:[#allocation3 + $0x100] sm:$0xff]
      %v402 = vld [vmem:[#allocation3 + $0x108] sm:$0xff]
      %v403 = vld [vmem:[#allocation3 + $0x110] sm:$0xff]
      %v404 = vld [vmem:[#allocation3 + $0x118] sm:$0xff]
      %v405 = vld [vmem:[#allocation3 + $0x120] sm:$0xff]
      %v406 = vld [vmem:[#allocation3 + $0x128] sm:$0xff]
      %v407 = vld [vmem:[#allocation3 + $0x130] sm:$0xff]
      %v408 = vld [vmem:[#allocation3 + $0x138] sm:$0xff]
      %v409 = vld [vmem:[#allocation3 + $0x140] sm:$0xff]
      %v410 = vld [vmem:[#allocation3 + $0x148] sm:$0xff]
      %v411 = vld [vmem:[#allocation3 + $0x150] sm:$0xff]
      %v412 = vld [vmem:[#allocation3 + $0x158] sm:$0xff]
      %v413 = vld [vmem:[#allocation3 + $0x160] sm:$0xff]
      %v414 = vld [vmem:[#allocation3 + $0x168] sm:$0xff]
      %v415 = vld [vmem:[#allocation3 + $0x170] sm:$0xff]
      %v416 = vld [vmem:[#allocation3 + $0x178] sm:$0xff]
      %v417 = vld [vmem:[#allocation3 + $0x180] sm:$0xff]
      %v418 = vld [vmem:[#allocation3 + $0x188] sm:$0xff]
      %v419 = vld [vmem:[#allocation3 + $0x190] sm:$0xff]
      %v420 = vld [vmem:[#allocation3 + $0x198] sm:$0xff]
      %v421 = vld [vmem:[#allocation3 + $0x1a0] sm:$0xff]
      %v422 = vld [vmem:[#allocation3 + $0x1a8] sm:$0xff]
      %v423 = vld [vmem:[#allocation3 + $0x1b0] sm:$0xff]
      %v424 = vld [vmem:[#allocation3 + $0x1b8] sm:$0xff]
      %v425 = vld [vmem:[#allocation3 + $0x1c0] sm:$0xff]
      %v426 = vld [vmem:[#allocation3 + $0x1c8] sm:$0xff]
      %v427 = vld [vmem:[#allocation3 + $0x1d0] sm:$0xff]
      %v428 = vld [vmem:[#allocation3 + $0x1d8] sm:$0xff]
      %v429 = vld [vmem:[#allocation3 + $0x1e0] sm:$0xff]
      %v430 = vld [vmem:[#allocation3 + $0x1e8] sm:$0xff]
      %v431 = vld [vmem:[#allocation3 + $0x1f0] sm:$0xff]
      %v432 = vld [vmem:[#allocation3 + $0x1f8] sm:$0xff]
      %v433 = vld [vmem:[%s7] sm:$0x1]
      %v435 = vperm.slane %v433, 0
      %437 = vmatpush.msra.mxu0 %v384
      %438 = vmatpush.msra.mxu0 %v383
      %439 = vmatpush.msra.mxu0 %v382
      %440 = vmatpush.msra.mxu0 %v381
      %441 = vmatpush.msra.mxu0 %v380
      %442 = vmatpush.msra.mxu0 %v379
      %443 = vmatpush.msra.mxu0 %v378
      %444 = vmatpush.msra.mxu0 %v377
      %445 = vmatpush.msra.mxu0 %v376
      %446 = vmatpush.msra.mxu0 %v375
      %447 = vmatpush.msra.mxu0 %v374
      %448 = vmatpush.msra.mxu0 %v373
      %449 = vmatpush.msra.mxu0 %v372
      %450 = vmatpush.msra.mxu0 %v371
      %451 = vmatpush.msra.mxu0 %v370
      %452 = vmatpush.msra.mxu0 %v369
      %453 = vmatmul.f32.gmra.mxu0 %v365
      %v454 = vpop.f32.mrf.mxu0
      %v455 = vadd.f32 %v435, %v454
      %456 = vdwg.mxu0
      %457 = vmatpush.msra.mxu0 %v400
      %458 = vmatpush.msra.mxu0 %v399
      %459 = vmatpush.msra.mxu0 %v398
      %460 = vmatpush.msra.mxu0 %v397
      %461 = vmatpush.msra.mxu0 %v396
      %462 = vmatpush.msra.mxu0 %v395
      %463 = vmatpush.msra.mxu0 %v394
      %464 = vmatpush.msra.mxu0 %v393
      %465 = vmatpush.msra.mxu0 %v392
      %466 = vmatpush.msra.mxu0 %v391
      %467 = vmatpush.msra.mxu0 %v390
      %468 = vmatpush.msra.mxu0 %v389
      %469 = vmatpush.msra.mxu0 %v388
      %470 = vmatpush.msra.mxu0 %v387
      %471 = vmatpush.msra.mxu0 %v386
      %472 = vmatpush.msra.mxu0 %v385
      %473 = vmatmul.f32.gmra.mxu0 %v366
      %v474 = vpop.f32.mrf.mxu0
      %v475 = vadd.f32 %v455, %v474
      %476 = vdwg.mxu0
      %477 = vmatpush.msra.mxu0 %v416
      %478 = vmatpush.msra.mxu0 %v415
      %479 = vmatpush.msra.mxu0 %v414
      %480 = vmatpush.msra.mxu0 %v413
      %481 = vmatpush.msra.mxu0 %v412
      %482 = vmatpush.msra.mxu0 %v411
      %483 = vmatpush.msra.mxu0 %v410
      %484 = vmatpush.msra.mxu0 %v409
      %485 = vmatpush.msra.mxu0 %v408
      %486 = vmatpush.msra.mxu0 %v407
      %487 = vmatpush.msra.mxu0 %v406
      %488 = vmatpush.msra.mxu0 %v405
      %489 = vmatpush.msra.mxu0 %v404
      %490 = vmatpush.msra.mxu0 %v403
      %491 = vmatpush.msra.mxu0 %v402
      %492 = vmatpush.msra.mxu0 %v401
      %493 = vmatmul.f32.gmra.mxu0 %v367
      %v494 = vpop.f32.mrf.mxu0
      %v495 = vadd.f32 %v475, %v494
      %496 = vdwg.mxu0
      %497 = vmatpush.msra.mxu0 %v432
      %498 = vmatpush.msra.mxu0 %v431
      %499 = vmatpush.msra.mxu0 %v430
      %500 = vmatpush.msra.mxu0 %v429
      %501 = vmatpush.msra.mxu0 %v428
      %502 = vmatpush.msra.mxu0 %v427
      %503 = vmatpush.msra.mxu0 %v426
      %504 = vmatpush.msra.mxu0 %v425
      %505 = vmatpush.msra.mxu0 %v424
      %506 = vmatpush.msra.mxu0 %v423
      %507 = vmatpush.msra.mxu0 %v422
      %508 = vmatpush.msra.mxu0 %v421
      %509 = vmatpush.msra.mxu0 %v420
      %510 = vmatpush.msra.mxu0 %v419
      %511 = vmatpush.msra.mxu0 %v418
      %512 = vmatpush.msra.mxu0 %v417
      %513 = vmatmul.f32.gmra.mxu0 %v368
      %v514 = vpop.f32.mrf.mxu0
      %v515 = vadd.f32 %v495, %v514
      %516 = vdwg.mxu0
      %v517 = vmax.f32 %v515, 0.0
      %v518 = vld [vmem:[%s8] sm:$0xff]
      %v519 = vld [vmem:[%s8 + $0x8] sm:$0xff]
      %v520 = vld [vmem:[%s8 + $0x10] sm:$0xff]
      %v521 = vld [vmem:[%s8 + $0x18] sm:$0xff]
      %v522 = vld [vmem:[%s8 + $0x20] sm:$0xff]
      %v523 = vld [vmem:[%s8 + $0x28] sm:$0xff]
      %v524 = vld [vmem:[%s8 + $0x30] sm:$0xff]
      %v525 = vld [vmem:[%s8 + $0x38] sm:$0xff]
      %v526 = vld [vmem:[%s8 + $0x40] sm:$0xff]
      %v527 = vld [vmem:[%s8 + $0x48] sm:$0xff]
      %v528 = vld [vmem:[%s8 + $0x50] sm:$0xff]
      %v529 = vld [vmem:[%s8 + $0x58] sm:$0xff]
      %v530 = vld [vmem:[%s8 + $0x60] sm:$0xff]
      %v531 = vld [vmem:[%s8 + $0x68] sm:$0xff]
      %v532 = vld [vmem:[%s8 + $0x70] sm:$0xff]
      %v533 = vld [vmem:[%s8 + $0x78] sm:$0xff]
      %v534 = vld [vmem:[%s9] sm:$0x1]
      %v536 = vperm.slane %v534, 0
      %538 = vmatpush.msra.mxu0 %v533
      %539 = vmatpush.msra.mxu0 %v532
      %540 = vmatpush.msra.mxu0 %v531
      %541 = vmatpush.msra.mxu0 %v530
      %542 = vmatpush.msra.mxu0 %v529
      %543 = vmatpush.msra.mxu0 %v528
      %544 = vmatpush.msra.mxu0 %v527
      %545 = vmatpush.msra.mxu0 %v526
      %546 = vmatpush.msra.mxu0 %v525
      %547 = vmatpush.msra.mxu0 %v524
      %548 = vmatpush.msra.mxu0 %v523
      %549 = vmatpush.msra.mxu0 %v522
      %550 = vmatpush.msra.mxu0 %v521
      %551 = vmatpush.msra.mxu0 %v520
      %552 = vmatpush.msra.mxu0 %v519
      %553 = vmatpush.msra.mxu0 %v518
      %554 = vmatmul.f32.gmra.mxu0 %v517
      %v555 = vpop.f32.mrf.mxu0
      %v556 = vadd.f32 %v536, %v555
      %557 = vdwg.mxu0
      %v558 = vlaneseq
      %v559 = vand.u32 %v558, 127
      %vm560 = vcmp.lt.s32.totalorder %v559, 6
      %v561 = vsel %vm560, %v556, -1e+30
      %562 = vmax.xlane.f32.xlu0 %v561
      %v563 = vpop.xlane.xlu0 %562
      %v564 = vsub.f32 %v561, %v563
      %v565 = vmul.f32 %v564, 1.442695
      %v566 = vpow.pop %v565
      %567 = vadd.xlane.f32.xlu0 %v566
      %v568 = vpop.xlane.xlu0 %567
      %v569 = vlog2.pop %v568
      %v570 = vmul.f32 %v569, 0.6931472
      %v571 = vsub.f32 %v564, %v570
      %572 = vst [vmem:[#allocation6] sm:$0xff] %v571
      %573 = vst [vmem:[#allocation7] sm:$0xff] %v556
      %574 = vst [vmem:[#allocation9] sm:$0xff] %v517
    $region60: #{graphsage_forward.9} parent=1 // pred_fallthru
      _
    // Predicated region
    $region61: #{graphsage_forward.9} parent=1 // pred_check
      _
    $region62: #{graphsage_forward.9} parent=1 // pred_check_branch
      %576 = sbr.rel (0) target = $region64
    $region63: #{graphsage_forward.9} parent=1 // pred_region
      %578 = vsyncadd [#allocation5], 0
      %s580 = sshll.u32 [#allocation6], 4
      %s581 = int_to_ptr.vmem [resolvable:$true] %s580
      %s582 = sshll.u32 %s10, 4
      %s583 = int_to_ptr.hbm [resolvable:$true] %s582
      %585 = dma.vmem_to_hbm [thread:$0]  %s581, 128, %s583, [#allocation5]
    $region64: #{graphsage_forward.9} parent=1 // pred_fallthru
      _
    // Predicated region
    $region65: #{graphsage_forward.9} parent=1 // pred_check
      _
    $region66: #{graphsage_forward.9} parent=1 // pred_check_branch
      %587 = sbr.rel (0) target = $region68
    $region67: #{graphsage_forward.9} parent=1 // pred_region
      %589 = vsyncadd [#allocation8], 0
      %s591 = sshll.u32 [#allocation7], 4
      %s592 = int_to_ptr.vmem [resolvable:$true] %s591
      %s593 = sshll.u32 %s11, 4
      %s594 = int_to_ptr.hbm [resolvable:$true] %s593
      %596 = dma.vmem_to_hbm [thread:$0]  %s592, 128, %s594, [#allocation8]
    $region68: #{graphsage_forward.9} parent=1 // pred_fallthru
      _
    // Predicated region
    $region69: #{graphsage_forward.9} parent=1 // pred_check
      _
    $region70: #{graphsage_forward.9} parent=1 // pred_check_branch
      %598 = sbr.rel (0) target = $region72
    $region71: #{graphsage_forward.9} parent=1 // pred_region
      %600 = vsyncadd [#allocation8], 0
      %s602 = sshll.u32 [#allocation9], 4
      %s603 = int_to_ptr.vmem [resolvable:$true] %s602
      %s604 = sshll.u32 %s12, 4
      %s605 = int_to_ptr.hbm [resolvable:$true] %s604
      %607 = dma.vmem_to_hbm [thread:$0]  %s603, 128, %s605, [#allocation8]
    $region72: #{graphsage_forward.9} parent=1 // pred_fallthru
      _
    // Predicated region
    $region73: #{graphsage_forward.9} parent=1 // pred_check
      _
    $region74: #{graphsage_forward.9} parent=1 // pred_check_branch
      %609 = sbr.rel (0) target = $region76
    $region75: #{graphsage_forward.9} parent=1 // pred_region
      %611 = dma.done [#allocation5], 128
    $region76: #{graphsage_forward.9} parent=1 // pred_fallthru
      _
    // Predicated region
    $region77: #{graphsage_forward.9} parent=1 // pred_check
      _
    $region78: #{graphsage_forward.9} parent=1 // pred_check_branch
      %613 = sbr.rel (0) target = $region80
    $region79: #{graphsage_forward.9} parent=1 // pred_region
      %615 = dma.done [#allocation8], 128
    $region80: #{graphsage_forward.9} parent=1 // pred_fallthru
      _
    // Predicated region
    $region81: #{graphsage_forward.9} parent=1 // pred_check
      _
    $region82: #{graphsage_forward.9} parent=1 // pred_check_branch
      %617 = sbr.rel (0) target = $region84
    $region83: #{graphsage_forward.9} parent=1 // pred_region
      %619 = dma.done [#allocation8], 128
    $region84: #{graphsage_forward.9} parent=1 // pred_fallthru
      _
    %620 = vsyncpa [#allocation4], 1
    %621 = vsyncpa [#allocation5], 1
    %622 = vsyncpa [#allocation8], 1

</llo_original>
